<compile_context>
chip_gen: v6e
topology: v6e:2x2x1
jax: 0.10.0
libtpu: 0.0.40
codegen_flags: <defaults>
</compile_context>

<pallas_src>
import functools

import jax
import jax.numpy as jnp
import numpy as np
from jax import lax
from jax.experimental import pallas as pl
from jax.experimental.pallas import tpu as pltpu


def _round_up(x, m):
    return (x + m - 1) // m * m


def _lstm_kernel(x_ref, wih_ref, whh_ref, b_ref, out_ref,
                 pre_ref, h_ref, c_ref, *, time_tile, hidden, store_chunk=8):
    """One grid step == `time_tile` LSTM time steps (statically unrolled).

    x_ref   : (B, Tt, I)    bf16 VMEM   batch-first input tile
    wih_ref : (I, 4*H)      bf16 VMEM   W_ih^T, gate order i,f,g,o (packed, unpadded)
    whh_ref : (H, 4*H)      bf16 VMEM   W_hh^T, gate order i,f,g,o (packed, unpadded)
    b_ref   : (1, 4*H)      f32  VMEM   b_ih + b_hh
    out_ref : (B, Tt, H)    f32  VMEM   hidden states for this tile
    pre_ref : (B, Tt, 4*H)  f32  VMEM scratch; hoisted input projection
    h_ref   : (B, H)        f32  VMEM scratch; running hidden state across grid steps
    c_ref   : (B, H)        f32  VMEM scratch; running cell state across grid steps
    """
    H = hidden
    G = 4 * H
    Bk, Tk, Ik = x_ref.shape

    @pl.when(pl.program_id(0) == 0)
    def _init():
        h_ref[...] = jnp.zeros_like(h_ref)
        c_ref[...] = jnp.zeros_like(c_ref)

    # Hoisted input projection: ONE bf16 MXU matmul (M = B*Tt) for the whole tile,
    # f32 accumulation, bias added once. Parked in VMEM scratch (not a live value).
    x2d = x_ref[...].reshape(Bk * Tk, Ik)                                   # bf16
    pre = jnp.dot(x2d, wih_ref[...], preferred_element_type=jnp.float32)    # f32
    pre_ref[...] = pre.reshape(Bk, Tk, G) + b_ref[...]

    # Lane mask selecting the `g` gate (torch gate order i, f, g, o packed along lanes).
    lane = lax.broadcasted_iota(jnp.int32, (1, G), 1)
    g_mask = (lane >= 2 * H) & (lane < 3 * H)

    h = h_ref[...]          # (B, H) f32 loop-carried
    c = c_ref[...]          # (B, H) f32 loop-carried

    hs = []
    for t in range(time_tile):
        # Recurrent projection only: h (bf16) @ W_hh^T (bf16) -> f32; W_hh^T is
        # re-read from VMEM each step (cheap) rather than pinned across the unroll.
        gates = pre_ref[:, t, :] + jnp.dot(
            h.astype(jnp.bfloat16), whh_ref[...],
            preferred_element_type=jnp.float32)                             # (B, 4H)

        # All four activations in one EUP pass: sigmoid(x) = 0.5*(1 + tanh(x/2)).
        z = jnp.where(g_mask, gates, 0.5 * gates)
        th = jnp.tanh(z)
        act = jnp.where(g_mask, th, 0.5 * (th + 1.0))

        i_g = act[:, 0 * H:1 * H]
        f_g = act[:, 1 * H:2 * H]
        g_g = act[:, 2 * H:3 * H]
        o_g = act[:, 3 * H:4 * H]

        c = f_g * c + i_g * g_g
        h = o_g * jnp.tanh(c)

        # Accumulate and write back in full 8-sublane chunks (one unmasked-sublane
        # store per chunk instead of Tt masked per-step stores).
        hs.append(h)
        if len(hs) == store_chunk or t == time_tile - 1:
            t0 = t + 1 - len(hs)
            out_ref[:, t0:t + 1, :] = jnp.stack(hs, axis=1)
            hs = []

    h_ref[...] = h
    c_ref[...] = c


def single_lstm_pallas(x, w_ih, w_hh, b_ih, b_hh, *, time_tile=32):
    """x: (B, T, I) f32 -> out: (B, T, H) f32, matching torch nn.LSTM(batch_first=True)."""
    B, T, I = x.shape
    fourH, H = w_hh.shape
    assert fourH == 4 * H and w_ih.shape == (4 * H, I)

    # Time tile: multiple of 16 (bf16 sublane packing for the x tile).
    Tt = _round_up(min(time_tile, T), 16)
    T_pad = _round_up(T, Tt)

    xf = x.astype(jnp.bfloat16)
    if T_pad != T:
        xf = jnp.pad(xf, ((0, 0), (0, T_pad - T), (0, 0)))

    # Weight repack: plain transpose, gates stay packed in torch order i,f,g,o.
    # MXU operands in bf16; bias (added in f32) stays f32.
    wih_t = w_ih.astype(jnp.bfloat16).T                       # (I, 4H)
    whh_t = w_hh.astype(jnp.bfloat16).T                       # (H, 4H)
    bias = (b_ih + b_hh).astype(jnp.float32).reshape(1, 4 * H)

    kernel = functools.partial(_lstm_kernel, time_tile=Tt, hidden=H)

    out = pl.pallas_call(
        kernel,
        out_shape=jax.ShapeDtypeStruct((B, T_pad, H), jnp.float32),
        grid_spec=pltpu.PrefetchScalarGridSpec(
            num_scalar_prefetch=0,
            grid=(T_pad // Tt,),
            in_specs=[
                pl.BlockSpec((B, Tt, I), lambda t: (0, t, 0)),       # x time tile
                pl.BlockSpec((I, 4 * H), lambda t: (0, 0)),          # W_ih^T (resident)
                pl.BlockSpec((H, 4 * H), lambda t: (0, 0)),          # W_hh^T (resident)
                pl.BlockSpec((1, 4 * H), lambda t: (0, 0)),          # bias   (resident)
            ],
            out_specs=pl.BlockSpec((B, Tt, H), lambda t: (0, t, 0)),
            scratch_shapes=[
                pltpu.VMEM((B, Tt, 4 * H), jnp.float32),   # hoisted input projection
                pltpu.VMEM((B, H), jnp.float32),           # h carry
                pltpu.VMEM((B, H), jnp.float32),           # c carry
            ],
        ),
        compiler_params=pltpu.CompilerParams(
            dimension_semantics=("arbitrary",),            # recurrence is serial in time
        ),
    )(xf, wih_t, whh_t, bias)

    if T_pad != T:
        out = out[:, :T, :]
    return out


def single_lstm_ref(x, w_ih, w_hh, b_ih, b_hh):
    """Pure-JAX f32 reference (torch LSTM cell equations, gate order i,f,g,o)."""
    B, T, I = x.shape
    H = w_hh.shape[1]

    def step(carry, x_t):
        h, c = carry
        gates = x_t @ w_ih.T + b_ih + h @ w_hh.T + b_hh
        i, f, g, o = jnp.split(gates, 4, axis=-1)
        i = jax.nn.sigmoid(i)
        f = jax.nn.sigmoid(f)
        g = jnp.tanh(g)
        o = jax.nn.sigmoid(o)
        c = f * c + i * g
        h = o * jnp.tanh(c)
        return (h, c), h

    x_tm = jnp.swapaxes(x, 0, 1)
    (_, _), ys = lax.scan(step, (jnp.zeros((B, H)), jnp.zeros((B, H))), x_tm)
    return jnp.swapaxes(ys, 0, 1)


if __name__ == "__main__":
    # Small shapes consistent with the module's forward: (batch, n_step, input_size).
    # T=64 exercises the cross-tile h/c carry (grid of 2 time tiles of 32).
    B, T, I, H = 2, 64, 12, 32

    key = jax.random.PRNGKey(0)
    kx, k1, k2, k3, k4 = jax.random.split(key, 5)

    x = jax.random.normal(kx, (B, T, I), dtype=jnp.float32)

    # PyTorch nn.LSTM default init: U(-1/sqrt(H), 1/sqrt(H)), gate order (i, f, g, o)
    bound = 1.0 / np.sqrt(H)
    w_ih = jax.random.uniform(k1, (4 * H, I), minval=-bound, maxval=bound, dtype=jnp.float32)
    w_hh = jax.random.uniform(k2, (4 * H, H), minval=-bound, maxval=bound, dtype=jnp.float32)
    b_ih = jax.random.uniform(k3, (4 * H,), minval=-bound, maxval=bound, dtype=jnp.float32)
    b_hh = jax.random.uniform(k4, (4 * H,), minval=-bound, maxval=bound, dtype=jnp.float32)

    out = single_lstm_pallas(x, w_ih, w_hh, b_ih, b_hh)
    out = jax.block_until_ready(out)

    ref = jax.block_until_ready(single_lstm_ref(x, w_ih, w_hh, b_ih, b_hh))
    # bf16 MXU operands (f32 accumulation / gate math) -> relaxed tolerance.
    np.testing.assert_allclose(np.asarray(out), np.asarray(ref), rtol=2e-2, atol=2e-2)
    assert out.shape == (B, T, H)

    print("KERNEL_OK")
</pallas_src>

<mosaic_0001>
module attributes {stable_mosaic.version = 11 : i64} {
  func.func @_lstm_kernel(%arg0: i32, %arg1: memref<2x32x12xbf16, #tpu.memory_space<vmem>>, %arg2: memref<12x128xbf16, #tpu.memory_space<vmem>>, %arg3: memref<32x128xbf16, #tpu.memory_space<vmem>>, %arg4: memref<1x128xf32, #tpu.memory_space<vmem>>, %arg5: memref<2x32x32xf32, #tpu.memory_space<vmem>>, %arg6: memref<2x32x128xf32, #tpu.memory_space<vmem>>, %arg7: memref<2x32xf32, #tpu.memory_space<vmem>>, %arg8: memref<2x32xf32, #tpu.memory_space<vmem>>) attributes {dimension_semantics = [#tpu.dimension_semantics<arbitrary>], iteration_bounds = array<i64: 2>, scalar_prefetch = 0 : i64, scratch_operands = 3 : i64, tpu.core_type = #tpu.core_type<tc>, window_params = [{transform_indices = @transform_0, window_bounds = array<i64: 2, 32, 12>}, {pipeline_mode = #tpu.pipeline_mode<synchronous>, transform_indices = @transform_1, window_bounds = array<i64: 12, 128>}, {pipeline_mode = #tpu.pipeline_mode<synchronous>, transform_indices = @transform_2, window_bounds = array<i64: 32, 128>}, {pipeline_mode = #tpu.pipeline_mode<synchronous>, transform_indices = @transform_3, window_bounds = array<i64: 1, 128>}, {transform_indices = @transform_4, window_bounds = array<i64: 2, 32, 32>}]} {
    %c0_i32 = arith.constant 0 : i32
    %0 = arith.cmpi eq, %arg0, %c0_i32 : i32
    %1 = arith.extui %0 : i1 to i32
    %c0_i32_0 = arith.constant 0 : i32
    %2 = arith.cmpi ne, %1, %c0_i32_0 : i32
    scf.if %2 {
      %cst_287 = arith.constant 0.000000e+00 : f32
      %959 = vector.broadcast %cst_287 : f32 to vector<2x32xf32>
      %c0_288 = arith.constant 0 : index
      %c0_289 = arith.constant 0 : index
      %960 = vector.load %arg7[%c0_288, %c0_289] : memref<2x32xf32, #tpu.memory_space<vmem>>, vector<2x32xf32>
      tpu.vector_store %arg7[%c0_288, %c0_289], %959 {strides = array<i32>} : memref<2x32xf32, #tpu.memory_space<vmem>>, vector<2x32xf32>,
      %cst_290 = arith.constant 0.000000e+00 : f32
      %961 = vector.broadcast %cst_290 : f32 to vector<2x32xf32>
      %c0_291 = arith.constant 0 : index
      %c0_292 = arith.constant 0 : index
      %962 = vector.load %arg8[%c0_291, %c0_292] : memref<2x32xf32, #tpu.memory_space<vmem>>, vector<2x32xf32>
      tpu.vector_store %arg8[%c0_291, %c0_292], %961 {strides = array<i32>} : memref<2x32xf32, #tpu.memory_space<vmem>>, vector<2x32xf32>,
    } else {
    }
    %c0 = arith.constant 0 : index
    %c0_1 = arith.constant 0 : index
    %c0_2 = arith.constant 0 : index
    %3 = vector.load %arg1[%c0, %c0_1, %c0_2] : memref<2x32x12xbf16, #tpu.memory_space<vmem>>, vector<2x32x12xbf16>
    %4 = vector.shape_cast %3 : vector<2x32x12xbf16> to vector<64x12xbf16>
    %c0_3 = arith.constant 0 : index
    %c0_4 = arith.constant 0 : index
    %5 = vector.load %arg2[%c0_3, %c0_4] : memref<12x128xbf16, #tpu.memory_space<vmem>>, vector<12x128xbf16>
    %cst = arith.constant dense<0.000000e+00> : vector<64x128xf32>
    %6 = tpu.matmul %4, %5, %cst {dimension_numbers = #tpu.dot_dimension_numbers<[1], [0], [0], [1], [0, 0, 1, 1], [], []>} : vector<64x12xbf16>, vector<12x128xbf16>, vector<64x128xf32> -> vector<64x128xf32>
    %7 = vector.shape_cast %6 : vector<64x128xf32> to vector<2x32x128xf32>
    %c0_5 = arith.constant 0 : index
    %c0_6 = arith.constant 0 : index
    %8 = vector.load %arg4[%c0_5, %c0_6] : memref<1x128xf32, #tpu.memory_space<vmem>>, vector<1x128xf32>
    %9 = vector.shape_cast %8 : vector<1x128xf32> to vector<1x1x128xf32>
    %10 = vector.broadcast %9 : vector<1x1x128xf32> to vector<2x32x128xf32>
    %11 = arith.addf %7, %10 : vector<2x32x128xf32>
    %c0_7 = arith.constant 0 : index
    %c0_8 = arith.constant 0 : index
    %c0_9 = arith.constant 0 : index
    %12 = vector.load %arg6[%c0_7, %c0_8, %c0_9] : memref<2x32x128xf32, #tpu.memory_space<vmem>>, vector<2x32x128xf32>
    tpu.vector_store %arg6[%c0_7, %c0_8, %c0_9], %11 {strides = array<i32>} : memref<2x32x128xf32, #tpu.memory_space<vmem>>, vector<2x32x128xf32>,
    %13 = tpu.iota {dimensions = array<i32: 1>} : vector<1x128xi32>
    %c64_i32 = arith.constant 64 : i32
    %14 = vector.broadcast %c64_i32 : i32 to vector<1x128xi32>
    %15 = arith.cmpi sge, %13, %14 : vector<1x128xi32>
    %c96_i32 = arith.constant 96 : i32
    %16 = vector.broadcast %c96_i32 : i32 to vector<1x128xi32>
    %17 = arith.cmpi slt, %13, %16 : vector<1x128xi32>
    %18 = arith.andi %15, %17 : vector<1x128xi1>
    %c0_10 = arith.constant 0 : index
    %c0_11 = arith.constant 0 : index
    %19 = vector.load %arg7[%c0_10, %c0_11] : memref<2x32xf32, #tpu.memory_space<vmem>>, vector<2x32xf32>
    %c0_12 = arith.constant 0 : index
    %c0_13 = arith.constant 0 : index
    %20 = vector.load %arg8[%c0_12, %c0_13] : memref<2x32xf32, #tpu.memory_space<vmem>>, vector<2x32xf32>
    %c0_14 = arith.constant 0 : index
    %c0_15 = arith.constant 0 : index
    %c0_16 = arith.constant 0 : index
    %21 = vector.load %arg6[%c0_14, %c0_15, %c0_16] : memref<2x32x128xf32, #tpu.memory_space<vmem>>, vector<2x1x128xf32>
    %22 = vector.shape_cast %21 : vector<2x1x128xf32> to vector<2x128xf32>
    %23 = arith.truncf %19 : vector<2x32xf32> to vector<2x32xbf16>
    %c0_17 = arith.constant 0 : index
    %c0_18 = arith.constant 0 : index
    %24 = vector.load %arg3[%c0_17, %c0_18] : memref<32x128xbf16, #tpu.memory_space<vmem>>, vector<32x128xbf16>
    %cst_19 = arith.constant dense<0.000000e+00> : vector<2x128xf32>
    %25 = tpu.matmul %23, %24, %cst_19 {dimension_numbers = #tpu.dot_dimension_numbers<[1], [0], [0], [1], [0, 0, 1, 1], [], []>} : vector<2x32xbf16>, vector<32x128xbf16>, vector<2x128xf32> -> vector<2x128xf32>
    %26 = arith.addf %22, %25 : vector<2x128xf32>
    %cst_20 = arith.constant 5.000000e-01 : f32
    %27 = vector.broadcast %cst_20 : f32 to vector<2x128xf32>
    %28 = arith.mulf %27, %26 : vector<2x128xf32>
    %29 = vector.shape_cast %18 : vector<1x128xi1> to vector<1x128xi1>
    %30 = vector.broadcast %29 : vector<1x128xi1> to vector<2x128xi1>
    %31 = arith.select %30, %26, %28 : vector<2x128xi1>, vector<2x128xf32>
    %32 = math.tanh %31 : vector<2x128xf32>
    %cst_21 = arith.constant 1.000000e+00 : f32
    %33 = vector.broadcast %cst_21 : f32 to vector<2x128xf32>
    %34 = arith.addf %32, %33 : vector<2x128xf32>
    %cst_22 = arith.constant 5.000000e-01 : f32
    %35 = vector.broadcast %cst_22 : f32 to vector<2x128xf32>
    %36 = arith.mulf %35, %34 : vector<2x128xf32>
    %37 = vector.shape_cast %18 : vector<1x128xi1> to vector<1x128xi1>
    %38 = vector.broadcast %37 : vector<1x128xi1> to vector<2x128xi1>
    %39 = arith.select %38, %32, %36 : vector<2x128xi1>, vector<2x128xf32>
    %40 = vector.extract_strided_slice %39 {offsets = [0, 0], sizes = [2, 32], strides = [1, 1]} : vector<2x128xf32> to vector<2x32xf32>
    %41 = vector.extract_strided_slice %39 {offsets = [0, 32], sizes = [2, 32], strides = [1, 1]} : vector<2x128xf32> to vector<2x32xf32>
    %42 = vector.extract_strided_slice %39 {offsets = [0, 64], sizes = [2, 32], strides = [1, 1]} : vector<2x128xf32> to vector<2x32xf32>
    %43 = vector.extract_strided_slice %39 {offsets = [0, 96], sizes = [2, 32], strides = [1, 1]} : vector<2x128xf32> to vector<2x32xf32>
    %44 = arith.mulf %41, %20 : vector<2x32xf32>
    %45 = arith.mulf %40, %42 : vector<2x32xf32>
    %46 = arith.addf %44, %45 : vector<2x32xf32>
    %47 = math.tanh %46 : vector<2x32xf32>
    %48 = arith.mulf %43, %47 : vector<2x32xf32>
    %c0_23 = arith.constant 0 : index
    %c1 = arith.constant 1 : index
    %c0_24 = arith.constant 0 : index
    %49 = vector.load %arg6[%c0_23, %c1, %c0_24] : memref<2x32x128xf32, #tpu.memory_space<vmem>>, vector<2x1x128xf32>
    %50 = vector.shape_cast %49 : vector<2x1x128xf32> to vector<2x128xf32>
    %51 = arith.truncf %48 : vector<2x32xf32> to vector<2x32xbf16>
    %c0_25 = arith.constant 0 : index
    %c0_26 = arith.constant 0 : index
    %52 = vector.load %arg3[%c0_25, %c0_26] : memref<32x128xbf16, #tpu.memory_space<vmem>>, vector<32x128xbf16>
    %cst_27 = arith.constant dense<0.000000e+00> : vector<2x128xf32>
    %53 = tpu.matmul %51, %52, %cst_27 {dimension_numbers = #tpu.dot_dimension_numbers<[1], [0], [0], [1], [0, 0, 1, 1], [], []>} : vector<2x32xbf16>, vector<32x128xbf16>, vector<2x128xf32> -> vector<2x128xf32>
    %54 = arith.addf %50, %53 : vector<2x128xf32>
    %cst_28 = arith.constant 5.000000e-01 : f32
    %55 = vector.broadcast %cst_28 : f32 to vector<2x128xf32>
    %56 = arith.mulf %55, %54 : vector<2x128xf32>
    %57 = vector.shape_cast %18 : vector<1x128xi1> to vector<1x128xi1>
    %58 = vector.broadcast %57 : vector<1x128xi1> to vector<2x128xi1>
    %59 = arith.select %58, %54, %56 : vector<2x128xi1>, vector<2x128xf32>
    %60 = math.tanh %59 : vector<2x128xf32>
    %cst_29 = arith.constant 1.000000e+00 : f32
    %61 = vector.broadcast %cst_29 : f32 to vector<2x128xf32>
    %62 = arith.addf %60, %61 : vector<2x128xf32>
    %cst_30 = arith.constant 5.000000e-01 : f32
    %63 = vector.broadcast %cst_30 : f32 to vector<2x128xf32>
    %64 = arith.mulf %63, %62 : vector<2x128xf32>
    %65 = vector.shape_cast %18 : vector<1x128xi1> to vector<1x128xi1>
    %66 = vector.broadcast %65 : vector<1x128xi1> to vector<2x128xi1>
    %67 = arith.select %66, %60, %64 : vector<2x128xi1>, vector<2x128xf32>
    %68 = vector.extract_strided_slice %67 {offsets = [0, 0], sizes = [2, 32], strides = [1, 1]} : vector<2x128xf32> to vector<2x32xf32>
    %69 = vector.extract_strided_slice %67 {offsets = [0, 32], sizes = [2, 32], strides = [1, 1]} : vector<2x128xf32> to vector<2x32xf32>
    %70 = vector.extract_strided_slice %67 {offsets = [0, 64], sizes = [2, 32], strides = [1, 1]} : vector<2x128xf32> to vector<2x32xf32>
    %71 = vector.extract_strided_slice %67 {offsets = [0, 96], sizes = [2, 32], strides = [1, 1]} : vector<2x128xf32> to vector<2x32xf32>
    %72 = arith.mulf %69, %46 : vector<2x32xf32>
    %73 = arith.mulf %68, %70 : vector<2x32xf32>
    %74 = arith.addf %72, %73 : vector<2x32xf32>
    %75 = math.tanh %74 : vector<2x32xf32>
    %76 = arith.mulf %71, %75 : vector<2x32xf32>
    %c0_31 = arith.constant 0 : index
    %c2 = arith.constant 2 : index
    %c0_32 = arith.constant 0 : index
    %77 = vector.load %arg6[%c0_31, %c2, %c0_32] : memref<2x32x128xf32, #tpu.memory_space<vmem>>, vector<2x1x128xf32>
    %78 = vector.shape_cast %77 : vector<2x1x128xf32> to vector<2x128xf32>
    %79 = arith.truncf %76 : vector<2x32xf32> to vector<2x32xbf16>
    %c0_33 = arith.constant 0 : index
    %c0_34 = arith.constant 0 : index
    %80 = vector.load %arg3[%c0_33, %c0_34] : memref<32x128xbf16, #tpu.memory_space<vmem>>, vector<32x128xbf16>
    %cst_35 = arith.constant dense<0.000000e+00> : vector<2x128xf32>
    %81 = tpu.matmul %79, %80, %cst_35 {dimension_numbers = #tpu.dot_dimension_numbers<[1], [0], [0], [1], [0, 0, 1, 1], [], []>} : vector<2x32xbf16>, vector<32x128xbf16>, vector<2x128xf32> -> vector<2x128xf32>
    %82 = arith.addf %78, %81 : vector<2x128xf32>
    %cst_36 = arith.constant 5.000000e-01 : f32
    %83 = vector.broadcast %cst_36 : f32 to vector<2x128xf32>
    %84 = arith.mulf %83, %82 : vector<2x128xf32>
    %85 = vector.shape_cast %18 : vector<1x128xi1> to vector<1x128xi1>
    %86 = vector.broadcast %85 : vector<1x128xi1> to vector<2x128xi1>
    %87 = arith.select %86, %82, %84 : vector<2x128xi1>, vector<2x128xf32>
    %88 = math.tanh %87 : vector<2x128xf32>
    %cst_37 = arith.constant 1.000000e+00 : f32
    %89 = vector.broadcast %cst_37 : f32 to vector<2x128xf32>
    %90 = arith.addf %88, %89 : vector<2x128xf32>
    %cst_38 = arith.constant 5.000000e-01 : f32
    %91 = vector.broadcast %cst_38 : f32 to vector<2x128xf32>
    %92 = arith.mulf %91, %90 : vector<2x128xf32>
    %93 = vector.shape_cast %18 : vector<1x128xi1> to vector<1x128xi1>
    %94 = vector.broadcast %93 : vector<1x128xi1> to vector<2x128xi1>
    %95 = arith.select %94, %88, %92 : vector<2x128xi1>, vector<2x128xf32>
    %96 = vector.extract_strided_slice %95 {offsets = [0, 0], sizes = [2, 32], strides = [1, 1]} : vector<2x128xf32> to vector<2x32xf32>
    %97 = vector.extract_strided_slice %95 {offsets = [0, 32], sizes = [2, 32], strides = [1, 1]} : vector<2x128xf32> to vector<2x32xf32>
    %98 = vector.extract_strided_slice %95 {offsets = [0, 64], sizes = [2, 32], strides = [1, 1]} : vector<2x128xf32> to vector<2x32xf32>
    %99 = vector.extract_strided_slice %95 {offsets = [0, 96], sizes = [2, 32], strides = [1, 1]} : vector<2x128xf32> to vector<2x32xf32>
    %100 = arith.mulf %97, %74 : vector<2x32xf32>
    %101 = arith.mulf %96, %98 : vector<2x32xf32>
    %102 = arith.addf %100, %101 : vector<2x32xf32>
    %103 = math.tanh %102 : vector<2x32xf32>
    %104 = arith.mulf %99, %103 : vector<2x32xf32>
    %c0_39 = arith.constant 0 : index
    %c3 = arith.constant 3 : index
    %c0_40 = arith.constant 0 : index
    %105 = vector.load %arg6[%c0_39, %c3, %c0_40] : memref<2x32x128xf32, #tpu.memory_space<vmem>>, vector<2x1x128xf32>
    %106 = vector.shape_cast %105 : vector<2x1x128xf32> to vector<2x128xf32>
    %107 = arith.truncf %104 : vector<2x32xf32> to vector<2x32xbf16>
    %c0_41 = arith.constant 0 : index
    %c0_42 = arith.constant 0 : index
    %108 = vector.load %arg3[%c0_41, %c0_42] : memref<32x128xbf16, #tpu.memory_space<vmem>>, vector<32x128xbf16>
    %cst_43 = arith.constant dense<0.000000e+00> : vector<2x128xf32>
    %109 = tpu.matmul %107, %108, %cst_43 {dimension_numbers = #tpu.dot_dimension_numbers<[1], [0], [0], [1], [0, 0, 1, 1], [], []>} : vector<2x32xbf16>, vector<32x128xbf16>, vector<2x128xf32> -> vector<2x128xf32>
    %110 = arith.addf %106, %109 : vector<2x128xf32>
    %cst_44 = arith.constant 5.000000e-01 : f32
    %111 = vector.broadcast %cst_44 : f32 to vector<2x128xf32>
    %112 = arith.mulf %111, %110 : vector<2x128xf32>
    %113 = vector.shape_cast %18 : vector<1x128xi1> to vector<1x128xi1>
    %114 = vector.broadcast %113 : vector<1x128xi1> to vector<2x128xi1>
    %115 = arith.select %114, %110, %112 : vector<2x128xi1>, vector<2x128xf32>
    %116 = math.tanh %115 : vector<2x128xf32>
    %cst_45 = arith.constant 1.000000e+00 : f32
    %117 = vector.broadcast %cst_45 : f32 to vector<2x128xf32>
    %118 = arith.addf %116, %117 : vector<2x128xf32>
    %cst_46 = arith.constant 5.000000e-01 : f32
    %119 = vector.broadcast %cst_46 : f32 to vector<2x128xf32>
    %120 = arith.mulf %119, %118 : vector<2x128xf32>
    %121 = vector.shape_cast %18 : vector<1x128xi1> to vector<1x128xi1>
    %122 = vector.broadcast %121 : vector<1x128xi1> to vector<2x128xi1>
    %123 = arith.select %122, %116, %120 : vector<2x128xi1>, vector<2x128xf32>
    %124 = vector.extract_strided_slice %123 {offsets = [0, 0], sizes = [2, 32], strides = [1, 1]} : vector<2x128xf32> to vector<2x32xf32>
    %125 = vector.extract_strided_slice %123 {offsets = [0, 32], sizes = [2, 32], strides = [1, 1]} : vector<2x128xf32> to vector<2x32xf32>
    %126 = vector.extract_strided_slice %123 {offsets = [0, 64], sizes = [2, 32], strides = [1, 1]} : vector<2x128xf32> to vector<2x32xf32>
    %127 = vector.extract_strided_slice %123 {offsets = [0, 96], sizes = [2, 32], strides = [1, 1]} : vector<2x128xf32> to vector<2x32xf32>
    %128 = arith.mulf %125, %102 : vector<2x32xf32>
    %129 = arith.mulf %124, %126 : vector<2x32xf32>
    %130 = arith.addf %128, %129 : vector<2x32xf32>
    %131 = math.tanh %130 : vector<2x32xf32>
    %132 = arith.mulf %127, %131 : vector<2x32xf32>
    %c0_47 = arith.constant 0 : index
    %c4 = arith.constant 4 : index
    %c0_48 = arith.constant 0 : index
    %133 = vector.load %arg6[%c0_47, %c4, %c0_48] : memref<2x32x128xf32, #tpu.memory_space<vmem>>, vector<2x1x128xf32>
    %134 = vector.shape_cast %133 : vector<2x1x128xf32> to vector<2x128xf32>
    %135 = arith.truncf %132 : vector<2x32xf32> to vector<2x32xbf16>
    %c0_49 = arith.constant 0 : index
    %c0_50 = arith.constant 0 : index
    %136 = vector.load %arg3[%c0_49, %c0_50] : memref<32x128xbf16, #tpu.memory_space<vmem>>, vector<32x128xbf16>
    %cst_51 = arith.constant dense<0.000000e+00> : vector<2x128xf32>
    %137 = tpu.matmul %135, %136, %cst_51 {dimension_numbers = #tpu.dot_dimension_numbers<[1], [0], [0], [1], [0, 0, 1, 1], [], []>} : vector<2x32xbf16>, vector<32x128xbf16>, vector<2x128xf32> -> vector<2x128xf32>
    %138 = arith.addf %134, %137 : vector<2x128xf32>
    %cst_52 = arith.constant 5.000000e-01 : f32
    %139 = vector.broadcast %cst_52 : f32 to vector<2x128xf32>
    %140 = arith.mulf %139, %138 : vector<2x128xf32>
    %141 = vector.shape_cast %18 : vector<1x128xi1> to vector<1x128xi1>
    %142 = vector.broadcast %141 : vector<1x128xi1> to vector<2x128xi1>
    %143 = arith.select %142, %138, %140 : vector<2x128xi1>, vector<2x128xf32>
    %144 = math.tanh %143 : vector<2x128xf32>
    %cst_53 = arith.constant 1.000000e+00 : f32
    %145 = vector.broadcast %cst_53 : f32 to vector<2x128xf32>
    %146 = arith.addf %144, %145 : vector<2x128xf32>
    %cst_54 = arith.constant 5.000000e-01 : f32
    %147 = vector.broadcast %cst_54 : f32 to vector<2x128xf32>
    %148 = arith.mulf %147, %146 : vector<2x128xf32>
    %149 = vector.shape_cast %18 : vector<1x128xi1> to vector<1x128xi1>
    %150 = vector.broadcast %149 : vector<1x128xi1> to vector<2x128xi1>
    %151 = arith.select %150, %144, %148 : vector<2x128xi1>, vector<2x128xf32>
    %152 = vector.extract_strided_slice %151 {offsets = [0, 0], sizes = [2, 32], strides = [1, 1]} : vector<2x128xf32> to vector<2x32xf32>
    %153 = vector.extract_strided_slice %151 {offsets = [0, 32], sizes = [2, 32], strides = [1, 1]} : vector<2x128xf32> to vector<2x32xf32>
    %154 = vector.extract_strided_slice %151 {offsets = [0, 64], sizes = [2, 32], strides = [1, 1]} : vector<2x128xf32> to vector<2x32xf32>
    %155 = vector.extract_strided_slice %151 {offsets = [0, 96], sizes = [2, 32], strides = [1, 1]} : vector<2x128xf32> to vector<2x32xf32>
    %156 = arith.mulf %153, %130 : vector<2x32xf32>
    %157 = arith.mulf %152, %154 : vector<2x32xf32>
    %158 = arith.addf %156, %157 : vector<2x32xf32>
    %159 = math.tanh %158 : vector<2x32xf32>
    %160 = arith.mulf %155, %159 : vector<2x32xf32>
    %c0_55 = arith.constant 0 : index
    %c5 = arith.constant 5 : index
    %c0_56 = arith.constant 0 : index
    %161 = vector.load %arg6[%c0_55, %c5, %c0_56] : memref<2x32x128xf32, #tpu.memory_space<vmem>>, vector<2x1x128xf32>
    %162 = vector.shape_cast %161 : vector<2x1x128xf32> to vector<2x128xf32>
    %163 = arith.truncf %160 : vector<2x32xf32> to vector<2x32xbf16>
    %c0_57 = arith.constant 0 : index
    %c0_58 = arith.constant 0 : index
    %164 = vector.load %arg3[%c0_57, %c0_58] : memref<32x128xbf16, #tpu.memory_space<vmem>>, vector<32x128xbf16>
    %cst_59 = arith.constant dense<0.000000e+00> : vector<2x128xf32>
    %165 = tpu.matmul %163, %164, %cst_59 {dimension_numbers = #tpu.dot_dimension_numbers<[1], [0], [0], [1], [0, 0, 1, 1], [], []>} : vector<2x32xbf16>, vector<32x128xbf16>, vector<2x128xf32> -> vector<2x128xf32>
    %166 = arith.addf %162, %165 : vector<2x128xf32>
    %cst_60 = arith.constant 5.000000e-01 : f32
    %167 = vector.broadcast %cst_60 : f32 to vector<2x128xf32>
    %168 = arith.mulf %167, %166 : vector<2x128xf32>
    %169 = vector.shape_cast %18 : vector<1x128xi1> to vector<1x128xi1>
    %170 = vector.broadcast %169 : vector<1x128xi1> to vector<2x128xi1>
    %171 = arith.select %170, %166, %168 : vector<2x128xi1>, vector<2x128xf32>
    %172 = math.tanh %171 : vector<2x128xf32>
    %cst_61 = arith.constant 1.000000e+00 : f32
    %173 = vector.broadcast %cst_61 : f32 to vector<2x128xf32>
    %174 = arith.addf %172, %173 : vector<2x128xf32>
    %cst_62 = arith.constant 5.000000e-01 : f32
    %175 = vector.broadcast %cst_62 : f32 to vector<2x128xf32>
    %176 = arith.mulf %175, %174 : vector<2x128xf32>
    %177 = vector.shape_cast %18 : vector<1x128xi1> to vector<1x128xi1>
    %178 = vector.broadcast %177 : vector<1x128xi1> to vector<2x128xi1>
    %179 = arith.select %178, %172, %176 : vector<2x128xi1>, vector<2x128xf32>
    %180 = vector.extract_strided_slice %179 {offsets = [0, 0], sizes = [2, 32], strides = [1, 1]} : vector<2x128xf32> to vector<2x32xf32>
    %181 = vector.extract_strided_slice %179 {offsets = [0, 32], sizes = [2, 32], strides = [1, 1]} : vector<2x128xf32> to vector<2x32xf32>
    %182 = vector.extract_strided_slice %179 {offsets = [0, 64], sizes = [2, 32], strides = [1, 1]} : vector<2x128xf32> to vector<2x32xf32>
    %183 = vector.extract_strided_slice %179 {offsets = [0, 96], sizes = [2, 32], strides = [1, 1]} : vector<2x128xf32> to vector<2x32xf32>
    %184 = arith.mulf %181, %158 : vector<2x32xf32>
    %185 = arith.mulf %180, %182 : vector<2x32xf32>
    %186 = arith.addf %184, %185 : vector<2x32xf32>
    %187 = math.tanh %186 : vector<2x32xf32>
    %188 = arith.mulf %183, %187 : vector<2x32xf32>
    %c0_63 = arith.constant 0 : index
    %c6 = arith.constant 6 : index
    %c0_64 = arith.constant 0 : index
    %189 = vector.load %arg6[%c0_63, %c6, %c0_64] : memref<2x32x128xf32, #tpu.memory_space<vmem>>, vector<2x1x128xf32>
    %190 = vector.shape_cast %189 : vector<2x1x128xf32> to vector<2x128xf32>
    %191 = arith.truncf %188 : vector<2x32xf32> to vector<2x32xbf16>
    %c0_65 = arith.constant 0 : index
    %c0_66 = arith.constant 0 : index
    %192 = vector.load %arg3[%c0_65, %c0_66] : memref<32x128xbf16, #tpu.memory_space<vmem>>, vector<32x128xbf16>
    %cst_67 = arith.constant dense<0.000000e+00> : vector<2x128xf32>
    %193 = tpu.matmul %191, %192, %cst_67 {dimension_numbers = #tpu.dot_dimension_numbers<[1], [0], [0], [1], [0, 0, 1, 1], [], []>} : vector<2x32xbf16>, vector<32x128xbf16>, vector<2x128xf32> -> vector<2x128xf32>
    %194 = arith.addf %190, %193 : vector<2x128xf32>
    %cst_68 = arith.constant 5.000000e-01 : f32
    %195 = vector.broadcast %cst_68 : f32 to vector<2x128xf32>
    %196 = arith.mulf %195, %194 : vector<2x128xf32>
    %197 = vector.shape_cast %18 : vector<1x128xi1> to vector<1x128xi1>
    %198 = vector.broadcast %197 : vector<1x128xi1> to vector<2x128xi1>
    %199 = arith.select %198, %194, %196 : vector<2x128xi1>, vector<2x128xf32>
    %200 = math.tanh %199 : vector<2x128xf32>
    %cst_69 = arith.constant 1.000000e+00 : f32
    %201 = vector.broadcast %cst_69 : f32 to vector<2x128xf32>
    %202 = arith.addf %200, %201 : vector<2x128xf32>
    %cst_70 = arith.constant 5.000000e-01 : f32
    %203 = vector.broadcast %cst_70 : f32 to vector<2x128xf32>
    %204 = arith.mulf %203, %202 : vector<2x128xf32>
    %205 = vector.shape_cast %18 : vector<1x128xi1> to vector<1x128xi1>
    %206 = vector.broadcast %205 : vector<1x128xi1> to vector<2x128xi1>
    %207 = arith.select %206, %200, %204 : vector<2x128xi1>, vector<2x128xf32>
    %208 = vector.extract_strided_slice %207 {offsets = [0, 0], sizes = [2, 32], strides = [1, 1]} : vector<2x128xf32> to vector<2x32xf32>
    %209 = vector.extract_strided_slice %207 {offsets = [0, 32], sizes = [2, 32], strides = [1, 1]} : vector<2x128xf32> to vector<2x32xf32>
    %210 = vector.extract_strided_slice %207 {offsets = [0, 64], sizes = [2, 32], strides = [1, 1]} : vector<2x128xf32> to vector<2x32xf32>
    %211 = vector.extract_strided_slice %207 {offsets = [0, 96], sizes = [2, 32], strides = [1, 1]} : vector<2x128xf32> to vector<2x32xf32>
    %212 = arith.mulf %209, %186 : vector<2x32xf32>
    %213 = arith.mulf %208, %210 : vector<2x32xf32>
    %214 = arith.addf %212, %213 : vector<2x32xf32>
    %215 = math.tanh %214 : vector<2x32xf32>
    %216 = arith.mulf %211, %215 : vector<2x32xf32>
    %c0_71 = arith.constant 0 : index
    %c7 = arith.constant 7 : index
    %c0_72 = arith.constant 0 : index
    %217 = vector.load %arg6[%c0_71, %c7, %c0_72] : memref<2x32x128xf32, #tpu.memory_space<vmem>>, vector<2x1x128xf32>
    %218 = vector.shape_cast %217 : vector<2x1x128xf32> to vector<2x128xf32>
    %219 = arith.truncf %216 : vector<2x32xf32> to vector<2x32xbf16>
    %c0_73 = arith.constant 0 : index
    %c0_74 = arith.constant 0 : index
    %220 = vector.load %arg3[%c0_73, %c0_74] : memref<32x128xbf16, #tpu.memory_space<vmem>>, vector<32x128xbf16>
    %cst_75 = arith.constant dense<0.000000e+00> : vector<2x128xf32>
    %221 = tpu.matmul %219, %220, %cst_75 {dimension_numbers = #tpu.dot_dimension_numbers<[1], [0], [0], [1], [0, 0, 1, 1], [], []>} : vector<2x32xbf16>, vector<32x128xbf16>, vector<2x128xf32> -> vector<2x128xf32>
    %222 = arith.addf %218, %221 : vector<2x128xf32>
    %cst_76 = arith.constant 5.000000e-01 : f32
    %223 = vector.broadcast %cst_76 : f32 to vector<2x128xf32>
    %224 = arith.mulf %223, %222 : vector<2x128xf32>
    %225 = vector.shape_cast %18 : vector<1x128xi1> to vector<1x128xi1>
    %226 = vector.broadcast %225 : vector<1x128xi1> to vector<2x128xi1>
    %227 = arith.select %226, %222, %224 : vector<2x128xi1>, vector<2x128xf32>
    %228 = math.tanh %227 : vector<2x128xf32>
    %cst_77 = arith.constant 1.000000e+00 : f32
    %229 = vector.broadcast %cst_77 : f32 to vector<2x128xf32>
    %230 = arith.addf %228, %229 : vector<2x128xf32>
    %cst_78 = arith.constant 5.000000e-01 : f32
    %231 = vector.broadcast %cst_78 : f32 to vector<2x128xf32>
    %232 = arith.mulf %231, %230 : vector<2x128xf32>
    %233 = vector.shape_cast %18 : vector<1x128xi1> to vector<1x128xi1>
    %234 = vector.broadcast %233 : vector<1x128xi1> to vector<2x128xi1>
    %235 = arith.select %234, %228, %232 : vector<2x128xi1>, vector<2x128xf32>
    %236 = vector.extract_strided_slice %235 {offsets = [0, 0], sizes = [2, 32], strides = [1, 1]} : vector<2x128xf32> to vector<2x32xf32>
    %237 = vector.extract_strided_slice %235 {offsets = [0, 32], sizes = [2, 32], strides = [1, 1]} : vector<2x128xf32> to vector<2x32xf32>
    %238 = vector.extract_strided_slice %235 {offsets = [0, 64], sizes = [2, 32], strides = [1, 1]} : vector<2x128xf32> to vector<2x32xf32>
    %239 = vector.extract_strided_slice %235 {offsets = [0, 96], sizes = [2, 32], strides = [1, 1]} : vector<2x128xf32> to vector<2x32xf32>
    %240 = arith.mulf %237, %214 : vector<2x32xf32>
    %241 = arith.mulf %236, %238 : vector<2x32xf32>
    %242 = arith.addf %240, %241 : vector<2x32xf32>
    %243 = math.tanh %242 : vector<2x32xf32>
    %244 = arith.mulf %239, %243 : vector<2x32xf32>
    %245 = vector.shape_cast %48 : vector<2x32xf32> to vector<2x1x32xf32>
    %246 = vector.shape_cast %76 : vector<2x32xf32> to vector<2x1x32xf32>
    %247 = vector.shape_cast %104 : vector<2x32xf32> to vector<2x1x32xf32>
    %248 = vector.shape_cast %132 : vector<2x32xf32> to vector<2x1x32xf32>
    %249 = vector.shape_cast %160 : vector<2x32xf32> to vector<2x1x32xf32>
    %250 = vector.shape_cast %188 : vector<2x32xf32> to vector<2x1x32xf32>
    %251 = vector.shape_cast %216 : vector<2x32xf32> to vector<2x1x32xf32>
    %252 = vector.shape_cast %244 : vector<2x32xf32> to vector<2x1x32xf32>
    %253 = tpu.concatenate %245, %246, %247, %248, %249, %250, %251, %252 in 1 : vector<2x1x32xf32>, vector<2x1x32xf32>, vector<2x1x32xf32>, vector<2x1x32xf32>, vector<2x1x32xf32>, vector<2x1x32xf32>, vector<2x1x32xf32>, vector<2x1x32xf32> -> vector<2x8x32xf32>
    %c0_79 = arith.constant 0 : index
    %c0_80 = arith.constant 0 : index
    %c0_81 = arith.constant 0 : index
    %254 = vector.load %arg5[%c0_79, %c0_80, %c0_81] : memref<2x32x32xf32, #tpu.memory_space<vmem>>, vector<2x8x32xf32>
    tpu.vector_store %arg5[%c0_79, %c0_80, %c0_81], %253 {strides = array<i32>} : memref<2x32x32xf32, #tpu.memory_space<vmem>>, vector<2x8x32xf32>,
    %c0_82 = arith.constant 0 : index
    %c8 = arith.constant 8 : index
    %c0_83 = arith.constant 0 : index
    %255 = vector.load %arg6[%c0_82, %c8, %c0_83] : memref<2x32x128xf32, #tpu.memory_space<vmem>>, vector<2x1x128xf32>
    %256 = vector.shape_cast %255 : vector<2x1x128xf32> to vector<2x128xf32>
    %257 = arith.truncf %244 : vector<2x32xf32> to vector<2x32xbf16>
    %c0_84 = arith.constant 0 : index
    %c0_85 = arith.constant 0 : index
    %258 = vector.load %arg3[%c0_84, %c0_85] : memref<32x128xbf16, #tpu.memory_space<vmem>>, vector<32x128xbf16>
    %cst_86 = arith.constant dense<0.000000e+00> : vector<2x128xf32>
    %259 = tpu.matmul %257, %258, %cst_86 {dimension_numbers = #tpu.dot_dimension_numbers<[1], [0], [0], [1], [0, 0, 1, 1], [], []>} : vector<2x32xbf16>, vector<32x128xbf16>, vector<2x128xf32> -> vector<2x128xf32>
    %260 = arith.addf %256, %259 : vector<2x128xf32>
    %cst_87 = arith.constant 5.000000e-01 : f32
    %261 = vector.broadcast %cst_87 : f32 to vector<2x128xf32>
    %262 = arith.mulf %261, %260 : vector<2x128xf32>
    %263 = vector.shape_cast %18 : vector<1x128xi1> to vector<1x128xi1>
    %264 = vector.broadcast %263 : vector<1x128xi1> to vector<2x128xi1>
    %265 = arith.select %264, %260, %262 : vector<2x128xi1>, vector<2x128xf32>
    %266 = math.tanh %265 : vector<2x128xf32>
    %cst_88 = arith.constant 1.000000e+00 : f32
    %267 = vector.broadcast %cst_88 : f32 to vector<2x128xf32>
    %268 = arith.addf %266, %267 : vector<2x128xf32>
    %cst_89 = arith.constant 5.000000e-01 : f32
    %269 = vector.broadcast %cst_89 : f32 to vector<2x128xf32>
    %270 = arith.mulf %269, %268 : vector<2x128xf32>
    %271 = vector.shape_cast %18 : vector<1x128xi1> to vector<1x128xi1>
    %272 = vector.broadcast %271 : vector<1x128xi1> to vector<2x128xi1>
    %273 = arith.select %272, %266, %270 : vector<2x128xi1>, vector<2x128xf32>
    %274 = vector.extract_strided_slice %273 {offsets = [0, 0], sizes = [2, 32], strides = [1, 1]} : vector<2x128xf32> to vector<2x32xf32>
    %275 = vector.extract_strided_slice %273 {offsets = [0, 32], sizes = [2, 32], strides = [1, 1]} : vector<2x128xf32> to vector<2x32xf32>
    %276 = vector.extract_strided_slice %273 {offsets = [0, 64], sizes = [2, 32], strides = [1, 1]} : vector<2x128xf32> to vector<2x32xf32>
    %277 = vector.extract_strided_slice %273 {offsets = [0, 96], sizes = [2, 32], strides = [1, 1]} : vector<2x128xf32> to vector<2x32xf32>
    %278 = arith.mulf %275, %242 : vector<2x32xf32>
    %279 = arith.mulf %274, %276 : vector<2x32xf32>
    %280 = arith.addf %278, %279 : vector<2x32xf32>
    %281 = math.tanh %280 : vector<2x32xf32>
    %282 = arith.mulf %277, %281 : vector<2x32xf32>
    %c0_90 = arith.constant 0 : index
    %c9 = arith.constant 9 : index
    %c0_91 = arith.constant 0 : index
    %283 = vector.load %arg6[%c0_90, %c9, %c0_91] : memref<2x32x128xf32, #tpu.memory_space<vmem>>, vector<2x1x128xf32>
    %284 = vector.shape_cast %283 : vector<2x1x128xf32> to vector<2x128xf32>
    %285 = arith.truncf %282 : vector<2x32xf32> to vector<2x32xbf16>
    %c0_92 = arith.constant 0 : index
    %c0_93 = arith.constant 0 : index
    %286 = vector.load %arg3[%c0_92, %c0_93] : memref<32x128xbf16, #tpu.memory_space<vmem>>, vector<32x128xbf16>
    %cst_94 = arith.constant dense<0.000000e+00> : vector<2x128xf32>
    %287 = tpu.matmul %285, %286, %cst_94 {dimension_numbers = #tpu.dot_dimension_numbers<[1], [0], [0], [1], [0, 0, 1, 1], [], []>} : vector<2x32xbf16>, vector<32x128xbf16>, vector<2x128xf32> -> vector<2x128xf32>
    %288 = arith.addf %284, %287 : vector<2x128xf32>
    %cst_95 = arith.constant 5.000000e-01 : f32
    %289 = vector.broadcast %cst_95 : f32 to vector<2x128xf32>
    %290 = arith.mulf %289, %288 : vector<2x128xf32>
    %291 = vector.shape_cast %18 : vector<1x128xi1> to vector<1x128xi1>
    %292 = vector.broadcast %291 : vector<1x128xi1> to vector<2x128xi1>
    %293 = arith.select %292, %288, %290 : vector<2x128xi1>, vector<2x128xf32>
    %294 = math.tanh %293 : vector<2x128xf32>
    %cst_96 = arith.constant 1.000000e+00 : f32
    %295 = vector.broadcast %cst_96 : f32 to vector<2x128xf32>
    %296 = arith.addf %294, %295 : vector<2x128xf32>
    %cst_97 = arith.constant 5.000000e-01 : f32
    %297 = vector.broadcast %cst_97 : f32 to vector<2x128xf32>
    %298 = arith.mulf %297, %296 : vector<2x128xf32>
    %299 = vector.shape_cast %18 : vector<1x128xi1> to vector<1x128xi1>
    %300 = vector.broadcast %299 : vector<1x128xi1> to vector<2x128xi1>
    %301 = arith.select %300, %294, %298 : vector<2x128xi1>, vector<2x128xf32>
    %302 = vector.extract_strided_slice %301 {offsets = [0, 0], sizes = [2, 32], strides = [1, 1]} : vector<2x128xf32> to vector<2x32xf32>
    %303 = vector.extract_strided_slice %301 {offsets = [0, 32], sizes = [2, 32], strides = [1, 1]} : vector<2x128xf32> to vector<2x32xf32>
    %304 = vector.extract_strided_slice %301 {offsets = [0, 64], sizes = [2, 32], strides = [1, 1]} : vector<2x128xf32> to vector<2x32xf32>
    %305 = vector.extract_strided_slice %301 {offsets = [0, 96], sizes = [2, 32], strides = [1, 1]} : vector<2x128xf32> to vector<2x32xf32>
    %306 = arith.mulf %303, %280 : vector<2x32xf32>
    %307 = arith.mulf %302, %304 : vector<2x32xf32>
    %308 = arith.addf %306, %307 : vector<2x32xf32>
    %309 = math.tanh %308 : vector<2x32xf32>
    %310 = arith.mulf %305, %309 : vector<2x32xf32>
    %c0_98 = arith.constant 0 : index
    %c10 = arith.constant 10 : index
    %c0_99 = arith.constant 0 : index
    %311 = vector.load %arg6[%c0_98, %c10, %c0_99] : memref<2x32x128xf32, #tpu.memory_space<vmem>>, vector<2x1x128xf32>
    %312 = vector.shape_cast %311 : vector<2x1x128xf32> to vector<2x128xf32>
    %313 = arith.truncf %310 : vector<2x32xf32> to vector<2x32xbf16>
    %c0_100 = arith.constant 0 : index
    %c0_101 = arith.constant 0 : index
    %314 = vector.load %arg3[%c0_100, %c0_101] : memref<32x128xbf16, #tpu.memory_space<vmem>>, vector<32x128xbf16>
    %cst_102 = arith.constant dense<0.000000e+00> : vector<2x128xf32>
    %315 = tpu.matmul %313, %314, %cst_102 {dimension_numbers = #tpu.dot_dimension_numbers<[1], [0], [0], [1], [0, 0, 1, 1], [], []>} : vector<2x32xbf16>, vector<32x128xbf16>, vector<2x128xf32> -> vector<2x128xf32>
    %316 = arith.addf %312, %315 : vector<2x128xf32>
    %cst_103 = arith.constant 5.000000e-01 : f32
    %317 = vector.broadcast %cst_103 : f32 to vector<2x128xf32>
    %318 = arith.mulf %317, %316 : vector<2x128xf32>
    %319 = vector.shape_cast %18 : vector<1x128xi1> to vector<1x128xi1>
    %320 = vector.broadcast %319 : vector<1x128xi1> to vector<2x128xi1>
    %321 = arith.select %320, %316, %318 : vector<2x128xi1>, vector<2x128xf32>
    %322 = math.tanh %321 : vector<2x128xf32>
    %cst_104 = arith.constant 1.000000e+00 : f32
    %323 = vector.broadcast %cst_104 : f32 to vector<2x128xf32>
    %324 = arith.addf %322, %323 : vector<2x128xf32>
    %cst_105 = arith.constant 5.000000e-01 : f32
    %325 = vector.broadcast %cst_105 : f32 to vector<2x128xf32>
    %326 = arith.mulf %325, %324 : vector<2x128xf32>
    %327 = vector.shape_cast %18 : vector<1x128xi1> to vector<1x128xi1>
    %328 = vector.broadcast %327 : vector<1x128xi1> to vector<2x128xi1>
    %329 = arith.select %328, %322, %326 : vector<2x128xi1>, vector<2x128xf32>
    %330 = vector.extract_strided_slice %329 {offsets = [0, 0], sizes = [2, 32], strides = [1, 1]} : vector<2x128xf32> to vector<2x32xf32>
    %331 = vector.extract_strided_slice %329 {offsets = [0, 32], sizes = [2, 32], strides = [1, 1]} : vector<2x128xf32> to vector<2x32xf32>
    %332 = vector.extract_strided_slice %329 {offsets = [0, 64], sizes = [2, 32], strides = [1, 1]} : vector<2x128xf32> to vector<2x32xf32>
    %333 = vector.extract_strided_slice %329 {offsets = [0, 96], sizes = [2, 32], strides = [1, 1]} : vector<2x128xf32> to vector<2x32xf32>
    %334 = arith.mulf %331, %308 : vector<2x32xf32>
    %335 = arith.mulf %330, %332 : vector<2x32xf32>
    %336 = arith.addf %334, %335 : vector<2x32xf32>
    %337 = math.tanh %336 : vector<2x32xf32>
    %338 = arith.mulf %333, %337 : vector<2x32xf32>
    %c0_106 = arith.constant 0 : index
    %c11 = arith.constant 11 : index
    %c0_107 = arith.constant 0 : index
    %339 = vector.load %arg6[%c0_106, %c11, %c0_107] : memref<2x32x128xf32, #tpu.memory_space<vmem>>, vector<2x1x128xf32>
    %340 = vector.shape_cast %339 : vector<2x1x128xf32> to vector<2x128xf32>
    %341 = arith.truncf %338 : vector<2x32xf32> to vector<2x32xbf16>
    %c0_108 = arith.constant 0 : index
    %c0_109 = arith.constant 0 : index
    %342 = vector.load %arg3[%c0_108, %c0_109] : memref<32x128xbf16, #tpu.memory_space<vmem>>, vector<32x128xbf16>
    %cst_110 = arith.constant dense<0.000000e+00> : vector<2x128xf32>
    %343 = tpu.matmul %341, %342, %cst_110 {dimension_numbers = #tpu.dot_dimension_numbers<[1], [0], [0], [1], [0, 0, 1, 1], [], []>} : vector<2x32xbf16>, vector<32x128xbf16>, vector<2x128xf32> -> vector<2x128xf32>
    %344 = arith.addf %340, %343 : vector<2x128xf32>
    %cst_111 = arith.constant 5.000000e-01 : f32
    %345 = vector.broadcast %cst_111 : f32 to vector<2x128xf32>
    %346 = arith.mulf %345, %344 : vector<2x128xf32>
    %347 = vector.shape_cast %18 : vector<1x128xi1> to vector<1x128xi1>
    %348 = vector.broadcast %347 : vector<1x128xi1> to vector<2x128xi1>
    %349 = arith.select %348, %344, %346 : vector<2x128xi1>, vector<2x128xf32>
    %350 = math.tanh %349 : vector<2x128xf32>
    %cst_112 = arith.constant 1.000000e+00 : f32
    %351 = vector.broadcast %cst_112 : f32 to vector<2x128xf32>
    %352 = arith.addf %350, %351 : vector<2x128xf32>
    %cst_113 = arith.constant 5.000000e-01 : f32
    %353 = vector.broadcast %cst_113 : f32 to vector<2x128xf32>
    %354 = arith.mulf %353, %352 : vector<2x128xf32>
    %355 = vector.shape_cast %18 : vector<1x128xi1> to vector<1x128xi1>
    %356 = vector.broadcast %355 : vector<1x128xi1> to vector<2x128xi1>
    %357 = arith.select %356, %350, %354 : vector<2x128xi1>, vector<2x128xf32>
    %358 = vector.extract_strided_slice %357 {offsets = [0, 0], sizes = [2, 32], strides = [1, 1]} : vector<2x128xf32> to vector<2x32xf32>
    %359 = vector.extract_strided_slice %357 {offsets = [0, 32], sizes = [2, 32], strides = [1, 1]} : vector<2x128xf32> to vector<2x32xf32>
    %360 = vector.extract_strided_slice %357 {offsets = [0, 64], sizes = [2, 32], strides = [1, 1]} : vector<2x128xf32> to vector<2x32xf32>
    %361 = vector.extract_strided_slice %357 {offsets = [0, 96], sizes = [2, 32], strides = [1, 1]} : vector<2x128xf32> to vector<2x32xf32>
    %362 = arith.mulf %359, %336 : vector<2x32xf32>
    %363 = arith.mulf %358, %360 : vector<2x32xf32>
    %364 = arith.addf %362, %363 : vector<2x32xf32>
    %365 = math.tanh %364 : vector<2x32xf32>
    %366 = arith.mulf %361, %365 : vector<2x32xf32>
    %c0_114 = arith.constant 0 : index
    %c12 = arith.constant 12 : index
    %c0_115 = arith.constant 0 : index
    %367 = vector.load %arg6[%c0_114, %c12, %c0_115] : memref<2x32x128xf32, #tpu.memory_space<vmem>>, vector<2x1x128xf32>
    %368 = vector.shape_cast %367 : vector<2x1x128xf32> to vector<2x128xf32>
    %369 = arith.truncf %366 : vector<2x32xf32> to vector<2x32xbf16>
    %c0_116 = arith.constant 0 : index
    %c0_117 = arith.constant 0 : index
    %370 = vector.load %arg3[%c0_116, %c0_117] : memref<32x128xbf16, #tpu.memory_space<vmem>>, vector<32x128xbf16>
    %cst_118 = arith.constant dense<0.000000e+00> : vector<2x128xf32>
    %371 = tpu.matmul %369, %370, %cst_118 {dimension_numbers = #tpu.dot_dimension_numbers<[1], [0], [0], [1], [0, 0, 1, 1], [], []>} : vector<2x32xbf16>, vector<32x128xbf16>, vector<2x128xf32> -> vector<2x128xf32>
    %372 = arith.addf %368, %371 : vector<2x128xf32>
    %cst_119 = arith.constant 5.000000e-01 : f32
    %373 = vector.broadcast %cst_119 : f32 to vector<2x128xf32>
    %374 = arith.mulf %373, %372 : vector<2x128xf32>
    %375 = vector.shape_cast %18 : vector<1x128xi1> to vector<1x128xi1>
    %376 = vector.broadcast %375 : vector<1x128xi1> to vector<2x128xi1>
    %377 = arith.select %376, %372, %374 : vector<2x128xi1>, vector<2x128xf32>
    %378 = math.tanh %377 : vector<2x128xf32>
    %cst_120 = arith.constant 1.000000e+00 : f32
    %379 = vector.broadcast %cst_120 : f32 to vector<2x128xf32>
    %380 = arith.addf %378, %379 : vector<2x128xf32>
    %cst_121 = arith.constant 5.000000e-01 : f32
    %381 = vector.broadcast %cst_121 : f32 to vector<2x128xf32>
    %382 = arith.mulf %381, %380 : vector<2x128xf32>
    %383 = vector.shape_cast %18 : vector<1x128xi1> to vector<1x128xi1>
    %384 = vector.broadcast %383 : vector<1x128xi1> to vector<2x128xi1>
    %385 = arith.select %384, %378, %382 : vector<2x128xi1>, vector<2x128xf32>
    %386 = vector.extract_strided_slice %385 {offsets = [0, 0], sizes = [2, 32], strides = [1, 1]} : vector<2x128xf32> to vector<2x32xf32>
    %387 = vector.extract_strided_slice %385 {offsets = [0, 32], sizes = [2, 32], strides = [1, 1]} : vector<2x128xf32> to vector<2x32xf32>
    %388 = vector.extract_strided_slice %385 {offsets = [0, 64], sizes = [2, 32], strides = [1, 1]} : vector<2x128xf32> to vector<2x32xf32>
    %389 = vector.extract_strided_slice %385 {offsets = [0, 96], sizes = [2, 32], strides = [1, 1]} : vector<2x128xf32> to vector<2x32xf32>
    %390 = arith.mulf %387, %364 : vector<2x32xf32>
    %391 = arith.mulf %386, %388 : vector<2x32xf32>
    %392 = arith.addf %390, %391 : vector<2x32xf32>
    %393 = math.tanh %392 : vector<2x32xf32>
    %394 = arith.mulf %389, %393 : vector<2x32xf32>
    %c0_122 = arith.constant 0 : index
    %c13 = arith.constant 13 : index
    %c0_123 = arith.constant 0 : index
    %395 = vector.load %arg6[%c0_122, %c13, %c0_123] : memref<2x32x128xf32, #tpu.memory_space<vmem>>, vector<2x1x128xf32>
    %396 = vector.shape_cast %395 : vector<2x1x128xf32> to vector<2x128xf32>
    %397 = arith.truncf %394 : vector<2x32xf32> to vector<2x32xbf16>
    %c0_124 = arith.constant 0 : index
    %c0_125 = arith.constant 0 : index
    %398 = vector.load %arg3[%c0_124, %c0_125] : memref<32x128xbf16, #tpu.memory_space<vmem>>, vector<32x128xbf16>
    %cst_126 = arith.constant dense<0.000000e+00> : vector<2x128xf32>
    %399 = tpu.matmul %397, %398, %cst_126 {dimension_numbers = #tpu.dot_dimension_numbers<[1], [0], [0], [1], [0, 0, 1, 1], [], []>} : vector<2x32xbf16>, vector<32x128xbf16>, vector<2x128xf32> -> vector<2x128xf32>
    %400 = arith.addf %396, %399 : vector<2x128xf32>
    %cst_127 = arith.constant 5.000000e-01 : f32
    %401 = vector.broadcast %cst_127 : f32 to vector<2x128xf32>
    %402 = arith.mulf %401, %400 : vector<2x128xf32>
    %403 = vector.shape_cast %18 : vector<1x128xi1> to vector<1x128xi1>
    %404 = vector.broadcast %403 : vector<1x128xi1> to vector<2x128xi1>
    %405 = arith.select %404, %400, %402 : vector<2x128xi1>, vector<2x128xf32>
    %406 = math.tanh %405 : vector<2x128xf32>
    %cst_128 = arith.constant 1.000000e+00 : f32
    %407 = vector.broadcast %cst_128 : f32 to vector<2x128xf32>
    %408 = arith.addf %406, %407 : vector<2x128xf32>
    %cst_129 = arith.constant 5.000000e-01 : f32
    %409 = vector.broadcast %cst_129 : f32 to vector<2x128xf32>
    %410 = arith.mulf %409, %408 : vector<2x128xf32>
    %411 = vector.shape_cast %18 : vector<1x128xi1> to vector<1x128xi1>
    %412 = vector.broadcast %411 : vector<1x128xi1> to vector<2x128xi1>
    %413 = arith.select %412, %406, %410 : vector<2x128xi1>, vector<2x128xf32>
    %414 = vector.extract_strided_slice %413 {offsets = [0, 0], sizes = [2, 32], strides = [1, 1]} : vector<2x128xf32> to vector<2x32xf32>
    %415 = vector.extract_strided_slice %413 {offsets = [0, 32], sizes = [2, 32], strides = [1, 1]} : vector<2x128xf32> to vector<2x32xf32>
    %416 = vector.extract_strided_slice %413 {offsets = [0, 64], sizes = [2, 32], strides = [1, 1]} : vector<2x128xf32> to vector<2x32xf32>
    %417 = vector.extract_strided_slice %413 {offsets = [0, 96], sizes = [2, 32], strides = [1, 1]} : vector<2x128xf32> to vector<2x32xf32>
    %418 = arith.mulf %415, %392 : vector<2x32xf32>
    %419 = arith.mulf %414, %416 : vector<2x32xf32>
    %420 = arith.addf %418, %419 : vector<2x32xf32>
    %421 = math.tanh %420 : vector<2x32xf32>
    %422 = arith.mulf %417, %421 : vector<2x32xf32>
    %c0_130 = arith.constant 0 : index
    %c14 = arith.constant 14 : index
    %c0_131 = arith.constant 0 : index
    %423 = vector.load %arg6[%c0_130, %c14, %c0_131] : memref<2x32x128xf32, #tpu.memory_space<vmem>>, vector<2x1x128xf32>
    %424 = vector.shape_cast %423 : vector<2x1x128xf32> to vector<2x128xf32>
    %425 = arith.truncf %422 : vector<2x32xf32> to vector<2x32xbf16>
    %c0_132 = arith.constant 0 : index
    %c0_133 = arith.constant 0 : index
    %426 = vector.load %arg3[%c0_132, %c0_133] : memref<32x128xbf16, #tpu.memory_space<vmem>>, vector<32x128xbf16>
    %cst_134 = arith.constant dense<0.000000e+00> : vector<2x128xf32>
    %427 = tpu.matmul %425, %426, %cst_134 {dimension_numbers = #tpu.dot_dimension_numbers<[1], [0], [0], [1], [0, 0, 1, 1], [], []>} : vector<2x32xbf16>, vector<32x128xbf16>, vector<2x128xf32> -> vector<2x128xf32>
    %428 = arith.addf %424, %427 : vector<2x128xf32>
    %cst_135 = arith.constant 5.000000e-01 : f32
    %429 = vector.broadcast %cst_135 : f32 to vector<2x128xf32>
    %430 = arith.mulf %429, %428 : vector<2x128xf32>
    %431 = vector.shape_cast %18 : vector<1x128xi1> to vector<1x128xi1>
    %432 = vector.broadcast %431 : vector<1x128xi1> to vector<2x128xi1>
    %433 = arith.select %432, %428, %430 : vector<2x128xi1>, vector<2x128xf32>
    %434 = math.tanh %433 : vector<2x128xf32>
    %cst_136 = arith.constant 1.000000e+00 : f32
    %435 = vector.broadcast %cst_136 : f32 to vector<2x128xf32>
    %436 = arith.addf %434, %435 : vector<2x128xf32>
    %cst_137 = arith.constant 5.000000e-01 : f32
    %437 = vector.broadcast %cst_137 : f32 to vector<2x128xf32>
    %438 = arith.mulf %437, %436 : vector<2x128xf32>
    %439 = vector.shape_cast %18 : vector<1x128xi1> to vector<1x128xi1>
    %440 = vector.broadcast %439 : vector<1x128xi1> to vector<2x128xi1>
    %441 = arith.select %440, %434, %438 : vector<2x128xi1>, vector<2x128xf32>
    %442 = vector.extract_strided_slice %441 {offsets = [0, 0], sizes = [2, 32], strides = [1, 1]} : vector<2x128xf32> to vector<2x32xf32>
    %443 = vector.extract_strided_slice %441 {offsets = [0, 32], sizes = [2, 32], strides = [1, 1]} : vector<2x128xf32> to vector<2x32xf32>
    %444 = vector.extract_strided_slice %441 {offsets = [0, 64], sizes = [2, 32], strides = [1, 1]} : vector<2x128xf32> to vector<2x32xf32>
    %445 = vector.extract_strided_slice %441 {offsets = [0, 96], sizes = [2, 32], strides = [1, 1]} : vector<2x128xf32> to vector<2x32xf32>
    %446 = arith.mulf %443, %420 : vector<2x32xf32>
    %447 = arith.mulf %442, %444 : vector<2x32xf32>
    %448 = arith.addf %446, %447 : vector<2x32xf32>
    %449 = math.tanh %448 : vector<2x32xf32>
    %450 = arith.mulf %445, %449 : vector<2x32xf32>
    %c0_138 = arith.constant 0 : index
    %c15 = arith.constant 15 : index
    %c0_139 = arith.constant 0 : index
    %451 = vector.load %arg6[%c0_138, %c15, %c0_139] : memref<2x32x128xf32, #tpu.memory_space<vmem>>, vector<2x1x128xf32>
    %452 = vector.shape_cast %451 : vector<2x1x128xf32> to vector<2x128xf32>
    %453 = arith.truncf %450 : vector<2x32xf32> to vector<2x32xbf16>
    %c0_140 = arith.constant 0 : index
    %c0_141 = arith.constant 0 : index
    %454 = vector.load %arg3[%c0_140, %c0_141] : memref<32x128xbf16, #tpu.memory_space<vmem>>, vector<32x128xbf16>
    %cst_142 = arith.constant dense<0.000000e+00> : vector<2x128xf32>
    %455 = tpu.matmul %453, %454, %cst_142 {dimension_numbers = #tpu.dot_dimension_numbers<[1], [0], [0], [1], [0, 0, 1, 1], [], []>} : vector<2x32xbf16>, vector<32x128xbf16>, vector<2x128xf32> -> vector<2x128xf32>
    %456 = arith.addf %452, %455 : vector<2x128xf32>
    %cst_143 = arith.constant 5.000000e-01 : f32
    %457 = vector.broadcast %cst_143 : f32 to vector<2x128xf32>
    %458 = arith.mulf %457, %456 : vector<2x128xf32>
    %459 = vector.shape_cast %18 : vector<1x128xi1> to vector<1x128xi1>
    %460 = vector.broadcast %459 : vector<1x128xi1> to vector<2x128xi1>
    %461 = arith.select %460, %456, %458 : vector<2x128xi1>, vector<2x128xf32>
    %462 = math.tanh %461 : vector<2x128xf32>
    %cst_144 = arith.constant 1.000000e+00 : f32
    %463 = vector.broadcast %cst_144 : f32 to vector<2x128xf32>
    %464 = arith.addf %462, %463 : vector<2x128xf32>
    %cst_145 = arith.constant 5.000000e-01 : f32
    %465 = vector.broadcast %cst_145 : f32 to vector<2x128xf32>
    %466 = arith.mulf %465, %464 : vector<2x128xf32>
    %467 = vector.shape_cast %18 : vector<1x128xi1> to vector<1x128xi1>
    %468 = vector.broadcast %467 : vector<1x128xi1> to vector<2x128xi1>
    %469 = arith.select %468, %462, %466 : vector<2x128xi1>, vector<2x128xf32>
    %470 = vector.extract_strided_slice %469 {offsets = [0, 0], sizes = [2, 32], strides = [1, 1]} : vector<2x128xf32> to vector<2x32xf32>
    %471 = vector.extract_strided_slice %469 {offsets = [0, 32], sizes = [2, 32], strides = [1, 1]} : vector<2x128xf32> to vector<2x32xf32>
    %472 = vector.extract_strided_slice %469 {offsets = [0, 64], sizes = [2, 32], strides = [1, 1]} : vector<2x128xf32> to vector<2x32xf32>
    %473 = vector.extract_strided_slice %469 {offsets = [0, 96], sizes = [2, 32], strides = [1, 1]} : vector<2x128xf32> to vector<2x32xf32>
    %474 = arith.mulf %471, %448 : vector<2x32xf32>
    %475 = arith.mulf %470, %472 : vector<2x32xf32>
    %476 = arith.addf %474, %475 : vector<2x32xf32>
    %477 = math.tanh %476 : vector<2x32xf32>
    %478 = arith.mulf %473, %477 : vector<2x32xf32>
    %479 = vector.shape_cast %282 : vector<2x32xf32> to vector<2x1x32xf32>
    %480 = vector.shape_cast %310 : vector<2x32xf32> to vector<2x1x32xf32>
    %481 = vector.shape_cast %338 : vector<2x32xf32> to vector<2x1x32xf32>
    %482 = vector.shape_cast %366 : vector<2x32xf32> to vector<2x1x32xf32>
    %483 = vector.shape_cast %394 : vector<2x32xf32> to vector<2x1x32xf32>
    %484 = vector.shape_cast %422 : vector<2x32xf32> to vector<2x1x32xf32>
    %485 = vector.shape_cast %450 : vector<2x32xf32> to vector<2x1x32xf32>
    %486 = vector.shape_cast %478 : vector<2x32xf32> to vector<2x1x32xf32>
    %487 = tpu.concatenate %479, %480, %481, %482, %483, %484, %485, %486 in 1 : vector<2x1x32xf32>, vector<2x1x32xf32>, vector<2x1x32xf32>, vector<2x1x32xf32>, vector<2x1x32xf32>, vector<2x1x32xf32>, vector<2x1x32xf32>, vector<2x1x32xf32> -> vector<2x8x32xf32>
    %c0_146 = arith.constant 0 : index
    %c8_147 = arith.constant 8 : index
    %c0_148 = arith.constant 0 : index
    %488 = vector.load %arg5[%c0_146, %c8_147, %c0_148] : memref<2x32x32xf32, #tpu.memory_space<vmem>>, vector<2x8x32xf32>
    tpu.vector_store %arg5[%c0_146, %c8_147, %c0_148], %487 {strides = array<i32>} : memref<2x32x32xf32, #tpu.memory_space<vmem>>, vector<2x8x32xf32>,
    %c0_149 = arith.constant 0 : index
    %c16 = arith.constant 16 : index
    %c0_150 = arith.constant 0 : index
    %489 = vector.load %arg6[%c0_149, %c16, %c0_150] : memref<2x32x128xf32, #tpu.memory_space<vmem>>, vector<2x1x128xf32>
    %490 = vector.shape_cast %489 : vector<2x1x128xf32> to vector<2x128xf32>
    %491 = arith.truncf %478 : vector<2x32xf32> to vector<2x32xbf16>
    %c0_151 = arith.constant 0 : index
    %c0_152 = arith.constant 0 : index
    %492 = vector.load %arg3[%c0_151, %c0_152] : memref<32x128xbf16, #tpu.memory_space<vmem>>, vector<32x128xbf16>
    %cst_153 = arith.constant dense<0.000000e+00> : vector<2x128xf32>
    %493 = tpu.matmul %491, %492, %cst_153 {dimension_numbers = #tpu.dot_dimension_numbers<[1], [0], [0], [1], [0, 0, 1, 1], [], []>} : vector<2x32xbf16>, vector<32x128xbf16>, vector<2x128xf32> -> vector<2x128xf32>
    %494 = arith.addf %490, %493 : vector<2x128xf32>
    %cst_154 = arith.constant 5.000000e-01 : f32
    %495 = vector.broadcast %cst_154 : f32 to vector<2x128xf32>
    %496 = arith.mulf %495, %494 : vector<2x128xf32>
    %497 = vector.shape_cast %18 : vector<1x128xi1> to vector<1x128xi1>
    %498 = vector.broadcast %497 : vector<1x128xi1> to vector<2x128xi1>
    %499 = arith.select %498, %494, %496 : vector<2x128xi1>, vector<2x128xf32>
    %500 = math.tanh %499 : vector<2x128xf32>
    %cst_155 = arith.constant 1.000000e+00 : f32
    %501 = vector.broadcast %cst_155 : f32 to vector<2x128xf32>
    %502 = arith.addf %500, %501 : vector<2x128xf32>
    %cst_156 = arith.constant 5.000000e-01 : f32
    %503 = vector.broadcast %cst_156 : f32 to vector<2x128xf32>
    %504 = arith.mulf %503, %502 : vector<2x128xf32>
    %505 = vector.shape_cast %18 : vector<1x128xi1> to vector<1x128xi1>
    %506 = vector.broadcast %505 : vector<1x128xi1> to vector<2x128xi1>
    %507 = arith.select %506, %500, %504 : vector<2x128xi1>, vector<2x128xf32>
    %508 = vector.extract_strided_slice %507 {offsets = [0, 0], sizes = [2, 32], strides = [1, 1]} : vector<2x128xf32> to vector<2x32xf32>
    %509 = vector.extract_strided_slice %507 {offsets = [0, 32], sizes = [2, 32], strides = [1, 1]} : vector<2x128xf32> to vector<2x32xf32>
    %510 = vector.extract_strided_slice %507 {offsets = [0, 64], sizes = [2, 32], strides = [1, 1]} : vector<2x128xf32> to vector<2x32xf32>
    %511 = vector.extract_strided_slice %507 {offsets = [0, 96], sizes = [2, 32], strides = [1, 1]} : vector<2x128xf32> to vector<2x32xf32>
    %512 = arith.mulf %509, %476 : vector<2x32xf32>
    %513 = arith.mulf %508, %510 : vector<2x32xf32>
    %514 = arith.addf %512, %513 : vector<2x32xf32>
    %515 = math.tanh %514 : vector<2x32xf32>
    %516 = arith.mulf %511, %515 : vector<2x32xf32>
    %c0_157 = arith.constant 0 : index
    %c17 = arith.constant 17 : index
    %c0_158 = arith.constant 0 : index
    %517 = vector.load %arg6[%c0_157, %c17, %c0_158] : memref<2x32x128xf32, #tpu.memory_space<vmem>>, vector<2x1x128xf32>
    %518 = vector.shape_cast %517 : vector<2x1x128xf32> to vector<2x128xf32>
    %519 = arith.truncf %516 : vector<2x32xf32> to vector<2x32xbf16>
    %c0_159 = arith.constant 0 : index
    %c0_160 = arith.constant 0 : index
    %520 = vector.load %arg3[%c0_159, %c0_160] : memref<32x128xbf16, #tpu.memory_space<vmem>>, vector<32x128xbf16>
    %cst_161 = arith.constant dense<0.000000e+00> : vector<2x128xf32>
    %521 = tpu.matmul %519, %520, %cst_161 {dimension_numbers = #tpu.dot_dimension_numbers<[1], [0], [0], [1], [0, 0, 1, 1], [], []>} : vector<2x32xbf16>, vector<32x128xbf16>, vector<2x128xf32> -> vector<2x128xf32>
    %522 = arith.addf %518, %521 : vector<2x128xf32>
    %cst_162 = arith.constant 5.000000e-01 : f32
    %523 = vector.broadcast %cst_162 : f32 to vector<2x128xf32>
    %524 = arith.mulf %523, %522 : vector<2x128xf32>
    %525 = vector.shape_cast %18 : vector<1x128xi1> to vector<1x128xi1>
    %526 = vector.broadcast %525 : vector<1x128xi1> to vector<2x128xi1>
    %527 = arith.select %526, %522, %524 : vector<2x128xi1>, vector<2x128xf32>
    %528 = math.tanh %527 : vector<2x128xf32>
    %cst_163 = arith.constant 1.000000e+00 : f32
    %529 = vector.broadcast %cst_163 : f32 to vector<2x128xf32>
    %530 = arith.addf %528, %529 : vector<2x128xf32>
    %cst_164 = arith.constant 5.000000e-01 : f32
    %531 = vector.broadcast %cst_164 : f32 to vector<2x128xf32>
    %532 = arith.mulf %531, %530 : vector<2x128xf32>
    %533 = vector.shape_cast %18 : vector<1x128xi1> to vector<1x128xi1>
    %534 = vector.broadcast %533 : vector<1x128xi1> to vector<2x128xi1>
    %535 = arith.select %534, %528, %532 : vector<2x128xi1>, vector<2x128xf32>
    %536 = vector.extract_strided_slice %535 {offsets = [0, 0], sizes = [2, 32], strides = [1, 1]} : vector<2x128xf32> to vector<2x32xf32>
    %537 = vector.extract_strided_slice %535 {offsets = [0, 32], sizes = [2, 32], strides = [1, 1]} : vector<2x128xf32> to vector<2x32xf32>
    %538 = vector.extract_strided_slice %535 {offsets = [0, 64], sizes = [2, 32], strides = [1, 1]} : vector<2x128xf32> to vector<2x32xf32>
    %539 = vector.extract_strided_slice %535 {offsets = [0, 96], sizes = [2, 32], strides = [1, 1]} : vector<2x128xf32> to vector<2x32xf32>
    %540 = arith.mulf %537, %514 : vector<2x32xf32>
    %541 = arith.mulf %536, %538 : vector<2x32xf32>
    %542 = arith.addf %540, %541 : vector<2x32xf32>
    %543 = math.tanh %542 : vector<2x32xf32>
    %544 = arith.mulf %539, %543 : vector<2x32xf32>
    %c0_165 = arith.constant 0 : index
    %c18 = arith.constant 18 : index
    %c0_166 = arith.constant 0 : index
    %545 = vector.load %arg6[%c0_165, %c18, %c0_166] : memref<2x32x128xf32, #tpu.memory_space<vmem>>, vector<2x1x128xf32>
    %546 = vector.shape_cast %545 : vector<2x1x128xf32> to vector<2x128xf32>
    %547 = arith.truncf %544 : vector<2x32xf32> to vector<2x32xbf16>
    %c0_167 = arith.constant 0 : index
    %c0_168 = arith.constant 0 : index
    %548 = vector.load %arg3[%c0_167, %c0_168] : memref<32x128xbf16, #tpu.memory_space<vmem>>, vector<32x128xbf16>
    %cst_169 = arith.constant dense<0.000000e+00> : vector<2x128xf32>
    %549 = tpu.matmul %547, %548, %cst_169 {dimension_numbers = #tpu.dot_dimension_numbers<[1], [0], [0], [1], [0, 0, 1, 1], [], []>} : vector<2x32xbf16>, vector<32x128xbf16>, vector<2x128xf32> -> vector<2x128xf32>
    %550 = arith.addf %546, %549 : vector<2x128xf32>
    %cst_170 = arith.constant 5.000000e-01 : f32
    %551 = vector.broadcast %cst_170 : f32 to vector<2x128xf32>
    %552 = arith.mulf %551, %550 : vector<2x128xf32>
    %553 = vector.shape_cast %18 : vector<1x128xi1> to vector<1x128xi1>
    %554 = vector.broadcast %553 : vector<1x128xi1> to vector<2x128xi1>
    %555 = arith.select %554, %550, %552 : vector<2x128xi1>, vector<2x128xf32>
    %556 = math.tanh %555 : vector<2x128xf32>
    %cst_171 = arith.constant 1.000000e+00 : f32
    %557 = vector.broadcast %cst_171 : f32 to vector<2x128xf32>
    %558 = arith.addf %556, %557 : vector<2x128xf32>
    %cst_172 = arith.constant 5.000000e-01 : f32
    %559 = vector.broadcast %cst_172 : f32 to vector<2x128xf32>
    %560 = arith.mulf %559, %558 : vector<2x128xf32>
    %561 = vector.shape_cast %18 : vector<1x128xi1> to vector<1x128xi1>
    %562 = vector.broadcast %561 : vector<1x128xi1> to vector<2x128xi1>
    %563 = arith.select %562, %556, %560 : vector<2x128xi1>, vector<2x128xf32>
    %564 = vector.extract_strided_slice %563 {offsets = [0, 0], sizes = [2, 32], strides = [1, 1]} : vector<2x128xf32> to vector<2x32xf32>
    %565 = vector.extract_strided_slice %563 {offsets = [0, 32], sizes = [2, 32], strides = [1, 1]} : vector<2x128xf32> to vector<2x32xf32>
    %566 = vector.extract_strided_slice %563 {offsets = [0, 64], sizes = [2, 32], strides = [1, 1]} : vector<2x128xf32> to vector<2x32xf32>
    %567 = vector.extract_strided_slice %563 {offsets = [0, 96], sizes = [2, 32], strides = [1, 1]} : vector<2x128xf32> to vector<2x32xf32>
    %568 = arith.mulf %565, %542 : vector<2x32xf32>
    %569 = arith.mulf %564, %566 : vector<2x32xf32>
    %570 = arith.addf %568, %569 : vector<2x32xf32>
    %571 = math.tanh %570 : vector<2x32xf32>
    %572 = arith.mulf %567, %571 : vector<2x32xf32>
    %c0_173 = arith.constant 0 : index
    %c19 = arith.constant 19 : index
    %c0_174 = arith.constant 0 : index
    %573 = vector.load %arg6[%c0_173, %c19, %c0_174] : memref<2x32x128xf32, #tpu.memory_space<vmem>>, vector<2x1x128xf32>
    %574 = vector.shape_cast %573 : vector<2x1x128xf32> to vector<2x128xf32>
    %575 = arith.truncf %572 : vector<2x32xf32> to vector<2x32xbf16>
    %c0_175 = arith.constant 0 : index
    %c0_176 = arith.constant 0 : index
    %576 = vector.load %arg3[%c0_175, %c0_176] : memref<32x128xbf16, #tpu.memory_space<vmem>>, vector<32x128xbf16>
    %cst_177 = arith.constant dense<0.000000e+00> : vector<2x128xf32>
    %577 = tpu.matmul %575, %576, %cst_177 {dimension_numbers = #tpu.dot_dimension_numbers<[1], [0], [0], [1], [0, 0, 1, 1], [], []>} : vector<2x32xbf16>, vector<32x128xbf16>, vector<2x128xf32> -> vector<2x128xf32>
    %578 = arith.addf %574, %577 : vector<2x128xf32>
    %cst_178 = arith.constant 5.000000e-01 : f32
    %579 = vector.broadcast %cst_178 : f32 to vector<2x128xf32>
    %580 = arith.mulf %579, %578 : vector<2x128xf32>
    %581 = vector.shape_cast %18 : vector<1x128xi1> to vector<1x128xi1>
    %582 = vector.broadcast %581 : vector<1x128xi1> to vector<2x128xi1>
    %583 = arith.select %582, %578, %580 : vector<2x128xi1>, vector<2x128xf32>
    %584 = math.tanh %583 : vector<2x128xf32>
    %cst_179 = arith.constant 1.000000e+00 : f32
    %585 = vector.broadcast %cst_179 : f32 to vector<2x128xf32>
    %586 = arith.addf %584, %585 : vector<2x128xf32>
    %cst_180 = arith.constant 5.000000e-01 : f32
    %587 = vector.broadcast %cst_180 : f32 to vector<2x128xf32>
    %588 = arith.mulf %587, %586 : vector<2x128xf32>
    %589 = vector.shape_cast %18 : vector<1x128xi1> to vector<1x128xi1>
    %590 = vector.broadcast %589 : vector<1x128xi1> to vector<2x128xi1>
    %591 = arith.select %590, %584, %588 : vector<2x128xi1>, vector<2x128xf32>
    %592 = vector.extract_strided_slice %591 {offsets = [0, 0], sizes = [2, 32], strides = [1, 1]} : vector<2x128xf32> to vector<2x32xf32>
    %593 = vector.extract_strided_slice %591 {offsets = [0, 32], sizes = [2, 32], strides = [1, 1]} : vector<2x128xf32> to vector<2x32xf32>
    %594 = vector.extract_strided_slice %591 {offsets = [0, 64], sizes = [2, 32], strides = [1, 1]} : vector<2x128xf32> to vector<2x32xf32>
    %595 = vector.extract_strided_slice %591 {offsets = [0, 96], sizes = [2, 32], strides = [1, 1]} : vector<2x128xf32> to vector<2x32xf32>
    %596 = arith.mulf %593, %570 : vector<2x32xf32>
    %597 = arith.mulf %592, %594 : vector<2x32xf32>
    %598 = arith.addf %596, %597 : vector<2x32xf32>
    %599 = math.tanh %598 : vector<2x32xf32>
    %600 = arith.mulf %595, %599 : vector<2x32xf32>
    %c0_181 = arith.constant 0 : index
    %c20 = arith.constant 20 : index
    %c0_182 = arith.constant 0 : index
    %601 = vector.load %arg6[%c0_181, %c20, %c0_182] : memref<2x32x128xf32, #tpu.memory_space<vmem>>, vector<2x1x128xf32>
    %602 = vector.shape_cast %601 : vector<2x1x128xf32> to vector<2x128xf32>
    %603 = arith.truncf %600 : vector<2x32xf32> to vector<2x32xbf16>
    %c0_183 = arith.constant 0 : index
    %c0_184 = arith.constant 0 : index
    %604 = vector.load %arg3[%c0_183, %c0_184] : memref<32x128xbf16, #tpu.memory_space<vmem>>, vector<32x128xbf16>
    %cst_185 = arith.constant dense<0.000000e+00> : vector<2x128xf32>
    %605 = tpu.matmul %603, %604, %cst_185 {dimension_numbers = #tpu.dot_dimension_numbers<[1], [0], [0], [1], [0, 0, 1, 1], [], []>} : vector<2x32xbf16>, vector<32x128xbf16>, vector<2x128xf32> -> vector<2x128xf32>
    %606 = arith.addf %602, %605 : vector<2x128xf32>
    %cst_186 = arith.constant 5.000000e-01 : f32
    %607 = vector.broadcast %cst_186 : f32 to vector<2x128xf32>
    %608 = arith.mulf %607, %606 : vector<2x128xf32>
    %609 = vector.shape_cast %18 : vector<1x128xi1> to vector<1x128xi1>
    %610 = vector.broadcast %609 : vector<1x128xi1> to vector<2x128xi1>
    %611 = arith.select %610, %606, %608 : vector<2x128xi1>, vector<2x128xf32>
    %612 = math.tanh %611 : vector<2x128xf32>
    %cst_187 = arith.constant 1.000000e+00 : f32
    %613 = vector.broadcast %cst_187 : f32 to vector<2x128xf32>
    %614 = arith.addf %612, %613 : vector<2x128xf32>
    %cst_188 = arith.constant 5.000000e-01 : f32
    %615 = vector.broadcast %cst_188 : f32 to vector<2x128xf32>
    %616 = arith.mulf %615, %614 : vector<2x128xf32>
    %617 = vector.shape_cast %18 : vector<1x128xi1> to vector<1x128xi1>
    %618 = vector.broadcast %617 : vector<1x128xi1> to vector<2x128xi1>
    %619 = arith.select %618, %612, %616 : vector<2x128xi1>, vector<2x128xf32>
    %620 = vector.extract_strided_slice %619 {offsets = [0, 0], sizes = [2, 32], strides = [1, 1]} : vector<2x128xf32> to vector<2x32xf32>
    %621 = vector.extract_strided_slice %619 {offsets = [0, 32], sizes = [2, 32], strides = [1, 1]} : vector<2x128xf32> to vector<2x32xf32>
    %622 = vector.extract_strided_slice %619 {offsets = [0, 64], sizes = [2, 32], strides = [1, 1]} : vector<2x128xf32> to vector<2x32xf32>
    %623 = vector.extract_strided_slice %619 {offsets = [0, 96], sizes = [2, 32], strides = [1, 1]} : vector<2x128xf32> to vector<2x32xf32>
    %624 = arith.mulf %621, %598 : vector<2x32xf32>
    %625 = arith.mulf %620, %622 : vector<2x32xf32>
    %626 = arith.addf %624, %625 : vector<2x32xf32>
    %627 = math.tanh %626 : vector<2x32xf32>
    %628 = arith.mulf %623, %627 : vector<2x32xf32>
    %c0_189 = arith.constant 0 : index
    %c21 = arith.constant 21 : index
    %c0_190 = arith.constant 0 : index
    %629 = vector.load %arg6[%c0_189, %c21, %c0_190] : memref<2x32x128xf32, #tpu.memory_space<vmem>>, vector<2x1x128xf32>
    %630 = vector.shape_cast %629 : vector<2x1x128xf32> to vector<2x128xf32>
    %631 = arith.truncf %628 : vector<2x32xf32> to vector<2x32xbf16>
    %c0_191 = arith.constant 0 : index
    %c0_192 = arith.constant 0 : index
    %632 = vector.load %arg3[%c0_191, %c0_192] : memref<32x128xbf16, #tpu.memory_space<vmem>>, vector<32x128xbf16>
    %cst_193 = arith.constant dense<0.000000e+00> : vector<2x128xf32>
    %633 = tpu.matmul %631, %632, %cst_193 {dimension_numbers = #tpu.dot_dimension_numbers<[1], [0], [0], [1], [0, 0, 1, 1], [], []>} : vector<2x32xbf16>, vector<32x128xbf16>, vector<2x128xf32> -> vector<2x128xf32>
    %634 = arith.addf %630, %633 : vector<2x128xf32>
    %cst_194 = arith.constant 5.000000e-01 : f32
    %635 = vector.broadcast %cst_194 : f32 to vector<2x128xf32>
    %636 = arith.mulf %635, %634 : vector<2x128xf32>
    %637 = vector.shape_cast %18 : vector<1x128xi1> to vector<1x128xi1>
    %638 = vector.broadcast %637 : vector<1x128xi1> to vector<2x128xi1>
    %639 = arith.select %638, %634, %636 : vector<2x128xi1>, vector<2x128xf32>
    %640 = math.tanh %639 : vector<2x128xf32>
    %cst_195 = arith.constant 1.000000e+00 : f32
    %641 = vector.broadcast %cst_195 : f32 to vector<2x128xf32>
    %642 = arith.addf %640, %641 : vector<2x128xf32>
    %cst_196 = arith.constant 5.000000e-01 : f32
    %643 = vector.broadcast %cst_196 : f32 to vector<2x128xf32>
    %644 = arith.mulf %643, %642 : vector<2x128xf32>
    %645 = vector.shape_cast %18 : vector<1x128xi1> to vector<1x128xi1>
    %646 = vector.broadcast %645 : vector<1x128xi1> to vector<2x128xi1>
    %647 = arith.select %646, %640, %644 : vector<2x128xi1>, vector<2x128xf32>
    %648 = vector.extract_strided_slice %647 {offsets = [0, 0], sizes = [2, 32], strides = [1, 1]} : vector<2x128xf32> to vector<2x32xf32>
    %649 = vector.extract_strided_slice %647 {offsets = [0, 32], sizes = [2, 32], strides = [1, 1]} : vector<2x128xf32> to vector<2x32xf32>
    %650 = vector.extract_strided_slice %647 {offsets = [0, 64], sizes = [2, 32], strides = [1, 1]} : vector<2x128xf32> to vector<2x32xf32>
    %651 = vector.extract_strided_slice %647 {offsets = [0, 96], sizes = [2, 32], strides = [1, 1]} : vector<2x128xf32> to vector<2x32xf32>
    %652 = arith.mulf %649, %626 : vector<2x32xf32>
    %653 = arith.mulf %648, %650 : vector<2x32xf32>
    %654 = arith.addf %652, %653 : vector<2x32xf32>
    %655 = math.tanh %654 : vector<2x32xf32>
    %656 = arith.mulf %651, %655 : vector<2x32xf32>
    %c0_197 = arith.constant 0 : index
    %c22 = arith.constant 22 : index
    %c0_198 = arith.constant 0 : index
    %657 = vector.load %arg6[%c0_197, %c22, %c0_198] : memref<2x32x128xf32, #tpu.memory_space<vmem>>, vector<2x1x128xf32>
    %658 = vector.shape_cast %657 : vector<2x1x128xf32> to vector<2x128xf32>
    %659 = arith.truncf %656 : vector<2x32xf32> to vector<2x32xbf16>
    %c0_199 = arith.constant 0 : index
    %c0_200 = arith.constant 0 : index
    %660 = vector.load %arg3[%c0_199, %c0_200] : memref<32x128xbf16, #tpu.memory_space<vmem>>, vector<32x128xbf16>
    %cst_201 = arith.constant dense<0.000000e+00> : vector<2x128xf32>
    %661 = tpu.matmul %659, %660, %cst_201 {dimension_numbers = #tpu.dot_dimension_numbers<[1], [0], [0], [1], [0, 0, 1, 1], [], []>} : vector<2x32xbf16>, vector<32x128xbf16>, vector<2x128xf32> -> vector<2x128xf32>
    %662 = arith.addf %658, %661 : vector<2x128xf32>
    %cst_202 = arith.constant 5.000000e-01 : f32
    %663 = vector.broadcast %cst_202 : f32 to vector<2x128xf32>
    %664 = arith.mulf %663, %662 : vector<2x128xf32>
    %665 = vector.shape_cast %18 : vector<1x128xi1> to vector<1x128xi1>
    %666 = vector.broadcast %665 : vector<1x128xi1> to vector<2x128xi1>
    %667 = arith.select %666, %662, %664 : vector<2x128xi1>, vector<2x128xf32>
    %668 = math.tanh %667 : vector<2x128xf32>
    %cst_203 = arith.constant 1.000000e+00 : f32
    %669 = vector.broadcast %cst_203 : f32 to vector<2x128xf32>
    %670 = arith.addf %668, %669 : vector<2x128xf32>
    %cst_204 = arith.constant 5.000000e-01 : f32
    %671 = vector.broadcast %cst_204 : f32 to vector<2x128xf32>
    %672 = arith.mulf %671, %670 : vector<2x128xf32>
    %673 = vector.shape_cast %18 : vector<1x128xi1> to vector<1x128xi1>
    %674 = vector.broadcast %673 : vector<1x128xi1> to vector<2x128xi1>
    %675 = arith.select %674, %668, %672 : vector<2x128xi1>, vector<2x128xf32>
    %676 = vector.extract_strided_slice %675 {offsets = [0, 0], sizes = [2, 32], strides = [1, 1]} : vector<2x128xf32> to vector<2x32xf32>
    %677 = vector.extract_strided_slice %675 {offsets = [0, 32], sizes = [2, 32], strides = [1, 1]} : vector<2x128xf32> to vector<2x32xf32>
    %678 = vector.extract_strided_slice %675 {offsets = [0, 64], sizes = [2, 32], strides = [1, 1]} : vector<2x128xf32> to vector<2x32xf32>
    %679 = vector.extract_strided_slice %675 {offsets = [0, 96], sizes = [2, 32], strides = [1, 1]} : vector<2x128xf32> to vector<2x32xf32>
    %680 = arith.mulf %677, %654 : vector<2x32xf32>
    %681 = arith.mulf %676, %678 : vector<2x32xf32>
    %682 = arith.addf %680, %681 : vector<2x32xf32>
    %683 = math.tanh %682 : vector<2x32xf32>
    %684 = arith.mulf %679, %683 : vector<2x32xf32>
    %c0_205 = arith.constant 0 : index
    %c23 = arith.constant 23 : index
    %c0_206 = arith.constant 0 : index
    %685 = vector.load %arg6[%c0_205, %c23, %c0_206] : memref<2x32x128xf32, #tpu.memory_space<vmem>>, vector<2x1x128xf32>
    %686 = vector.shape_cast %685 : vector<2x1x128xf32> to vector<2x128xf32>
    %687 = arith.truncf %684 : vector<2x32xf32> to vector<2x32xbf16>
    %c0_207 = arith.constant 0 : index
    %c0_208 = arith.constant 0 : index
    %688 = vector.load %arg3[%c0_207, %c0_208] : memref<32x128xbf16, #tpu.memory_space<vmem>>, vector<32x128xbf16>
    %cst_209 = arith.constant dense<0.000000e+00> : vector<2x128xf32>
    %689 = tpu.matmul %687, %688, %cst_209 {dimension_numbers = #tpu.dot_dimension_numbers<[1], [0], [0], [1], [0, 0, 1, 1], [], []>} : vector<2x32xbf16>, vector<32x128xbf16>, vector<2x128xf32> -> vector<2x128xf32>
    %690 = arith.addf %686, %689 : vector<2x128xf32>
    %cst_210 = arith.constant 5.000000e-01 : f32
    %691 = vector.broadcast %cst_210 : f32 to vector<2x128xf32>
    %692 = arith.mulf %691, %690 : vector<2x128xf32>
    %693 = vector.shape_cast %18 : vector<1x128xi1> to vector<1x128xi1>
    %694 = vector.broadcast %693 : vector<1x128xi1> to vector<2x128xi1>
    %695 = arith.select %694, %690, %692 : vector<2x128xi1>, vector<2x128xf32>
    %696 = math.tanh %695 : vector<2x128xf32>
    %cst_211 = arith.constant 1.000000e+00 : f32
    %697 = vector.broadcast %cst_211 : f32 to vector<2x128xf32>
    %698 = arith.addf %696, %697 : vector<2x128xf32>
    %cst_212 = arith.constant 5.000000e-01 : f32
    %699 = vector.broadcast %cst_212 : f32 to vector<2x128xf32>
    %700 = arith.mulf %699, %698 : vector<2x128xf32>
    %701 = vector.shape_cast %18 : vector<1x128xi1> to vector<1x128xi1>
    %702 = vector.broadcast %701 : vector<1x128xi1> to vector<2x128xi1>
    %703 = arith.select %702, %696, %700 : vector<2x128xi1>, vector<2x128xf32>
    %704 = vector.extract_strided_slice %703 {offsets = [0, 0], sizes = [2, 32], strides = [1, 1]} : vector<2x128xf32> to vector<2x32xf32>
    %705 = vector.extract_strided_slice %703 {offsets = [0, 32], sizes = [2, 32], strides = [1, 1]} : vector<2x128xf32> to vector<2x32xf32>
    %706 = vector.extract_strided_slice %703 {offsets = [0, 64], sizes = [2, 32], strides = [1, 1]} : vector<2x128xf32> to vector<2x32xf32>
    %707 = vector.extract_strided_slice %703 {offsets = [0, 96], sizes = [2, 32], strides = [1, 1]} : vector<2x128xf32> to vector<2x32xf32>
    %708 = arith.mulf %705, %682 : vector<2x32xf32>
    %709 = arith.mulf %704, %706 : vector<2x32xf32>
    %710 = arith.addf %708, %709 : vector<2x32xf32>
    %711 = math.tanh %710 : vector<2x32xf32>
    %712 = arith.mulf %707, %711 : vector<2x32xf32>
    %713 = vector.shape_cast %516 : vector<2x32xf32> to vector<2x1x32xf32>
    %714 = vector.shape_cast %544 : vector<2x32xf32> to vector<2x1x32xf32>
    %715 = vector.shape_cast %572 : vector<2x32xf32> to vector<2x1x32xf32>
    %716 = vector.shape_cast %600 : vector<2x32xf32> to vector<2x1x32xf32>
    %717 = vector.shape_cast %628 : vector<2x32xf32> to vector<2x1x32xf32>
    %718 = vector.shape_cast %656 : vector<2x32xf32> to vector<2x1x32xf32>
    %719 = vector.shape_cast %684 : vector<2x32xf32> to vector<2x1x32xf32>
    %720 = vector.shape_cast %712 : vector<2x32xf32> to vector<2x1x32xf32>
    %721 = tpu.concatenate %713, %714, %715, %716, %717, %718, %719, %720 in 1 : vector<2x1x32xf32>, vector<2x1x32xf32>, vector<2x1x32xf32>, vector<2x1x32xf32>, vector<2x1x32xf32>, vector<2x1x32xf32>, vector<2x1x32xf32>, vector<2x1x32xf32> -> vector<2x8x32xf32>
    %c0_213 = arith.constant 0 : index
    %c16_214 = arith.constant 16 : index
    %c0_215 = arith.constant 0 : index
    %722 = vector.load %arg5[%c0_213, %c16_214, %c0_215] : memref<2x32x32xf32, #tpu.memory_space<vmem>>, vector<2x8x32xf32>
    tpu.vector_store %arg5[%c0_213, %c16_214, %c0_215], %721 {strides = array<i32>} : memref<2x32x32xf32, #tpu.memory_space<vmem>>, vector<2x8x32xf32>,
    %c0_216 = arith.constant 0 : index
    %c24 = arith.constant 24 : index
    %c0_217 = arith.constant 0 : index
    %723 = vector.load %arg6[%c0_216, %c24, %c0_217] : memref<2x32x128xf32, #tpu.memory_space<vmem>>, vector<2x1x128xf32>
    %724 = vector.shape_cast %723 : vector<2x1x128xf32> to vector<2x128xf32>
    %725 = arith.truncf %712 : vector<2x32xf32> to vector<2x32xbf16>
    %c0_218 = arith.constant 0 : index
    %c0_219 = arith.constant 0 : index
    %726 = vector.load %arg3[%c0_218, %c0_219] : memref<32x128xbf16, #tpu.memory_space<vmem>>, vector<32x128xbf16>
    %cst_220 = arith.constant dense<0.000000e+00> : vector<2x128xf32>
    %727 = tpu.matmul %725, %726, %cst_220 {dimension_numbers = #tpu.dot_dimension_numbers<[1], [0], [0], [1], [0, 0, 1, 1], [], []>} : vector<2x32xbf16>, vector<32x128xbf16>, vector<2x128xf32> -> vector<2x128xf32>
    %728 = arith.addf %724, %727 : vector<2x128xf32>
    %cst_221 = arith.constant 5.000000e-01 : f32
    %729 = vector.broadcast %cst_221 : f32 to vector<2x128xf32>
    %730 = arith.mulf %729, %728 : vector<2x128xf32>
    %731 = vector.shape_cast %18 : vector<1x128xi1> to vector<1x128xi1>
    %732 = vector.broadcast %731 : vector<1x128xi1> to vector<2x128xi1>
    %733 = arith.select %732, %728, %730 : vector<2x128xi1>, vector<2x128xf32>
    %734 = math.tanh %733 : vector<2x128xf32>
    %cst_222 = arith.constant 1.000000e+00 : f32
    %735 = vector.broadcast %cst_222 : f32 to vector<2x128xf32>
    %736 = arith.addf %734, %735 : vector<2x128xf32>
    %cst_223 = arith.constant 5.000000e-01 : f32
    %737 = vector.broadcast %cst_223 : f32 to vector<2x128xf32>
    %738 = arith.mulf %737, %736 : vector<2x128xf32>
    %739 = vector.shape_cast %18 : vector<1x128xi1> to vector<1x128xi1>
    %740 = vector.broadcast %739 : vector<1x128xi1> to vector<2x128xi1>
    %741 = arith.select %740, %734, %738 : vector<2x128xi1>, vector<2x128xf32>
    %742 = vector.extract_strided_slice %741 {offsets = [0, 0], sizes = [2, 32], strides = [1, 1]} : vector<2x128xf32> to vector<2x32xf32>
    %743 = vector.extract_strided_slice %741 {offsets = [0, 32], sizes = [2, 32], strides = [1, 1]} : vector<2x128xf32> to vector<2x32xf32>
    %744 = vector.extract_strided_slice %741 {offsets = [0, 64], sizes = [2, 32], strides = [1, 1]} : vector<2x128xf32> to vector<2x32xf32>
    %745 = vector.extract_strided_slice %741 {offsets = [0, 96], sizes = [2, 32], strides = [1, 1]} : vector<2x128xf32> to vector<2x32xf32>
    %746 = arith.mulf %743, %710 : vector<2x32xf32>
    %747 = arith.mulf %742, %744 : vector<2x32xf32>
    %748 = arith.addf %746, %747 : vector<2x32xf32>
    %749 = math.tanh %748 : vector<2x32xf32>
    %750 = arith.mulf %745, %749 : vector<2x32xf32>
    %c0_224 = arith.constant 0 : index
    %c25 = arith.constant 25 : index
    %c0_225 = arith.constant 0 : index
    %751 = vector.load %arg6[%c0_224, %c25, %c0_225] : memref<2x32x128xf32, #tpu.memory_space<vmem>>, vector<2x1x128xf32>
    %752 = vector.shape_cast %751 : vector<2x1x128xf32> to vector<2x128xf32>
    %753 = arith.truncf %750 : vector<2x32xf32> to vector<2x32xbf16>
    %c0_226 = arith.constant 0 : index
    %c0_227 = arith.constant 0 : index
    %754 = vector.load %arg3[%c0_226, %c0_227] : memref<32x128xbf16, #tpu.memory_space<vmem>>, vector<32x128xbf16>
    %cst_228 = arith.constant dense<0.000000e+00> : vector<2x128xf32>
    %755 = tpu.matmul %753, %754, %cst_228 {dimension_numbers = #tpu.dot_dimension_numbers<[1], [0], [0], [1], [0, 0, 1, 1], [], []>} : vector<2x32xbf16>, vector<32x128xbf16>, vector<2x128xf32> -> vector<2x128xf32>
    %756 = arith.addf %752, %755 : vector<2x128xf32>
    %cst_229 = arith.constant 5.000000e-01 : f32
    %757 = vector.broadcast %cst_229 : f32 to vector<2x128xf32>
    %758 = arith.mulf %757, %756 : vector<2x128xf32>
    %759 = vector.shape_cast %18 : vector<1x128xi1> to vector<1x128xi1>
    %760 = vector.broadcast %759 : vector<1x128xi1> to vector<2x128xi1>
    %761 = arith.select %760, %756, %758 : vector<2x128xi1>, vector<2x128xf32>
    %762 = math.tanh %761 : vector<2x128xf32>
    %cst_230 = arith.constant 1.000000e+00 : f32
    %763 = vector.broadcast %cst_230 : f32 to vector<2x128xf32>
    %764 = arith.addf %762, %763 : vector<2x128xf32>
    %cst_231 = arith.constant 5.000000e-01 : f32
    %765 = vector.broadcast %cst_231 : f32 to vector<2x128xf32>
    %766 = arith.mulf %765, %764 : vector<2x128xf32>
    %767 = vector.shape_cast %18 : vector<1x128xi1> to vector<1x128xi1>
    %768 = vector.broadcast %767 : vector<1x128xi1> to vector<2x128xi1>
    %769 = arith.select %768, %762, %766 : vector<2x128xi1>, vector<2x128xf32>
    %770 = vector.extract_strided_slice %769 {offsets = [0, 0], sizes = [2, 32], strides = [1, 1]} : vector<2x128xf32> to vector<2x32xf32>
    %771 = vector.extract_strided_slice %769 {offsets = [0, 32], sizes = [2, 32], strides = [1, 1]} : vector<2x128xf32> to vector<2x32xf32>
    %772 = vector.extract_strided_slice %769 {offsets = [0, 64], sizes = [2, 32], strides = [1, 1]} : vector<2x128xf32> to vector<2x32xf32>
    %773 = vector.extract_strided_slice %769 {offsets = [0, 96], sizes = [2, 32], strides = [1, 1]} : vector<2x128xf32> to vector<2x32xf32>
    %774 = arith.mulf %771, %748 : vector<2x32xf32>
    %775 = arith.mulf %770, %772 : vector<2x32xf32>
    %776 = arith.addf %774, %775 : vector<2x32xf32>
    %777 = math.tanh %776 : vector<2x32xf32>
    %778 = arith.mulf %773, %777 : vector<2x32xf32>
    %c0_232 = arith.constant 0 : index
    %c26 = arith.constant 26 : index
    %c0_233 = arith.constant 0 : index
    %779 = vector.load %arg6[%c0_232, %c26, %c0_233] : memref<2x32x128xf32, #tpu.memory_space<vmem>>, vector<2x1x128xf32>
    %780 = vector.shape_cast %779 : vector<2x1x128xf32> to vector<2x128xf32>
    %781 = arith.truncf %778 : vector<2x32xf32> to vector<2x32xbf16>
    %c0_234 = arith.constant 0 : index
    %c0_235 = arith.constant 0 : index
    %782 = vector.load %arg3[%c0_234, %c0_235] : memref<32x128xbf16, #tpu.memory_space<vmem>>, vector<32x128xbf16>
    %cst_236 = arith.constant dense<0.000000e+00> : vector<2x128xf32>
    %783 = tpu.matmul %781, %782, %cst_236 {dimension_numbers = #tpu.dot_dimension_numbers<[1], [0], [0], [1], [0, 0, 1, 1], [], []>} : vector<2x32xbf16>, vector<32x128xbf16>, vector<2x128xf32> -> vector<2x128xf32>
    %784 = arith.addf %780, %783 : vector<2x128xf32>
    %cst_237 = arith.constant 5.000000e-01 : f32
    %785 = vector.broadcast %cst_237 : f32 to vector<2x128xf32>
    %786 = arith.mulf %785, %784 : vector<2x128xf32>
    %787 = vector.shape_cast %18 : vector<1x128xi1> to vector<1x128xi1>
    %788 = vector.broadcast %787 : vector<1x128xi1> to vector<2x128xi1>
    %789 = arith.select %788, %784, %786 : vector<2x128xi1>, vector<2x128xf32>
    %790 = math.tanh %789 : vector<2x128xf32>
    %cst_238 = arith.constant 1.000000e+00 : f32
    %791 = vector.broadcast %cst_238 : f32 to vector<2x128xf32>
    %792 = arith.addf %790, %791 : vector<2x128xf32>
    %cst_239 = arith.constant 5.000000e-01 : f32
    %793 = vector.broadcast %cst_239 : f32 to vector<2x128xf32>
    %794 = arith.mulf %793, %792 : vector<2x128xf32>
    %795 = vector.shape_cast %18 : vector<1x128xi1> to vector<1x128xi1>
    %796 = vector.broadcast %795 : vector<1x128xi1> to vector<2x128xi1>
    %797 = arith.select %796, %790, %794 : vector<2x128xi1>, vector<2x128xf32>
    %798 = vector.extract_strided_slice %797 {offsets = [0, 0], sizes = [2, 32], strides = [1, 1]} : vector<2x128xf32> to vector<2x32xf32>
    %799 = vector.extract_strided_slice %797 {offsets = [0, 32], sizes = [2, 32], strides = [1, 1]} : vector<2x128xf32> to vector<2x32xf32>
    %800 = vector.extract_strided_slice %797 {offsets = [0, 64], sizes = [2, 32], strides = [1, 1]} : vector<2x128xf32> to vector<2x32xf32>
    %801 = vector.extract_strided_slice %797 {offsets = [0, 96], sizes = [2, 32], strides = [1, 1]} : vector<2x128xf32> to vector<2x32xf32>
    %802 = arith.mulf %799, %776 : vector<2x32xf32>
    %803 = arith.mulf %798, %800 : vector<2x32xf32>
    %804 = arith.addf %802, %803 : vector<2x32xf32>
    %805 = math.tanh %804 : vector<2x32xf32>
    %806 = arith.mulf %801, %805 : vector<2x32xf32>
    %c0_240 = arith.constant 0 : index
    %c27 = arith.constant 27 : index
    %c0_241 = arith.constant 0 : index
    %807 = vector.load %arg6[%c0_240, %c27, %c0_241] : memref<2x32x128xf32, #tpu.memory_space<vmem>>, vector<2x1x128xf32>
    %808 = vector.shape_cast %807 : vector<2x1x128xf32> to vector<2x128xf32>
    %809 = arith.truncf %806 : vector<2x32xf32> to vector<2x32xbf16>
    %c0_242 = arith.constant 0 : index
    %c0_243 = arith.constant 0 : index
    %810 = vector.load %arg3[%c0_242, %c0_243] : memref<32x128xbf16, #tpu.memory_space<vmem>>, vector<32x128xbf16>
    %cst_244 = arith.constant dense<0.000000e+00> : vector<2x128xf32>
    %811 = tpu.matmul %809, %810, %cst_244 {dimension_numbers = #tpu.dot_dimension_numbers<[1], [0], [0], [1], [0, 0, 1, 1], [], []>} : vector<2x32xbf16>, vector<32x128xbf16>, vector<2x128xf32> -> vector<2x128xf32>
    %812 = arith.addf %808, %811 : vector<2x128xf32>
    %cst_245 = arith.constant 5.000000e-01 : f32
    %813 = vector.broadcast %cst_245 : f32 to vector<2x128xf32>
    %814 = arith.mulf %813, %812 : vector<2x128xf32>
    %815 = vector.shape_cast %18 : vector<1x128xi1> to vector<1x128xi1>
    %816 = vector.broadcast %815 : vector<1x128xi1> to vector<2x128xi1>
    %817 = arith.select %816, %812, %814 : vector<2x128xi1>, vector<2x128xf32>
    %818 = math.tanh %817 : vector<2x128xf32>
    %cst_246 = arith.constant 1.000000e+00 : f32
    %819 = vector.broadcast %cst_246 : f32 to vector<2x128xf32>
    %820 = arith.addf %818, %819 : vector<2x128xf32>
    %cst_247 = arith.constant 5.000000e-01 : f32
    %821 = vector.broadcast %cst_247 : f32 to vector<2x128xf32>
    %822 = arith.mulf %821, %820 : vector<2x128xf32>
    %823 = vector.shape_cast %18 : vector<1x128xi1> to vector<1x128xi1>
    %824 = vector.broadcast %823 : vector<1x128xi1> to vector<2x128xi1>
    %825 = arith.select %824, %818, %822 : vector<2x128xi1>, vector<2x128xf32>
    %826 = vector.extract_strided_slice %825 {offsets = [0, 0], sizes = [2, 32], strides = [1, 1]} : vector<2x128xf32> to vector<2x32xf32>
    %827 = vector.extract_strided_slice %825 {offsets = [0, 32], sizes = [2, 32], strides = [1, 1]} : vector<2x128xf32> to vector<2x32xf32>
    %828 = vector.extract_strided_slice %825 {offsets = [0, 64], sizes = [2, 32], strides = [1, 1]} : vector<2x128xf32> to vector<2x32xf32>
    %829 = vector.extract_strided_slice %825 {offsets = [0, 96], sizes = [2, 32], strides = [1, 1]} : vector<2x128xf32> to vector<2x32xf32>
    %830 = arith.mulf %827, %804 : vector<2x32xf32>
    %831 = arith.mulf %826, %828 : vector<2x32xf32>
    %832 = arith.addf %830, %831 : vector<2x32xf32>
    %833 = math.tanh %832 : vector<2x32xf32>
    %834 = arith.mulf %829, %833 : vector<2x32xf32>
    %c0_248 = arith.constant 0 : index
    %c28 = arith.constant 28 : index
    %c0_249 = arith.constant 0 : index
    %835 = vector.load %arg6[%c0_248, %c28, %c0_249] : memref<2x32x128xf32, #tpu.memory_space<vmem>>, vector<2x1x128xf32>
    %836 = vector.shape_cast %835 : vector<2x1x128xf32> to vector<2x128xf32>
    %837 = arith.truncf %834 : vector<2x32xf32> to vector<2x32xbf16>
    %c0_250 = arith.constant 0 : index
    %c0_251 = arith.constant 0 : index
    %838 = vector.load %arg3[%c0_250, %c0_251] : memref<32x128xbf16, #tpu.memory_space<vmem>>, vector<32x128xbf16>
    %cst_252 = arith.constant dense<0.000000e+00> : vector<2x128xf32>
    %839 = tpu.matmul %837, %838, %cst_252 {dimension_numbers = #tpu.dot_dimension_numbers<[1], [0], [0], [1], [0, 0, 1, 1], [], []>} : vector<2x32xbf16>, vector<32x128xbf16>, vector<2x128xf32> -> vector<2x128xf32>
    %840 = arith.addf %836, %839 : vector<2x128xf32>
    %cst_253 = arith.constant 5.000000e-01 : f32
    %841 = vector.broadcast %cst_253 : f32 to vector<2x128xf32>
    %842 = arith.mulf %841, %840 : vector<2x128xf32>
    %843 = vector.shape_cast %18 : vector<1x128xi1> to vector<1x128xi1>
    %844 = vector.broadcast %843 : vector<1x128xi1> to vector<2x128xi1>
    %845 = arith.select %844, %840, %842 : vector<2x128xi1>, vector<2x128xf32>
    %846 = math.tanh %845 : vector<2x128xf32>
    %cst_254 = arith.constant 1.000000e+00 : f32
    %847 = vector.broadcast %cst_254 : f32 to vector<2x128xf32>
    %848 = arith.addf %846, %847 : vector<2x128xf32>
    %cst_255 = arith.constant 5.000000e-01 : f32
    %849 = vector.broadcast %cst_255 : f32 to vector<2x128xf32>
    %850 = arith.mulf %849, %848 : vector<2x128xf32>
    %851 = vector.shape_cast %18 : vector<1x128xi1> to vector<1x128xi1>
    %852 = vector.broadcast %851 : vector<1x128xi1> to vector<2x128xi1>
    %853 = arith.select %852, %846, %850 : vector<2x128xi1>, vector<2x128xf32>
    %854 = vector.extract_strided_slice %853 {offsets = [0, 0], sizes = [2, 32], strides = [1, 1]} : vector<2x128xf32> to vector<2x32xf32>
    %855 = vector.extract_strided_slice %853 {offsets = [0, 32], sizes = [2, 32], strides = [1, 1]} : vector<2x128xf32> to vector<2x32xf32>
    %856 = vector.extract_strided_slice %853 {offsets = [0, 64], sizes = [2, 32], strides = [1, 1]} : vector<2x128xf32> to vector<2x32xf32>
    %857 = vector.extract_strided_slice %853 {offsets = [0, 96], sizes = [2, 32], strides = [1, 1]} : vector<2x128xf32> to vector<2x32xf32>
    %858 = arith.mulf %855, %832 : vector<2x32xf32>
    %859 = arith.mulf %854, %856 : vector<2x32xf32>
    %860 = arith.addf %858, %859 : vector<2x32xf32>
    %861 = math.tanh %860 : vector<2x32xf32>
    %862 = arith.mulf %857, %861 : vector<2x32xf32>
    %c0_256 = arith.constant 0 : index
    %c29 = arith.constant 29 : index
    %c0_257 = arith.constant 0 : index
    %863 = vector.load %arg6[%c0_256, %c29, %c0_257] : memref<2x32x128xf32, #tpu.memory_space<vmem>>, vector<2x1x128xf32>
    %864 = vector.shape_cast %863 : vector<2x1x128xf32> to vector<2x128xf32>
    %865 = arith.truncf %862 : vector<2x32xf32> to vector<2x32xbf16>
    %c0_258 = arith.constant 0 : index
    %c0_259 = arith.constant 0 : index
    %866 = vector.load %arg3[%c0_258, %c0_259] : memref<32x128xbf16, #tpu.memory_space<vmem>>, vector<32x128xbf16>
    %cst_260 = arith.constant dense<0.000000e+00> : vector<2x128xf32>
    %867 = tpu.matmul %865, %866, %cst_260 {dimension_numbers = #tpu.dot_dimension_numbers<[1], [0], [0], [1], [0, 0, 1, 1], [], []>} : vector<2x32xbf16>, vector<32x128xbf16>, vector<2x128xf32> -> vector<2x128xf32>
    %868 = arith.addf %864, %867 : vector<2x128xf32>
    %cst_261 = arith.constant 5.000000e-01 : f32
    %869 = vector.broadcast %cst_261 : f32 to vector<2x128xf32>
    %870 = arith.mulf %869, %868 : vector<2x128xf32>
    %871 = vector.shape_cast %18 : vector<1x128xi1> to vector<1x128xi1>
    %872 = vector.broadcast %871 : vector<1x128xi1> to vector<2x128xi1>
    %873 = arith.select %872, %868, %870 : vector<2x128xi1>, vector<2x128xf32>
    %874 = math.tanh %873 : vector<2x128xf32>
    %cst_262 = arith.constant 1.000000e+00 : f32
    %875 = vector.broadcast %cst_262 : f32 to vector<2x128xf32>
    %876 = arith.addf %874, %875 : vector<2x128xf32>
    %cst_263 = arith.constant 5.000000e-01 : f32
    %877 = vector.broadcast %cst_263 : f32 to vector<2x128xf32>
    %878 = arith.mulf %877, %876 : vector<2x128xf32>
    %879 = vector.shape_cast %18 : vector<1x128xi1> to vector<1x128xi1>
    %880 = vector.broadcast %879 : vector<1x128xi1> to vector<2x128xi1>
    %881 = arith.select %880, %874, %878 : vector<2x128xi1>, vector<2x128xf32>
    %882 = vector.extract_strided_slice %881 {offsets = [0, 0], sizes = [2, 32], strides = [1, 1]} : vector<2x128xf32> to vector<2x32xf32>
    %883 = vector.extract_strided_slice %881 {offsets = [0, 32], sizes = [2, 32], strides = [1, 1]} : vector<2x128xf32> to vector<2x32xf32>
    %884 = vector.extract_strided_slice %881 {offsets = [0, 64], sizes = [2, 32], strides = [1, 1]} : vector<2x128xf32> to vector<2x32xf32>
    %885 = vector.extract_strided_slice %881 {offsets = [0, 96], sizes = [2, 32], strides = [1, 1]} : vector<2x128xf32> to vector<2x32xf32>
    %886 = arith.mulf %883, %860 : vector<2x32xf32>
    %887 = arith.mulf %882, %884 : vector<2x32xf32>
    %888 = arith.addf %886, %887 : vector<2x32xf32>
    %889 = math.tanh %888 : vector<2x32xf32>
    %890 = arith.mulf %885, %889 : vector<2x32xf32>
    %c0_264 = arith.constant 0 : index
    %c30 = arith.constant 30 : index
    %c0_265 = arith.constant 0 : index
    %891 = vector.load %arg6[%c0_264, %c30, %c0_265] : memref<2x32x128xf32, #tpu.memory_space<vmem>>, vector<2x1x128xf32>
    %892 = vector.shape_cast %891 : vector<2x1x128xf32> to vector<2x128xf32>
    %893 = arith.truncf %890 : vector<2x32xf32> to vector<2x32xbf16>
    %c0_266 = arith.constant 0 : index
    %c0_267 = arith.constant 0 : index
    %894 = vector.load %arg3[%c0_266, %c0_267] : memref<32x128xbf16, #tpu.memory_space<vmem>>, vector<32x128xbf16>
    %cst_268 = arith.constant dense<0.000000e+00> : vector<2x128xf32>
    %895 = tpu.matmul %893, %894, %cst_268 {dimension_numbers = #tpu.dot_dimension_numbers<[1], [0], [0], [1], [0, 0, 1, 1], [], []>} : vector<2x32xbf16>, vector<32x128xbf16>, vector<2x128xf32> -> vector<2x128xf32>
    %896 = arith.addf %892, %895 : vector<2x128xf32>
    %cst_269 = arith.constant 5.000000e-01 : f32
    %897 = vector.broadcast %cst_269 : f32 to vector<2x128xf32>
    %898 = arith.mulf %897, %896 : vector<2x128xf32>
    %899 = vector.shape_cast %18 : vector<1x128xi1> to vector<1x128xi1>
    %900 = vector.broadcast %899 : vector<1x128xi1> to vector<2x128xi1>
    %901 = arith.select %900, %896, %898 : vector<2x128xi1>, vector<2x128xf32>
    %902 = math.tanh %901 : vector<2x128xf32>
    %cst_270 = arith.constant 1.000000e+00 : f32
    %903 = vector.broadcast %cst_270 : f32 to vector<2x128xf32>
    %904 = arith.addf %902, %903 : vector<2x128xf32>
    %cst_271 = arith.constant 5.000000e-01 : f32
    %905 = vector.broadcast %cst_271 : f32 to vector<2x128xf32>
    %906 = arith.mulf %905, %904 : vector<2x128xf32>
    %907 = vector.shape_cast %18 : vector<1x128xi1> to vector<1x128xi1>
    %908 = vector.broadcast %907 : vector<1x128xi1> to vector<2x128xi1>
    %909 = arith.select %908, %902, %906 : vector<2x128xi1>, vector<2x128xf32>
    %910 = vector.extract_strided_slice %909 {offsets = [0, 0], sizes = [2, 32], strides = [1, 1]} : vector<2x128xf32> to vector<2x32xf32>
    %911 = vector.extract_strided_slice %909 {offsets = [0, 32], sizes = [2, 32], strides = [1, 1]} : vector<2x128xf32> to vector<2x32xf32>
    %912 = vector.extract_strided_slice %909 {offsets = [0, 64], sizes = [2, 32], strides = [1, 1]} : vector<2x128xf32> to vector<2x32xf32>
    %913 = vector.extract_strided_slice %909 {offsets = [0, 96], sizes = [2, 32], strides = [1, 1]} : vector<2x128xf32> to vector<2x32xf32>
    %914 = arith.mulf %911, %888 : vector<2x32xf32>
    %915 = arith.mulf %910, %912 : vector<2x32xf32>
    %916 = arith.addf %914, %915 : vector<2x32xf32>
    %917 = math.tanh %916 : vector<2x32xf32>
    %918 = arith.mulf %913, %917 : vector<2x32xf32>
    %c0_272 = arith.constant 0 : index
    %c31 = arith.constant 31 : index
    %c0_273 = arith.constant 0 : index
    %919 = vector.load %arg6[%c0_272, %c31, %c0_273] : memref<2x32x128xf32, #tpu.memory_space<vmem>>, vector<2x1x128xf32>
    %920 = vector.shape_cast %919 : vector<2x1x128xf32> to vector<2x128xf32>
    %921 = arith.truncf %918 : vector<2x32xf32> to vector<2x32xbf16>
    %c0_274 = arith.constant 0 : index
    %c0_275 = arith.constant 0 : index
    %922 = vector.load %arg3[%c0_274, %c0_275] : memref<32x128xbf16, #tpu.memory_space<vmem>>, vector<32x128xbf16>
    %cst_276 = arith.constant dense<0.000000e+00> : vector<2x128xf32>
    %923 = tpu.matmul %921, %922, %cst_276 {dimension_numbers = #tpu.dot_dimension_numbers<[1], [0], [0], [1], [0, 0, 1, 1], [], []>} : vector<2x32xbf16>, vector<32x128xbf16>, vector<2x128xf32> -> vector<2x128xf32>
    %924 = arith.addf %920, %923 : vector<2x128xf32>
    %cst_277 = arith.constant 5.000000e-01 : f32
    %925 = vector.broadcast %cst_277 : f32 to vector<2x128xf32>
    %926 = arith.mulf %925, %924 : vector<2x128xf32>
    %927 = vector.shape_cast %18 : vector<1x128xi1> to vector<1x128xi1>
    %928 = vector.broadcast %927 : vector<1x128xi1> to vector<2x128xi1>
    %929 = arith.select %928, %924, %926 : vector<2x128xi1>, vector<2x128xf32>
    %930 = math.tanh %929 : vector<2x128xf32>
    %cst_278 = arith.constant 1.000000e+00 : f32
    %931 = vector.broadcast %cst_278 : f32 to vector<2x128xf32>
    %932 = arith.addf %930, %931 : vector<2x128xf32>
    %cst_279 = arith.constant 5.000000e-01 : f32
    %933 = vector.broadcast %cst_279 : f32 to vector<2x128xf32>
    %934 = arith.mulf %933, %932 : vector<2x128xf32>
    %935 = vector.shape_cast %18 : vector<1x128xi1> to vector<1x128xi1>
    %936 = vector.broadcast %935 : vector<1x128xi1> to vector<2x128xi1>
    %937 = arith.select %936, %930, %934 : vector<2x128xi1>, vector<2x128xf32>
    %938 = vector.extract_strided_slice %937 {offsets = [0, 0], sizes = [2, 32], strides = [1, 1]} : vector<2x128xf32> to vector<2x32xf32>
    %939 = vector.extract_strided_slice %937 {offsets = [0, 32], sizes = [2, 32], strides = [1, 1]} : vector<2x128xf32> to vector<2x32xf32>
    %940 = vector.extract_strided_slice %937 {offsets = [0, 64], sizes = [2, 32], strides = [1, 1]} : vector<2x128xf32> to vector<2x32xf32>
    %941 = vector.extract_strided_slice %937 {offsets = [0, 96], sizes = [2, 32], strides = [1, 1]} : vector<2x128xf32> to vector<2x32xf32>
    %942 = arith.mulf %939, %916 : vector<2x32xf32>
    %943 = arith.mulf %938, %940 : vector<2x32xf32>
    %944 = arith.addf %942, %943 : vector<2x32xf32>
    %945 = math.tanh %944 : vector<2x32xf32>
    %946 = arith.mulf %941, %945 : vector<2x32xf32>
    %947 = vector.shape_cast %750 : vector<2x32xf32> to vector<2x1x32xf32>
    %948 = vector.shape_cast %778 : vector<2x32xf32> to vector<2x1x32xf32>
    %949 = vector.shape_cast %806 : vector<2x32xf32> to vector<2x1x32xf32>
    %950 = vector.shape_cast %834 : vector<2x32xf32> to vector<2x1x32xf32>
    %951 = vector.shape_cast %862 : vector<2x32xf32> to vector<2x1x32xf32>
    %952 = vector.shape_cast %890 : vector<2x32xf32> to vector<2x1x32xf32>
    %953 = vector.shape_cast %918 : vector<2x32xf32> to vector<2x1x32xf32>
    %954 = vector.shape_cast %946 : vector<2x32xf32> to vector<2x1x32xf32>
    %955 = tpu.concatenate %947, %948, %949, %950, %951, %952, %953, %954 in 1 : vector<2x1x32xf32>, vector<2x1x32xf32>, vector<2x1x32xf32>, vector<2x1x32xf32>, vector<2x1x32xf32>, vector<2x1x32xf32>, vector<2x1x32xf32>, vector<2x1x32xf32> -> vector<2x8x32xf32>
    %c0_280 = arith.constant 0 : index
    %c24_281 = arith.constant 24 : index
    %c0_282 = arith.constant 0 : index
    %956 = vector.load %arg5[%c0_280, %c24_281, %c0_282] : memref<2x32x32xf32, #tpu.memory_space<vmem>>, vector<2x8x32xf32>
    tpu.vector_store %arg5[%c0_280, %c24_281, %c0_282], %955 {strides = array<i32>} : memref<2x32x32xf32, #tpu.memory_space<vmem>>, vector<2x8x32xf32>,
    %c0_283 = arith.constant 0 : index
    %c0_284 = arith.constant 0 : index
    %957 = vector.load %arg7[%c0_283, %c0_284] : memref<2x32xf32, #tpu.memory_space<vmem>>, vector<2x32xf32>
    tpu.vector_store %arg7[%c0_283, %c0_284], %946 {strides = array<i32>} : memref<2x32xf32, #tpu.memory_space<vmem>>, vector<2x32xf32>,
    %c0_285 = arith.constant 0 : index
    %c0_286 = arith.constant 0 : index
    %958 = vector.load %arg8[%c0_285, %c0_286] : memref<2x32xf32, #tpu.memory_space<vmem>>, vector<2x32xf32>
    tpu.vector_store %arg8[%c0_285, %c0_286], %944 {strides = array<i32>} : memref<2x32xf32, #tpu.memory_space<vmem>>, vector<2x32xf32>,
    return
  }
  func.func @transform_0(%arg0: i32) -> (i32, i32, i32) {
    %c0_i32 = arith.constant 0 : i32
    %c0_i32_0 = arith.constant 0 : i32
    %c0_i32_1 = arith.constant 0 : i32
    return %c0_i32, %arg0, %c0_i32_0 : i32, i32, i32
  }
  func.func @transform_1(%arg0: i32) -> (i32, i32) {
    %c0_i32 = arith.constant 0 : i32
    %c0_i32_0 = arith.constant 0 : i32
    %c0_i32_1 = arith.constant 0 : i32
    return %c0_i32, %c0_i32_0 : i32, i32
  }
  func.func @transform_2(%arg0: i32) -> (i32, i32) {
    %c0_i32 = arith.constant 0 : i32
    %c0_i32_0 = arith.constant 0 : i32
    %c0_i32_1 = arith.constant 0 : i32
    return %c0_i32, %c0_i32_0 : i32, i32
  }
  func.func @transform_3(%arg0: i32) -> (i32, i32) {
    %c0_i32 = arith.constant 0 : i32
    %c0_i32_0 = arith.constant 0 : i32
    %c0_i32_1 = arith.constant 0 : i32
    return %c0_i32, %c0_i32_0 : i32, i32
  }
  func.func @transform_4(%arg0: i32) -> (i32, i32, i32) {
    %c0_i32 = arith.constant 0 : i32
    %c0_i32_0 = arith.constant 0 : i32
    %c0_i32_1 = arith.constant 0 : i32
    return %c0_i32, %arg0, %c0_i32_0 : i32, i32, i32
  }
}

</mosaic_0001>

<llo_original>
// kernel: tpu_custom_call.1
$region0: #{tpu_custom_call.1}
  #allocation0 [shape = 'u32[]', space=smem, size = 0x4, offset = 0x4, fixed_abs, tag = 'smem constant byte address 0x4 - core index']
  #allocation1 [shape = 'u32[144,128]{1,0:T(1,128)}', space=vmem, size = 0x12000, scoped, tag = 'internal scratch']
  #allocation2 [shape = 'f32[2,32,128]{2,1,0:T(8,128)}', space=vmem, size = 0x8000, scoped, tag = 'scratch operand']
  #allocation3 [shape = 'f32[2,32]{1,0:T(2,128)}', space=vmem, size = 0x400, scoped, tag = 'scratch operand']
  #allocation4 [shape = 'f32[2,32]{1,0:T(2,128)}', space=vmem, size = 0x400, scoped, tag = 'scratch operand']
  %s0 = inlined_call_operand.vmem [shape: bf16[2,64,12], index: 0, kind: input, shape index: {}]
  %s1 = inlined_call_operand.vmem [shape: bf16[12,128], index: 1, kind: input, shape index: {}]
  %s2 = inlined_call_operand.vmem [shape: bf16[32,128], index: 2, kind: input, shape index: {}]
  %s3 = inlined_call_operand.vmem [shape: f32[1,128], index: 3, kind: input, shape index: {}]
  %s4 = inlined_call_operand.vmem [shape: f32[2,64,32], index: 4, kind: output, shape index: {}]
  %s5 = sld [smem:[#allocation0]]
  $region128: #{tpu_custom_call.1} parent=0
    _
  %s7 = ssub.s32 1, %s5
  %s8 = scalar_select 0, %s7, %s5
  $region1: #{tpu_custom_call.1} parent=0
    #allocation5 [shape = 'u8[32768]{0}', space=vmem, size = 0x8000, scoped, tag = 'input window, operand 0']
    #allocation6 [shape = 'u8[65536]{0}', space=vmem, size = 0x10000, scoped, tag = 'output window, operand 0']
    loop: start=0, step=1, limit=4
    $region2: #{tpu_custom_call.1} parent=1 // loop_pre_header
      _
    $region3: #{tpu_custom_call.1} parent=1 // loop_header
      %s10 = sphi 0, %s14
      %p11 = scmp.ge.s32.totalorder %s10, 4
      %s20 = sphi 0, %s22
      %s23 = sphi 0, %s20
      %s24 = sphi 0, %s23
      %s40 = sphi 0, %s24
      %s44 = sphi 0, %s44
      %s46 = sphi 0, %s44
      %s47 = sphi 0, %s46
      %s61 = sphi 0, %s47
      %s65 = sphi 0, %s65
      %s67 = sphi 0, %s65
      %s68 = sphi 0, %s67
      %s82 = sphi 0, %s68
      %s86 = sphi 0, %s86
      %s88 = sphi 0, %s86
      %s89 = sphi 0, %s88
      %s103 = sphi 0, %s89
      %s109 = sphi 0, %s111
      %s112 = sphi 0, %s109
      %s113 = sphi 0, %s112
      %s129 = sphi 0, %s113
    $region4: #{tpu_custom_call.1} parent=1 // loop_header_branch
      %13 = sbr.rel (%p11) target = $region8
    $region5: #{tpu_custom_call.1} parent=1 // loop_body
      %s15 = ssub.s32 %s10, 1
      %s16 = ssub.s32 %s10, 2
      %s17 = sadd.s32 %s10, 1
      %s18 = ssub.s32 %s10, %s17
      %p19 = scmp.eq.s32.totalorder %s18, 0
      %s21 = sadd.s32 %s20, 1
      %s22 = scalar_select %p19, %s20, %s21
      %p25 = pneg %p19
      %p26 = scmp.eq.s32.totalorder %s10, 1
      %p27 = por %p25, %p26
      %p28 = scmp.ne.s32.totalorder %s20, %s23
      %p29 = scmp.eq.s32.totalorder %s10, 0
      %p30 = por %p28, %p29
      %p31 = scmp.ne.s32.totalorder %s20, %s23
      %p32 = scmp.eq.s32.totalorder %s15, 1
      %p33 = por %p31, %p32
      %p34 = scmp.ne.s32.totalorder %s23, %s24
      %p35 = scmp.eq.s32.totalorder %s15, 0
      %p36 = por %p34, %p35
      %p37 = scmp.ne.s32.totalorder %s23, %s24
      %p38 = scmp.eq.s32.totalorder %s16, 1
      %p39 = por %p37, %p38
      %p41 = scmp.ne.s32.totalorder %s24, %s40
      %p42 = scmp.eq.s32.totalorder %s16, 0
      %p43 = por %p41, %p42
      %s45 = sadd.s32 %s44, 1
      %p48 = scmp.eq.s32.totalorder %s10, 1
      %p49 = scmp.ne.s32.totalorder %s44, %s46
      %p50 = scmp.eq.s32.totalorder %s10, 0
      %p51 = por %p49, %p50
      %p52 = scmp.ne.s32.totalorder %s44, %s46
      %p53 = scmp.eq.s32.totalorder %s15, 1
      %p54 = por %p52, %p53
      %p55 = scmp.ne.s32.totalorder %s46, %s47
      %p56 = scmp.eq.s32.totalorder %s15, 0
      %p57 = por %p55, %p56
      %p58 = scmp.ne.s32.totalorder %s46, %s47
      %p59 = scmp.eq.s32.totalorder %s16, 1
      %p60 = por %p58, %p59
      %p62 = scmp.ne.s32.totalorder %s47, %s61
      %p63 = scmp.eq.s32.totalorder %s16, 0
      %p64 = por %p62, %p63
      %s66 = sadd.s32 %s65, 1
      %p69 = scmp.eq.s32.totalorder %s10, 1
      %p70 = scmp.ne.s32.totalorder %s65, %s67
      %p71 = scmp.eq.s32.totalorder %s10, 0
      %p72 = por %p70, %p71
      %p73 = scmp.ne.s32.totalorder %s65, %s67
      %p74 = scmp.eq.s32.totalorder %s15, 1
      %p75 = por %p73, %p74
      %p76 = scmp.ne.s32.totalorder %s67, %s68
      %p77 = scmp.eq.s32.totalorder %s15, 0
      %p78 = por %p76, %p77
      %p79 = scmp.ne.s32.totalorder %s67, %s68
      %p80 = scmp.eq.s32.totalorder %s16, 1
      %p81 = por %p79, %p80
      %p83 = scmp.ne.s32.totalorder %s68, %s82
      %p84 = scmp.eq.s32.totalorder %s16, 0
      %p85 = por %p83, %p84
      %s87 = sadd.s32 %s86, 1
      %p90 = scmp.eq.s32.totalorder %s10, 1
      %p91 = scmp.ne.s32.totalorder %s86, %s88
      %p92 = scmp.eq.s32.totalorder %s10, 0
      %p93 = por %p91, %p92
      %p94 = scmp.ne.s32.totalorder %s86, %s88
      %p95 = scmp.eq.s32.totalorder %s15, 1
      %p96 = por %p94, %p95
      %p97 = scmp.ne.s32.totalorder %s88, %s89
      %p98 = scmp.eq.s32.totalorder %s15, 0
      %p99 = por %p97, %p98
      %p100 = scmp.ne.s32.totalorder %s88, %s89
      %p101 = scmp.eq.s32.totalorder %s16, 1
      %p102 = por %p100, %p101
      %p104 = scmp.ne.s32.totalorder %s89, %s103
      %p105 = scmp.eq.s32.totalorder %s16, 0
      %p106 = por %p104, %p105
      %s107 = ssub.s32 %s10, %s17
      %p108 = scmp.eq.s32.totalorder %s107, 0
      %s110 = sadd.s32 %s109, 1
      %s111 = scalar_select %p108, %s109, %s110
      %p114 = pneg %p108
      %p115 = scmp.eq.s32.totalorder %s10, 1
      %p116 = por %p114, %p115
      %p117 = scmp.ne.s32.totalorder %s109, %s112
      %p118 = scmp.eq.s32.totalorder %s10, 0
      %p119 = por %p117, %p118
      %p120 = scmp.ne.s32.totalorder %s109, %s112
      %p121 = scmp.eq.s32.totalorder %s15, 1
      %p122 = por %p120, %p121
      %p123 = scmp.ne.s32.totalorder %s112, %s113
      %p124 = scmp.eq.s32.totalorder %s15, 0
      %p125 = por %p123, %p124
      %p126 = scmp.ne.s32.totalorder %s112, %s113
      %p127 = scmp.eq.s32.totalorder %s16, 1
      %p128 = por %p126, %p127
      %p130 = scmp.ne.s32.totalorder %s113, %s129
      %p131 = scmp.eq.s32.totalorder %s16, 0
      %p132 = por %p130, %p131
      %p133 = scmp.le.s32.totalorder 1, %s10
      %p134 = scmp.lt.s32.totalorder %s10, 3
      %p135 = pnand %p133, %p134
      %p136 = pneg %p135
      // Predicated region
      $region9: #{tpu_custom_call.1} parent=5 // pred_check
        _
      $region10: #{tpu_custom_call.1} parent=5 // pred_check_branch
        %138 = sbr.rel (%p135) target = $region12
      $region11: #{tpu_custom_call.1} parent=5 // pred_region
        %s139 = ssub.s32 %s10, 1
        // Predicated region
        $region13: #{tpu_custom_call.1} parent=11 // pred_check
          %p140 = pneg %p57
        $region14: #{tpu_custom_call.1} parent=11 // pred_check_branch
          %142 = sbr.rel (%p140) target = $region16
        $region15: #{tpu_custom_call.1} parent=11 // pred_region
          _
        $region16: #{tpu_custom_call.1} parent=11 // pred_fallthru
          _
        // Predicated region
        $region17: #{tpu_custom_call.1} parent=11 // pred_check
          %p143 = pneg %p78
        $region18: #{tpu_custom_call.1} parent=11 // pred_check_branch
          %145 = sbr.rel (%p143) target = $region20
        $region19: #{tpu_custom_call.1} parent=11 // pred_region
          _
        $region20: #{tpu_custom_call.1} parent=11 // pred_fallthru
          _
        // Predicated region
        $region21: #{tpu_custom_call.1} parent=11 // pred_check
          %p146 = pneg %p99
        $region22: #{tpu_custom_call.1} parent=11 // pred_check_branch
          %148 = sbr.rel (%p146) target = $region24
        $region23: #{tpu_custom_call.1} parent=11 // pred_region
          _
        $region24: #{tpu_custom_call.1} parent=11 // pred_fallthru
          _
      $region12: #{tpu_custom_call.1} parent=5 // pred_fallthru
        _
      %p149 = scmp.lt.s32.totalorder %s10, 2
      // Predicated region
      $region25: #{tpu_custom_call.1} parent=5 // pred_check
        %p150 = pneg %p149
      $region26: #{tpu_custom_call.1} parent=5 // pred_check_branch
        %152 = sbr.rel (%p150) target = $region28
      $region27: #{tpu_custom_call.1} parent=5 // pred_region
        // Predicated region
        $region29: #{tpu_custom_call.1} parent=27 // pred_check
          %p153 = pneg %p30
        $region30: #{tpu_custom_call.1} parent=27 // pred_check_branch
          %155 = sbr.rel (%p153) target = $region32
        $region31: #{tpu_custom_call.1} parent=27 // pred_region
          %s156 = sand.u32 %s20, 1
          %s157 = sand.u32 %s20, 1
          %s158 = smul.addr %s157, 32
          %s159 = scalar_lea.vmem [#allocation5], %s158
          %s160 = smul.u32 4, %s10
          %s161 = smul.addr %s160, 4
          %s162 = scalar_lea.vmem %s0, %s161
          // Predicated region
          $region33: #{tpu_custom_call.1} parent=31 // pred_check
            _
          $region34: #{tpu_custom_call.1} parent=31 // pred_check_branch
            %164 = sbr.rel (0) target = $region36
          $region35: #{tpu_custom_call.1} parent=31 // pred_region
            // Predicated region
            $region37: #{tpu_custom_call.1} parent=35 // pred_check
              _
            $region38: #{tpu_custom_call.1} parent=35 // pred_check_branch
              %166 = sbr.rel target = $region40
            $region39: #{tpu_custom_call.1} parent=35 // pred_region
              // Predicated region
              $region52: #{tpu_custom_call.1} parent=39 // pred_check
                _
              $region53: #{tpu_custom_call.1} parent=39 // pred_check_branch
                %196 = sbr.rel (0) target = $region55
              $region54: #{tpu_custom_call.1} parent=39 // pred_region
                loop: start=0, step=1, limit=1
                $region56: #{tpu_custom_call.1} parent=54 // loop_pre_header
                  _
                $region57: #{tpu_custom_call.1} parent=54 // loop_header
                  %s198 = sphi 0, %s202
                  %p199 = scmp.ge.s32.totalorder %s198, 1
                  %s203 = sphi %s162, %s162
                  %s204 = sphi %s159, %s159
                $region58: #{tpu_custom_call.1} parent=54 // loop_header_branch
                  %201 = sbr.rel (%p199) target = $region62
                $region59: #{tpu_custom_call.1} parent=54 // loop_body
                  _
                $region60: #{tpu_custom_call.1} parent=54 // loop_footer
                  %s202 = sadd.s32 1, %s198
                $region61: #{tpu_custom_call.1} parent=54 // loop_footer_branch
                  %197 = sbr.rel target = $region57
                $region62: #{tpu_custom_call.1} parent=54 // loop_exit
                  _
                %s206 = ssub.s32 16, 1
                loop: start=0, step=1, limit=1
                $region63: #{tpu_custom_call.1} parent=54 // loop_pre_header
                  _
                $region64: #{tpu_custom_call.1} parent=54 // loop_header
                  %s208 = sphi 0, %s212
                  %p209 = scmp.ge.s32.totalorder %s208, 1
                  %s213 = sphi %s162, %s162
                  %s214 = sphi %s159, %s159
                $region65: #{tpu_custom_call.1} parent=54 // loop_header_branch
                  %211 = sbr.rel (%p209) target = $region69
                $region66: #{tpu_custom_call.1} parent=54 // loop_body
                  %v215 = vld [vmem:[%s213] sm:%s206]
                  %216 = vst [vmem:[%s214] sm:%s206] %v215
                  %v217 = vld [vmem:[%s213 + $0x4] sm:%s206]
                  %218 = vst [vmem:[%s214 + $0x4] sm:%s206] %v217
                  %v219 = vld [vmem:[%s213 + $0x8] sm:%s206]
                  %220 = vst [vmem:[%s214 + $0x8] sm:%s206] %v219
                  %v221 = vld [vmem:[%s213 + $0xc] sm:%s206]
                  %222 = vst [vmem:[%s214 + $0xc] sm:%s206] %v221
                  %v223 = vld [vmem:[%s213 + $0x20] sm:%s206]
                  %224 = vst [vmem:[%s214 + $0x10] sm:%s206] %v223
                  %v225 = vld [vmem:[%s213 + $0x24] sm:%s206]
                  %226 = vst [vmem:[%s214 + $0x14] sm:%s206] %v225
                  %v227 = vld [vmem:[%s213 + $0x28] sm:%s206]
                  %228 = vst [vmem:[%s214 + $0x18] sm:%s206] %v227
                  %v229 = vld [vmem:[%s213 + $0x2c] sm:%s206]
                  %230 = vst [vmem:[%s214 + $0x1c] sm:%s206] %v229
                $region67: #{tpu_custom_call.1} parent=54 // loop_footer
                  %s212 = sadd.s32 1, %s208
                $region68: #{tpu_custom_call.1} parent=54 // loop_footer_branch
                  %207 = sbr.rel target = $region64
                $region69: #{tpu_custom_call.1} parent=54 // loop_exit
                  _
              $region55: #{tpu_custom_call.1} parent=39 // pred_fallthru
                _
            $region40: #{tpu_custom_call.1} parent=35 // pred_fallthru
              _
            // Predicated region
            $region41: #{tpu_custom_call.1} parent=35 // pred_check
              _
            $region42: #{tpu_custom_call.1} parent=35 // pred_check_branch
              %168 = sbr.rel (0) target = $region44
            $region43: #{tpu_custom_call.1} parent=35 // pred_region
              %s170 = ssub.s32 16, 1
              loop: start=0, step=1, limit=1
              $region45: #{tpu_custom_call.1} parent=43 // loop_pre_header
                _
              $region46: #{tpu_custom_call.1} parent=43 // loop_header
                %s172 = sphi 0, %s176
                %p173 = scmp.ge.s32.totalorder %s172, 1
                %s177 = sphi %s162, %s162
                %s178 = sphi %s159, %s159
              $region47: #{tpu_custom_call.1} parent=43 // loop_header_branch
                %175 = sbr.rel (%p173) target = $region51
              $region48: #{tpu_custom_call.1} parent=43 // loop_body
                %v179 = vld [vmem:[%s177] sm:%s170]
                %180 = vst [vmem:[%s178] sm:%s170] %v179
                %v181 = vld [vmem:[%s177 + $0x4] sm:%s170]
                %182 = vst [vmem:[%s178 + $0x4] sm:%s170] %v181
                %v183 = vld [vmem:[%s177 + $0x8] sm:%s170]
                %184 = vst [vmem:[%s178 + $0x8] sm:%s170] %v183
                %v185 = vld [vmem:[%s177 + $0xc] sm:%s170]
                %186 = vst [vmem:[%s178 + $0xc] sm:%s170] %v185
                %v187 = vld [vmem:[%s177 + $0x20] sm:%s170]
                %188 = vst [vmem:[%s178 + $0x10] sm:%s170] %v187
                %v189 = vld [vmem:[%s177 + $0x24] sm:%s170]
                %190 = vst [vmem:[%s178 + $0x14] sm:%s170] %v189
                %v191 = vld [vmem:[%s177 + $0x28] sm:%s170]
                %192 = vst [vmem:[%s178 + $0x18] sm:%s170] %v191
                %v193 = vld [vmem:[%s177 + $0x2c] sm:%s170]
                %194 = vst [vmem:[%s178 + $0x1c] sm:%s170] %v193
              $region49: #{tpu_custom_call.1} parent=43 // loop_footer
                %s176 = sadd.s32 1, %s172
              $region50: #{tpu_custom_call.1} parent=43 // loop_footer_branch
                %171 = sbr.rel target = $region46
              $region51: #{tpu_custom_call.1} parent=43 // loop_exit
                _
            $region44: #{tpu_custom_call.1} parent=35 // pred_fallthru
              _
          $region36: #{tpu_custom_call.1} parent=31 // pred_fallthru
            _
          %231 = vnop
        $region32: #{tpu_custom_call.1} parent=27 // pred_fallthru
          _
      $region28: #{tpu_custom_call.1} parent=5 // pred_fallthru
        _
      %p232 = scmp.le.s32.totalorder 1, %s10
      %p233 = scmp.lt.s32.totalorder %s10, 3
      %p234 = pnand %p232, %p233
      %p235 = pneg %p234
      // Predicated region
      $region70: #{tpu_custom_call.1} parent=5 // pred_check
        _
      $region71: #{tpu_custom_call.1} parent=5 // pred_check_branch
        %237 = sbr.rel (%p234) target = $region73
      $region72: #{tpu_custom_call.1} parent=5 // pred_region
        %s238 = ssub.s32 %s10, 1
        %s239 = sand.u32 %s23, 1
        %s240 = sand.u32 %s23, 1
        %s241 = smul.addr %s240, 32
        %s242 = scalar_lea.vmem [#allocation5], %s241
        // Predicated region
        $region74: #{tpu_custom_call.1} parent=72 // pred_check
          %p243 = pneg %p36
        $region75: #{tpu_custom_call.1} parent=72 // pred_check_branch
          %245 = sbr.rel (%p243) target = $region77
        $region76: #{tpu_custom_call.1} parent=72 // pred_region
          _
        $region77: #{tpu_custom_call.1} parent=72 // pred_fallthru
          _
        %s246 = sand.u32 %s23, 1
        %s247 = sand.u32 %s23, 1
        %s248 = smul.addr %s247, 32
        %s249 = scalar_lea.vmem [#allocation5], %s248
        %p250 = pneg %p36
        %p251 = pneg %p33
        %p252 = pneg %p57
        %p253 = pneg %p54
        %p254 = pneg %p78
        %p255 = pneg %p75
        %p256 = pneg %p99
        %p257 = pneg %p96
        %p258 = pneg %p125
        %p259 = pneg %p122
        %s260 = sand.u32 %s112, 1
        %s261 = sand.u32 %s112, 1
        %s262 = smul.addr %s261, 64
        %s263 = scalar_lea.vmem [#allocation6], %s262
        %s264 = smul.u32 4, %s15
        %s265 = smul.u32 4, %s15
        %p267 = scmp.eq.s32.totalorder %s15, 0
        // Predicated region
        $region78: #{tpu_custom_call.1} parent=72 // pred_check
          %p268 = pneg %p267
        $region79: #{tpu_custom_call.1} parent=72 // pred_check_branch
          %270 = sbr.rel (%p268) target = $region81
        $region80: #{tpu_custom_call.1} parent=72 // pred_region
          %vm271 = vcmask 254976
          %272 = vst.msk [vmem:[#allocation3] sm:$0x3] %vm271, 0.0
          %273 = vst.msk [vmem:[#allocation4] sm:$0x3] %vm271, 0.0
        $region81: #{tpu_custom_call.1} parent=72 // pred_fallthru
          _
        %v274 = vld [vmem:[%s242] sm:$0xf]
        %v275 = vld [vmem:[%s242 + $0x4] sm:$0xf]
        %v276 = vld [vmem:[%s242 + $0x8] sm:$0xf]
        %v277 = vld [vmem:[%s242 + $0xc] sm:$0xf]
        %v278 = vld [vmem:[%s242 + $0x10] sm:$0xf]
        %v279 = vld [vmem:[%s242 + $0x14] sm:$0xf]
        %v280 = vld [vmem:[%s242 + $0x18] sm:$0xf]
        %v281 = vld [vmem:[%s242 + $0x1c] sm:$0xf]
        %v282 = vld [vmem:[%s1] sm:$0xf]
        %v283 = vld [vmem:[%s1 + $0x4] sm:$0x3]
        %v292 = vunpack.c.l.b16 %v274
        %v293 = vunpack.c.l.b16 %v275
        %v294 = vunpack.c.l.b16 %v276
        %v295 = vunpack.c.l.b16 %v277
        %v296 = vunpack.c.l.b16 %v278
        %v297 = vunpack.c.l.b16 %v279
        %v298 = vunpack.c.l.b16 %v280
        %v299 = vunpack.c.l.b16 %v281
        %v300 = vpack.c.b16 %v293, %v292
        %v301 = vpack.c.b16 %v295, %v294
        %v302 = vpack.c.b16 %v297, %v296
        %v303 = vpack.c.b16 %v299, %v298
        %v306 = vunpack.c.l.b16 %v282
        %v307 = vunpack.c.l.b16 %v283
        %v308 = vpack.c.b16 %v307, %v306
        %vm309 = vcmask 97280
        %v311 = vsel %vm309, %v300, 0
        %v314 = vsel %vm309, %v301, 0
        %v317 = vsel %vm309, %v302, 0
        %v320 = vsel %vm309, %v303, 0
        %vm322 = vcmask 1045504
        %v324 = vsel %vm322, %v308, 0
        %326 = vmatprep.subr.bf16.mxu0 0
        %327 = vmatpush1.bf16.msra.mxu0 0
        %328 = vmatprep.subr.bf16.mxu0 0
        %329 = vmatpush1.bf16.msra.mxu0 0
        %330 = vmatprep.subr.bf16.mxu0 0
        %331 = vmatpush1.bf16.msra.mxu0 0
        %332 = vmatprep.subr.bf16.mxu0 0
        %333 = vmatpush1.bf16.msra.mxu0 0
        %334 = vmatprep.subr.bf16.mxu0 0
        %335 = vmatpush1.bf16.msra.mxu0 0
        %336 = vmatprep.subr.bf16.mxu0 0
        %337 = vmatpush1.bf16.msra.mxu0 0
        %338 = vmatprep.subr.bf16.mxu0 0
        %339 = vmatpush1.bf16.msra.mxu0 0
        %340 = vmatprep.subr.bf16.mxu0 0
        %341 = vmatpush1.bf16.msra.mxu0 %v324
        %342 = vmatprep.subr.bf16.mxu0 0
        %343 = vmatpush2.bf16.msra.mxu0 0
        %344 = vmatprep.subr.bf16.mxu0 0
        %345 = vmatpush2.bf16.msra.mxu0 0
        %346 = vmatprep.subr.bf16.mxu0 0
        %347 = vmatpush2.bf16.msra.mxu0 0
        %348 = vmatprep.subr.bf16.mxu0 0
        %349 = vmatpush2.bf16.msra.mxu0 0
        %350 = vmatprep.subr.bf16.mxu0 0
        %351 = vmatpush2.bf16.msra.mxu0 0
        %352 = vmatprep.subr.bf16.mxu0 0
        %353 = vmatpush2.bf16.msra.mxu0 0
        %354 = vmatprep.subr.bf16.mxu0 0
        %355 = vmatpush2.bf16.msra.mxu0 0
        %356 = vmatprep.subr.bf16.mxu0 0
        %357 = vmatpush2.bf16.msra.mxu0 0
        %358 = vmatprep.mubr.bf16.mxu0 0
        %359 = vmatmul.mubr.bf16.gmra.mxu0 %v311
        %v360 = vpop.f32.mrf.mxu0
        %v361 = vadd.f32 0.0, %v360
        %v362 = vpop.f32.mrf.mxu0
        %v363 = vpop.f32.mrf.mxu0
        %v364 = vadd.f32 0.0, %v363
        %v365 = vpop.f32.mrf.mxu0
        %366 = vmatprep.mubr.bf16.mxu0 0
        %367 = vmatmul.mubr.bf16.gmra.mxu0 %v314
        %v368 = vpop.f32.mrf.mxu0
        %v369 = vadd.f32 0.0, %v368
        %v370 = vpop.f32.mrf.mxu0
        %v371 = vpop.f32.mrf.mxu0
        %v372 = vadd.f32 0.0, %v371
        %v373 = vpop.f32.mrf.mxu0
        %374 = vmatprep.mubr.bf16.mxu0 0
        %375 = vmatmul.mubr.bf16.gmra.mxu0 %v317
        %v376 = vpop.f32.mrf.mxu0
        %v377 = vadd.f32 0.0, %v376
        %v378 = vpop.f32.mrf.mxu0
        %v379 = vpop.f32.mrf.mxu0
        %v380 = vadd.f32 0.0, %v379
        %v381 = vpop.f32.mrf.mxu0
        %382 = vmatprep.mubr.bf16.mxu0 0
        %383 = vmatmul.mubr.bf16.gmra.mxu0 %v320
        %v384 = vpop.f32.mrf.mxu0
        %v385 = vadd.f32 0.0, %v384
        %v386 = vpop.f32.mrf.mxu0
        %v387 = vpop.f32.mrf.mxu0
        %v388 = vadd.f32 0.0, %v387
        %v389 = vpop.f32.mrf.mxu0
        %390 = vdwg.mxu0
        %v391 = vld [vmem:[%s3] sm:$0x1]
        %v393 = vlaneseq
        %v394 = vshrl.u32 %v393, 7
        %v395 = vsub.s32 0, %v394
        %v396 = vrot.slane %v391, %v395
        %v398 = vadd.f32 %v361, %v396
        %v399 = vadd.f32 %v364, %v396
        %v400 = vadd.f32 %v369, %v396
        %v401 = vadd.f32 %v372, %v396
        %v402 = vadd.f32 %v377, %v396
        %v403 = vadd.f32 %v380, %v396
        %v404 = vadd.f32 %v385, %v396
        %v405 = vadd.f32 %v388, %v396
        %406 = vst [vmem:[#allocation2] sm:$0xff] %v398
        %407 = vst [vmem:[#allocation2 + $0x8] sm:$0xff] %v399
        %408 = vst [vmem:[#allocation2 + $0x10] sm:$0xff] %v400
        %409 = vst [vmem:[#allocation2 + $0x18] sm:$0xff] %v401
        %410 = vst [vmem:[#allocation2 + $0x20] sm:$0xff] %v402
        %411 = vst [vmem:[#allocation2 + $0x28] sm:$0xff] %v403
        %412 = vst [vmem:[#allocation2 + $0x30] sm:$0xff] %v404
        %413 = vst [vmem:[#allocation2 + $0x38] sm:$0xff] %v405
        %v414 = vlaneseq
        %v415 = vand.u32 %v414, 127
        %vm416 = vcmp.ge.s32.totalorder %v415, 64
        %vm417 = vcmp.lt.s32.totalorder %v415, 96
        %vm418 = vmand %vm416, %vm417
        %v419 = vld [vmem:[#allocation3] sm:$0x3]
        %v420 = vld [vmem:[#allocation4] sm:$0x3]
        %v421 = vld [vmem:[#allocation2] sm:$0x1]
        %v422 = vld [vmem:[#allocation2 + $0x20] sm:$0x1]
        %v423 = vpack.c.bf16 %v419, %v419
        %v424 = vld [vmem:[%s2] sm:$0xf]
        %v425 = vld [vmem:[%s2 + $0x4] sm:$0xf]
        %v426 = vld [vmem:[%s2 + $0x8] sm:$0xf]
        %v427 = vld [vmem:[%s2 + $0xc] sm:$0xf]
        %v432 = vunpack.c.l.b16 %v424
        %v433 = vunpack.c.l.b16 %v425
        %v434 = vunpack.c.l.b16 %v426
        %v435 = vunpack.c.l.b16 %v427
        %v436 = vpack.c.b16 %v433, %v432
        %v437 = vpack.c.b16 %v435, %v434
        %vm440 = vcmask 261120
        %v442 = vsel %vm440, %v423, 0
        %444 = vmatprep.subr.bf16.mxu0 0
        %445 = vmatpush1.bf16.msra.mxu0 0
        %446 = vmatprep.subr.bf16.mxu0 0
        %447 = vmatpush1.bf16.msra.mxu0 0
        %448 = vmatprep.subr.bf16.mxu0 0
        %449 = vmatpush1.bf16.msra.mxu0 0
        %450 = vmatprep.subr.bf16.mxu0 0
        %451 = vmatpush1.bf16.msra.mxu0 0
        %452 = vmatprep.subr.bf16.mxu0 0
        %453 = vmatpush1.bf16.msra.mxu0 0
        %454 = vmatprep.subr.bf16.mxu0 0
        %455 = vmatpush1.bf16.msra.mxu0 0
        %456 = vmatprep.subr.bf16.mxu0 0
        %457 = vmatpush1.bf16.msra.mxu0 %v437
        %458 = vmatprep.subr.bf16.mxu0 0
        %459 = vmatpush1.bf16.msra.mxu0 %v436
        %460 = vmatprep.subr.bf16.mxu0 0
        %461 = vmatpush2.bf16.msra.mxu0 0
        %462 = vmatprep.subr.bf16.mxu0 0
        %463 = vmatpush2.bf16.msra.mxu0 0
        %464 = vmatprep.subr.bf16.mxu0 0
        %465 = vmatpush2.bf16.msra.mxu0 0
        %466 = vmatprep.subr.bf16.mxu0 0
        %467 = vmatpush2.bf16.msra.mxu0 0
        %468 = vmatprep.subr.bf16.mxu0 0
        %469 = vmatpush2.bf16.msra.mxu0 0
        %470 = vmatprep.subr.bf16.mxu0 0
        %471 = vmatpush2.bf16.msra.mxu0 0
        %472 = vmatprep.subr.bf16.mxu0 0
        %473 = vmatpush2.bf16.msra.mxu0 0
        %474 = vmatprep.subr.bf16.mxu0 0
        %475 = vmatpush2.bf16.msra.mxu0 0
        %476 = vmatprep.mubr.bf16.mxu0 0
        %477 = vmatmul.mubr.bf16.gmra.mxu0 %v442
        %v478 = vpop.f32.mrf.mxu0
        %v479 = vadd.f32 0.0, %v478
        %v480 = vpop.f32.mrf.mxu0
        %v481 = vpop.f32.mrf.mxu0
        %v482 = vpop.f32.mrf.mxu0
        %483 = vdwg.mxu0
        %v485 = vrot.slane %v479, 1
        %v488 = vadd.f32 %v421, %v479
        %v489 = vadd.f32 %v422, %v485
        %v490 = vmul.f32 %v488, 0.5
        %v491 = vmul.f32 %v489, 0.5
        %v492 = vsel %vm418, 1, 0
        %vm493 = vcmp.eq.s32.totalorder %v492, 1
        %v496 = vrot.slane %v489, 7
        %vm497 = vcmask 1041409
        %v498 = vsel %vm497, %v496, %v488
        %v502 = vrot.slane %v491, 7
        %v503 = vsel %vm497, %v502, %v490
        %v505 = vsel %vm493, %v498, %v503
        %v506 = vtanh.pop %v505
        %v507 = vadd.f32 %v506, 1.0
        %v508 = vmul.f32 %v507, 0.5
        %v509 = vsel %vm493, %v506, %v508
        %511 = vrot.lane.b32.xlu0 %v420, 32
        %v512 = vpop.permute.xlu0 %511
        %v514 = vmul.f32 %v509, %v512
        %516 = vrot.lane.b32.xlu0 %v509, 64
        %v517 = vpop.permute.xlu0 %516
        %v519 = vmul.f32 %v509, %v517
        %521 = vrot.lane.b32.xlu0 %v519, 32
        %v522 = vpop.permute.xlu0 %521
        %v524 = vadd.f32 %v514, %v522
        %v525 = vtanh.pop %v524
        %527 = vrot.lane.b32.xlu0 %v525, 64
        %v528 = vpop.permute.xlu0 %527
        %v530 = vmul.f32 %v509, %v528
        %v531 = vld [vmem:[#allocation2 + $0x1] sm:$0x1]
        %v532 = vld [vmem:[#allocation2 + $0x21] sm:$0x1]
        %v533 = vpack.c.bf16 %v530, %v530
        %535 = vrot.lane.b32.xlu0 %v533, 32
        %v536 = vpop.permute.xlu0 %535
        %v538 = vsel %vm440, %v536, 0
        %540 = vmatprep.subr.bf16.mxu0 0
        %541 = vmatpush1.bf16.msra.mxu0 0
        %542 = vmatprep.subr.bf16.mxu0 0
        %543 = vmatpush1.bf16.msra.mxu0 0
        %544 = vmatprep.subr.bf16.mxu0 0
        %545 = vmatpush1.bf16.msra.mxu0 0
        %546 = vmatprep.subr.bf16.mxu0 0
        %547 = vmatpush1.bf16.msra.mxu0 0
        %548 = vmatprep.subr.bf16.mxu0 0
        %549 = vmatpush1.bf16.msra.mxu0 0
        %550 = vmatprep.subr.bf16.mxu0 0
        %551 = vmatpush1.bf16.msra.mxu0 0
        %552 = vmatprep.subr.bf16.mxu0 0
        %553 = vmatpush1.bf16.msra.mxu0 %v437
        %554 = vmatprep.subr.bf16.mxu0 0
        %555 = vmatpush1.bf16.msra.mxu0 %v436
        %556 = vmatprep.subr.bf16.mxu0 0
        %557 = vmatpush2.bf16.msra.mxu0 0
        %558 = vmatprep.subr.bf16.mxu0 0
        %559 = vmatpush2.bf16.msra.mxu0 0
        %560 = vmatprep.subr.bf16.mxu0 0
        %561 = vmatpush2.bf16.msra.mxu0 0
        %562 = vmatprep.subr.bf16.mxu0 0
        %563 = vmatpush2.bf16.msra.mxu0 0
        %564 = vmatprep.subr.bf16.mxu0 0
        %565 = vmatpush2.bf16.msra.mxu0 0
        %566 = vmatprep.subr.bf16.mxu0 0
        %567 = vmatpush2.bf16.msra.mxu0 0
        %568 = vmatprep.subr.bf16.mxu0 0
        %569 = vmatpush2.bf16.msra.mxu0 0
        %570 = vmatprep.subr.bf16.mxu0 0
        %571 = vmatpush2.bf16.msra.mxu0 0
        %572 = vmatprep.mubr.bf16.mxu0 0
        %573 = vmatmul.mubr.bf16.gmra.mxu0 %v538
        %v574 = vpop.f32.mrf.mxu0
        %v575 = vadd.f32 0.0, %v574
        %v576 = vpop.f32.mrf.mxu0
        %v577 = vpop.f32.mrf.mxu0
        %v578 = vpop.f32.mrf.mxu0
        %579 = vdwg.mxu0
        %v581 = vrot.slane %v575, 1
        %v584 = vadd.f32 %v531, %v575
        %v585 = vadd.f32 %v532, %v581
        %v586 = vmul.f32 %v584, 0.5
        %v587 = vmul.f32 %v585, 0.5
        %v590 = vrot.slane %v585, 7
        %v591 = vsel %vm497, %v590, %v584
        %v595 = vrot.slane %v587, 7
        %v596 = vsel %vm497, %v595, %v586
        %v598 = vsel %vm493, %v591, %v596
        %v599 = vtanh.pop %v598
        %v600 = vadd.f32 %v599, 1.0
        %v601 = vmul.f32 %v600, 0.5
        %v602 = vsel %vm493, %v599, %v601
        %v603 = vmul.f32 %v602, %v524
        %605 = vrot.lane.b32.xlu0 %v602, 64
        %v606 = vpop.permute.xlu0 %605
        %v608 = vmul.f32 %v602, %v606
        %610 = vrot.lane.b32.xlu0 %v608, 32
        %v611 = vpop.permute.xlu0 %610
        %v613 = vadd.f32 %v603, %v611
        %v614 = vtanh.pop %v613
        %616 = vrot.lane.b32.xlu0 %v614, 64
        %v617 = vpop.permute.xlu0 %616
        %v619 = vmul.f32 %v602, %v617
        %v620 = vld [vmem:[#allocation2 + $0x2] sm:$0x1]
        %v621 = vld [vmem:[#allocation2 + $0x22] sm:$0x1]
        %v622 = vpack.c.bf16 %v619, %v619
        %624 = vrot.lane.b32.xlu0 %v622, 32
        %v625 = vpop.permute.xlu0 %624
        %v627 = vsel %vm440, %v625, 0
        %629 = vmatprep.subr.bf16.mxu0 0
        %630 = vmatpush1.bf16.msra.mxu0 0
        %631 = vmatprep.subr.bf16.mxu0 0
        %632 = vmatpush1.bf16.msra.mxu0 0
        %633 = vmatprep.subr.bf16.mxu0 0
        %634 = vmatpush1.bf16.msra.mxu0 0
        %635 = vmatprep.subr.bf16.mxu0 0
        %636 = vmatpush1.bf16.msra.mxu0 0
        %637 = vmatprep.subr.bf16.mxu0 0
        %638 = vmatpush1.bf16.msra.mxu0 0
        %639 = vmatprep.subr.bf16.mxu0 0
        %640 = vmatpush1.bf16.msra.mxu0 0
        %641 = vmatprep.subr.bf16.mxu0 0
        %642 = vmatpush1.bf16.msra.mxu0 %v437
        %643 = vmatprep.subr.bf16.mxu0 0
        %644 = vmatpush1.bf16.msra.mxu0 %v436
        %645 = vmatprep.subr.bf16.mxu0 0
        %646 = vmatpush2.bf16.msra.mxu0 0
        %647 = vmatprep.subr.bf16.mxu0 0
        %648 = vmatpush2.bf16.msra.mxu0 0
        %649 = vmatprep.subr.bf16.mxu0 0
        %650 = vmatpush2.bf16.msra.mxu0 0
        %651 = vmatprep.subr.bf16.mxu0 0
        %652 = vmatpush2.bf16.msra.mxu0 0
        %653 = vmatprep.subr.bf16.mxu0 0
        %654 = vmatpush2.bf16.msra.mxu0 0
        %655 = vmatprep.subr.bf16.mxu0 0
        %656 = vmatpush2.bf16.msra.mxu0 0
        %657 = vmatprep.subr.bf16.mxu0 0
        %658 = vmatpush2.bf16.msra.mxu0 0
        %659 = vmatprep.subr.bf16.mxu0 0
        %660 = vmatpush2.bf16.msra.mxu0 0
        %661 = vmatprep.mubr.bf16.mxu0 0
        %662 = vmatmul.mubr.bf16.gmra.mxu0 %v627
        %v663 = vpop.f32.mrf.mxu0
        %v664 = vadd.f32 0.0, %v663
        %v665 = vpop.f32.mrf.mxu0
        %v666 = vpop.f32.mrf.mxu0
        %v667 = vpop.f32.mrf.mxu0
        %668 = vdwg.mxu0
        %v670 = vrot.slane %v664, 1
        %v673 = vadd.f32 %v620, %v664
        %v674 = vadd.f32 %v621, %v670
        %v675 = vmul.f32 %v673, 0.5
        %v676 = vmul.f32 %v674, 0.5
        %v679 = vrot.slane %v674, 7
        %v680 = vsel %vm497, %v679, %v673
        %v684 = vrot.slane %v676, 7
        %v685 = vsel %vm497, %v684, %v675
        %v687 = vsel %vm493, %v680, %v685
        %v688 = vtanh.pop %v687
        %v689 = vadd.f32 %v688, 1.0
        %v690 = vmul.f32 %v689, 0.5
        %v691 = vsel %vm493, %v688, %v690
        %v692 = vmul.f32 %v691, %v613
        %694 = vrot.lane.b32.xlu0 %v691, 64
        %v695 = vpop.permute.xlu0 %694
        %v697 = vmul.f32 %v691, %v695
        %699 = vrot.lane.b32.xlu0 %v697, 32
        %v700 = vpop.permute.xlu0 %699
        %v702 = vadd.f32 %v692, %v700
        %v703 = vtanh.pop %v702
        %705 = vrot.lane.b32.xlu0 %v703, 64
        %v706 = vpop.permute.xlu0 %705
        %v708 = vmul.f32 %v691, %v706
        %v709 = vld [vmem:[#allocation2 + $0x3] sm:$0x1]
        %v710 = vld [vmem:[#allocation2 + $0x23] sm:$0x1]
        %v711 = vpack.c.bf16 %v708, %v708
        %713 = vrot.lane.b32.xlu0 %v711, 32
        %v714 = vpop.permute.xlu0 %713
        %v716 = vsel %vm440, %v714, 0
        %718 = vmatprep.subr.bf16.mxu0 0
        %719 = vmatpush1.bf16.msra.mxu0 0
        %720 = vmatprep.subr.bf16.mxu0 0
        %721 = vmatpush1.bf16.msra.mxu0 0
        %722 = vmatprep.subr.bf16.mxu0 0
        %723 = vmatpush1.bf16.msra.mxu0 0
        %724 = vmatprep.subr.bf16.mxu0 0
        %725 = vmatpush1.bf16.msra.mxu0 0
        %726 = vmatprep.subr.bf16.mxu0 0
        %727 = vmatpush1.bf16.msra.mxu0 0
        %728 = vmatprep.subr.bf16.mxu0 0
        %729 = vmatpush1.bf16.msra.mxu0 0
        %730 = vmatprep.subr.bf16.mxu0 0
        %731 = vmatpush1.bf16.msra.mxu0 %v437
        %732 = vmatprep.subr.bf16.mxu0 0
        %733 = vmatpush1.bf16.msra.mxu0 %v436
        %734 = vmatprep.subr.bf16.mxu0 0
        %735 = vmatpush2.bf16.msra.mxu0 0
        %736 = vmatprep.subr.bf16.mxu0 0
        %737 = vmatpush2.bf16.msra.mxu0 0
        %738 = vmatprep.subr.bf16.mxu0 0
        %739 = vmatpush2.bf16.msra.mxu0 0
        %740 = vmatprep.subr.bf16.mxu0 0
        %741 = vmatpush2.bf16.msra.mxu0 0
        %742 = vmatprep.subr.bf16.mxu0 0
        %743 = vmatpush2.bf16.msra.mxu0 0
        %744 = vmatprep.subr.bf16.mxu0 0
        %745 = vmatpush2.bf16.msra.mxu0 0
        %746 = vmatprep.subr.bf16.mxu0 0
        %747 = vmatpush2.bf16.msra.mxu0 0
        %748 = vmatprep.subr.bf16.mxu0 0
        %749 = vmatpush2.bf16.msra.mxu0 0
        %750 = vmatprep.mubr.bf16.mxu0 0
        %751 = vmatmul.mubr.bf16.gmra.mxu0 %v716
        %v752 = vpop.f32.mrf.mxu0
        %v753 = vadd.f32 0.0, %v752
        %v754 = vpop.f32.mrf.mxu0
        %v755 = vpop.f32.mrf.mxu0
        %v756 = vpop.f32.mrf.mxu0
        %757 = vdwg.mxu0
        %v759 = vrot.slane %v753, 1
        %v762 = vadd.f32 %v709, %v753
        %v763 = vadd.f32 %v710, %v759
        %v764 = vmul.f32 %v762, 0.5
        %v765 = vmul.f32 %v763, 0.5
        %v768 = vrot.slane %v763, 7
        %v769 = vsel %vm497, %v768, %v762
        %v773 = vrot.slane %v765, 7
        %v774 = vsel %vm497, %v773, %v764
        %v776 = vsel %vm493, %v769, %v774
        %v777 = vtanh.pop %v776
        %v778 = vadd.f32 %v777, 1.0
        %v779 = vmul.f32 %v778, 0.5
        %v780 = vsel %vm493, %v777, %v779
        %v781 = vmul.f32 %v780, %v702
        %783 = vrot.lane.b32.xlu0 %v780, 64
        %v784 = vpop.permute.xlu0 %783
        %v786 = vmul.f32 %v780, %v784
        %788 = vrot.lane.b32.xlu0 %v786, 32
        %v789 = vpop.permute.xlu0 %788
        %v791 = vadd.f32 %v781, %v789
        %v792 = vtanh.pop %v791
        %794 = vrot.lane.b32.xlu0 %v792, 64
        %v795 = vpop.permute.xlu0 %794
        %v797 = vmul.f32 %v780, %v795
        %v798 = vld [vmem:[#allocation2 + $0x4] sm:$0x1]
        %v799 = vld [vmem:[#allocation2 + $0x24] sm:$0x1]
        %v800 = vpack.c.bf16 %v797, %v797
        %802 = vrot.lane.b32.xlu0 %v800, 32
        %v803 = vpop.permute.xlu0 %802
        %v805 = vsel %vm440, %v803, 0
        %807 = vmatprep.subr.bf16.mxu0 0
        %808 = vmatpush1.bf16.msra.mxu0 0
        %809 = vmatprep.subr.bf16.mxu0 0
        %810 = vmatpush1.bf16.msra.mxu0 0
        %811 = vmatprep.subr.bf16.mxu0 0
        %812 = vmatpush1.bf16.msra.mxu0 0
        %813 = vmatprep.subr.bf16.mxu0 0
        %814 = vmatpush1.bf16.msra.mxu0 0
        %815 = vmatprep.subr.bf16.mxu0 0
        %816 = vmatpush1.bf16.msra.mxu0 0
        %817 = vmatprep.subr.bf16.mxu0 0
        %818 = vmatpush1.bf16.msra.mxu0 0
        %819 = vmatprep.subr.bf16.mxu0 0
        %820 = vmatpush1.bf16.msra.mxu0 %v437
        %821 = vmatprep.subr.bf16.mxu0 0
        %822 = vmatpush1.bf16.msra.mxu0 %v436
        %823 = vmatprep.subr.bf16.mxu0 0
        %824 = vmatpush2.bf16.msra.mxu0 0
        %825 = vmatprep.subr.bf16.mxu0 0
        %826 = vmatpush2.bf16.msra.mxu0 0
        %827 = vmatprep.subr.bf16.mxu0 0
        %828 = vmatpush2.bf16.msra.mxu0 0
        %829 = vmatprep.subr.bf16.mxu0 0
        %830 = vmatpush2.bf16.msra.mxu0 0
        %831 = vmatprep.subr.bf16.mxu0 0
        %832 = vmatpush2.bf16.msra.mxu0 0
        %833 = vmatprep.subr.bf16.mxu0 0
        %834 = vmatpush2.bf16.msra.mxu0 0
        %835 = vmatprep.subr.bf16.mxu0 0
        %836 = vmatpush2.bf16.msra.mxu0 0
        %837 = vmatprep.subr.bf16.mxu0 0
        %838 = vmatpush2.bf16.msra.mxu0 0
        %839 = vmatprep.mubr.bf16.mxu0 0
        %840 = vmatmul.mubr.bf16.gmra.mxu0 %v805
        %v841 = vpop.f32.mrf.mxu0
        %v842 = vadd.f32 0.0, %v841
        %v843 = vpop.f32.mrf.mxu0
        %v844 = vpop.f32.mrf.mxu0
        %v845 = vpop.f32.mrf.mxu0
        %846 = vdwg.mxu0
        %v848 = vrot.slane %v842, 1
        %v851 = vadd.f32 %v798, %v842
        %v852 = vadd.f32 %v799, %v848
        %v853 = vmul.f32 %v851, 0.5
        %v854 = vmul.f32 %v852, 0.5
        %v857 = vrot.slane %v852, 7
        %v858 = vsel %vm497, %v857, %v851
        %v862 = vrot.slane %v854, 7
        %v863 = vsel %vm497, %v862, %v853
        %v865 = vsel %vm493, %v858, %v863
        %v866 = vtanh.pop %v865
        %v867 = vadd.f32 %v866, 1.0
        %v868 = vmul.f32 %v867, 0.5
        %v869 = vsel %vm493, %v866, %v868
        %v870 = vmul.f32 %v869, %v791
        %872 = vrot.lane.b32.xlu0 %v869, 64
        %v873 = vpop.permute.xlu0 %872
        %v875 = vmul.f32 %v869, %v873
        %877 = vrot.lane.b32.xlu0 %v875, 32
        %v878 = vpop.permute.xlu0 %877
        %v880 = vadd.f32 %v870, %v878
        %v881 = vtanh.pop %v880
        %883 = vrot.lane.b32.xlu0 %v881, 64
        %v884 = vpop.permute.xlu0 %883
        %v886 = vmul.f32 %v869, %v884
        %v887 = vld [vmem:[#allocation2 + $0x5] sm:$0x1]
        %v888 = vld [vmem:[#allocation2 + $0x25] sm:$0x1]
        %v889 = vpack.c.bf16 %v886, %v886
        %891 = vrot.lane.b32.xlu0 %v889, 32
        %v892 = vpop.permute.xlu0 %891
        %v894 = vsel %vm440, %v892, 0
        %896 = vmatprep.subr.bf16.mxu0 0
        %897 = vmatpush1.bf16.msra.mxu0 0
        %898 = vmatprep.subr.bf16.mxu0 0
        %899 = vmatpush1.bf16.msra.mxu0 0
        %900 = vmatprep.subr.bf16.mxu0 0
        %901 = vmatpush1.bf16.msra.mxu0 0
        %902 = vmatprep.subr.bf16.mxu0 0
        %903 = vmatpush1.bf16.msra.mxu0 0
        %904 = vmatprep.subr.bf16.mxu0 0
        %905 = vmatpush1.bf16.msra.mxu0 0
        %906 = vmatprep.subr.bf16.mxu0 0
        %907 = vmatpush1.bf16.msra.mxu0 0
        %908 = vmatprep.subr.bf16.mxu0 0
        %909 = vmatpush1.bf16.msra.mxu0 %v437
        %910 = vmatprep.subr.bf16.mxu0 0
        %911 = vmatpush1.bf16.msra.mxu0 %v436
        %912 = vmatprep.subr.bf16.mxu0 0
        %913 = vmatpush2.bf16.msra.mxu0 0
        %914 = vmatprep.subr.bf16.mxu0 0
        %915 = vmatpush2.bf16.msra.mxu0 0
        %916 = vmatprep.subr.bf16.mxu0 0
        %917 = vmatpush2.bf16.msra.mxu0 0
        %918 = vmatprep.subr.bf16.mxu0 0
        %919 = vmatpush2.bf16.msra.mxu0 0
        %920 = vmatprep.subr.bf16.mxu0 0
        %921 = vmatpush2.bf16.msra.mxu0 0
        %922 = vmatprep.subr.bf16.mxu0 0
        %923 = vmatpush2.bf16.msra.mxu0 0
        %924 = vmatprep.subr.bf16.mxu0 0
        %925 = vmatpush2.bf16.msra.mxu0 0
        %926 = vmatprep.subr.bf16.mxu0 0
        %927 = vmatpush2.bf16.msra.mxu0 0
        %928 = vmatprep.mubr.bf16.mxu0 0
        %929 = vmatmul.mubr.bf16.gmra.mxu0 %v894
        %v930 = vpop.f32.mrf.mxu0
        %v931 = vadd.f32 0.0, %v930
        %v932 = vpop.f32.mrf.mxu0
        %v933 = vpop.f32.mrf.mxu0
        %v934 = vpop.f32.mrf.mxu0
        %935 = vdwg.mxu0
        %v937 = vrot.slane %v931, 1
        %v940 = vadd.f32 %v887, %v931
        %v941 = vadd.f32 %v888, %v937
        %v942 = vmul.f32 %v940, 0.5
        %v943 = vmul.f32 %v941, 0.5
        %v946 = vrot.slane %v941, 7
        %v947 = vsel %vm497, %v946, %v940
        %v951 = vrot.slane %v943, 7
        %v952 = vsel %vm497, %v951, %v942
        %v954 = vsel %vm493, %v947, %v952
        %v955 = vtanh.pop %v954
        %v956 = vadd.f32 %v955, 1.0
        %v957 = vmul.f32 %v956, 0.5
        %v958 = vsel %vm493, %v955, %v957
        %v959 = vmul.f32 %v958, %v880
        %961 = vrot.lane.b32.xlu0 %v958, 64
        %v962 = vpop.permute.xlu0 %961
        %v964 = vmul.f32 %v958, %v962
        %966 = vrot.lane.b32.xlu0 %v964, 32
        %v967 = vpop.permute.xlu0 %966
        %v969 = vadd.f32 %v959, %v967
        %v970 = vtanh.pop %v969
        %972 = vrot.lane.b32.xlu0 %v970, 64
        %v973 = vpop.permute.xlu0 %972
        %v975 = vmul.f32 %v958, %v973
        %v976 = vld [vmem:[#allocation2 + $0x6] sm:$0x1]
        %v977 = vld [vmem:[#allocation2 + $0x26] sm:$0x1]
        %v978 = vpack.c.bf16 %v975, %v975
        %980 = vrot.lane.b32.xlu0 %v978, 32
        %v981 = vpop.permute.xlu0 %980
        %v983 = vsel %vm440, %v981, 0
        %985 = vmatprep.subr.bf16.mxu0 0
        %986 = vmatpush1.bf16.msra.mxu0 0
        %987 = vmatprep.subr.bf16.mxu0 0
        %988 = vmatpush1.bf16.msra.mxu0 0
        %989 = vmatprep.subr.bf16.mxu0 0
        %990 = vmatpush1.bf16.msra.mxu0 0
        %991 = vmatprep.subr.bf16.mxu0 0
        %992 = vmatpush1.bf16.msra.mxu0 0
        %993 = vmatprep.subr.bf16.mxu0 0
        %994 = vmatpush1.bf16.msra.mxu0 0
        %995 = vmatprep.subr.bf16.mxu0 0
        %996 = vmatpush1.bf16.msra.mxu0 0
        %997 = vmatprep.subr.bf16.mxu0 0
        %998 = vmatpush1.bf16.msra.mxu0 %v437
        %999 = vmatprep.subr.bf16.mxu0 0
        %1000 = vmatpush1.bf16.msra.mxu0 %v436
        %1001 = vmatprep.subr.bf16.mxu0 0
        %1002 = vmatpush2.bf16.msra.mxu0 0
        %1003 = vmatprep.subr.bf16.mxu0 0
        %1004 = vmatpush2.bf16.msra.mxu0 0
        %1005 = vmatprep.subr.bf16.mxu0 0
        %1006 = vmatpush2.bf16.msra.mxu0 0
        %1007 = vmatprep.subr.bf16.mxu0 0
        %1008 = vmatpush2.bf16.msra.mxu0 0
        %1009 = vmatprep.subr.bf16.mxu0 0
        %1010 = vmatpush2.bf16.msra.mxu0 0
        %1011 = vmatprep.subr.bf16.mxu0 0
        %1012 = vmatpush2.bf16.msra.mxu0 0
        %1013 = vmatprep.subr.bf16.mxu0 0
        %1014 = vmatpush2.bf16.msra.mxu0 0
        %1015 = vmatprep.subr.bf16.mxu0 0
        %1016 = vmatpush2.bf16.msra.mxu0 0
        %1017 = vmatprep.mubr.bf16.mxu0 0
        %1018 = vmatmul.mubr.bf16.gmra.mxu0 %v983
        %v1019 = vpop.f32.mrf.mxu0
        %v1020 = vadd.f32 0.0, %v1019
        %v1021 = vpop.f32.mrf.mxu0
        %v1022 = vpop.f32.mrf.mxu0
        %v1023 = vpop.f32.mrf.mxu0
        %1024 = vdwg.mxu0
        %v1026 = vrot.slane %v1020, 1
        %v1029 = vadd.f32 %v976, %v1020
        %v1030 = vadd.f32 %v977, %v1026
        %v1031 = vmul.f32 %v1029, 0.5
        %v1032 = vmul.f32 %v1030, 0.5
        %v1035 = vrot.slane %v1030, 7
        %v1036 = vsel %vm497, %v1035, %v1029
        %v1040 = vrot.slane %v1032, 7
        %v1041 = vsel %vm497, %v1040, %v1031
        %v1043 = vsel %vm493, %v1036, %v1041
        %v1044 = vtanh.pop %v1043
        %v1045 = vadd.f32 %v1044, 1.0
        %v1046 = vmul.f32 %v1045, 0.5
        %v1047 = vsel %vm493, %v1044, %v1046
        %v1048 = vmul.f32 %v1047, %v969
        %1050 = vrot.lane.b32.xlu0 %v1047, 64
        %v1051 = vpop.permute.xlu0 %1050
        %v1053 = vmul.f32 %v1047, %v1051
        %1055 = vrot.lane.b32.xlu0 %v1053, 32
        %v1056 = vpop.permute.xlu0 %1055
        %v1058 = vadd.f32 %v1048, %v1056
        %v1059 = vtanh.pop %v1058
        %1061 = vrot.lane.b32.xlu0 %v1059, 64
        %v1062 = vpop.permute.xlu0 %1061
        %v1064 = vmul.f32 %v1047, %v1062
        %v1065 = vld [vmem:[#allocation2 + $0x7] sm:$0x1]
        %v1066 = vld [vmem:[#allocation2 + $0x27] sm:$0x1]
        %v1067 = vpack.c.bf16 %v1064, %v1064
        %1069 = vrot.lane.b32.xlu0 %v1067, 32
        %v1070 = vpop.permute.xlu0 %1069
        %v1072 = vsel %vm440, %v1070, 0
        %1074 = vmatprep.subr.bf16.mxu0 0
        %1075 = vmatpush1.bf16.msra.mxu0 0
        %1076 = vmatprep.subr.bf16.mxu0 0
        %1077 = vmatpush1.bf16.msra.mxu0 0
        %1078 = vmatprep.subr.bf16.mxu0 0
        %1079 = vmatpush1.bf16.msra.mxu0 0
        %1080 = vmatprep.subr.bf16.mxu0 0
        %1081 = vmatpush1.bf16.msra.mxu0 0
        %1082 = vmatprep.subr.bf16.mxu0 0
        %1083 = vmatpush1.bf16.msra.mxu0 0
        %1084 = vmatprep.subr.bf16.mxu0 0
        %1085 = vmatpush1.bf16.msra.mxu0 0
        %1086 = vmatprep.subr.bf16.mxu0 0
        %1087 = vmatpush1.bf16.msra.mxu0 %v437
        %1088 = vmatprep.subr.bf16.mxu0 0
        %1089 = vmatpush1.bf16.msra.mxu0 %v436
        %1090 = vmatprep.subr.bf16.mxu0 0
        %1091 = vmatpush2.bf16.msra.mxu0 0
        %1092 = vmatprep.subr.bf16.mxu0 0
        %1093 = vmatpush2.bf16.msra.mxu0 0
        %1094 = vmatprep.subr.bf16.mxu0 0
        %1095 = vmatpush2.bf16.msra.mxu0 0
        %1096 = vmatprep.subr.bf16.mxu0 0
        %1097 = vmatpush2.bf16.msra.mxu0 0
        %1098 = vmatprep.subr.bf16.mxu0 0
        %1099 = vmatpush2.bf16.msra.mxu0 0
        %1100 = vmatprep.subr.bf16.mxu0 0
        %1101 = vmatpush2.bf16.msra.mxu0 0
        %1102 = vmatprep.subr.bf16.mxu0 0
        %1103 = vmatpush2.bf16.msra.mxu0 0
        %1104 = vmatprep.subr.bf16.mxu0 0
        %1105 = vmatpush2.bf16.msra.mxu0 0
        %1106 = vmatprep.mubr.bf16.mxu0 0
        %1107 = vmatmul.mubr.bf16.gmra.mxu0 %v1072
        %v1108 = vpop.f32.mrf.mxu0
        %v1109 = vadd.f32 0.0, %v1108
        %v1110 = vpop.f32.mrf.mxu0
        %v1111 = vpop.f32.mrf.mxu0
        %v1112 = vpop.f32.mrf.mxu0
        %1113 = vdwg.mxu0
        %v1115 = vrot.slane %v1109, 1
        %v1118 = vadd.f32 %v1065, %v1109
        %v1119 = vadd.f32 %v1066, %v1115
        %v1120 = vmul.f32 %v1118, 0.5
        %v1121 = vmul.f32 %v1119, 0.5
        %v1124 = vrot.slane %v1119, 7
        %v1125 = vsel %vm497, %v1124, %v1118
        %v1129 = vrot.slane %v1121, 7
        %v1130 = vsel %vm497, %v1129, %v1120
        %v1132 = vsel %vm493, %v1125, %v1130
        %v1133 = vtanh.pop %v1132
        %v1134 = vadd.f32 %v1133, 1.0
        %v1135 = vmul.f32 %v1134, 0.5
        %v1136 = vsel %vm493, %v1133, %v1135
        %v1137 = vmul.f32 %v1136, %v1058
        %1139 = vrot.lane.b32.xlu0 %v1136, 64
        %v1140 = vpop.permute.xlu0 %1139
        %v1142 = vmul.f32 %v1136, %v1140
        %1144 = vrot.lane.b32.xlu0 %v1142, 32
        %v1145 = vpop.permute.xlu0 %1144
        %v1147 = vadd.f32 %v1137, %v1145
        %v1148 = vtanh.pop %v1147
        %1150 = vrot.lane.b32.xlu0 %v1148, 64
        %v1151 = vpop.permute.xlu0 %1150
        %v1153 = vmul.f32 %v1136, %v1151
        %v1156 = vunpack.c.l.s4 1966171168
        %v1157 = vunpack.c.0.s8 %v1156
        %v1158 = vlaneseq
        %v1159 = vshrl.u32 %v1158, 7
        %v1160 = vsub.s32 %v1157, %v1159
        %v1161 = vrot.slane %v530, %v1160
        %v1162 = vcombine.high %v1161, %v1161
        %v1164 = vunpack.c.l.s4 1966171168
        %v1165 = vunpack.c.0.s8 %v1164
        %v1166 = vlaneseq
        %v1167 = vshrl.u32 %v1166, 7
        %v1168 = vsub.s32 %v1165, %v1167
        %v1169 = vrot.slane %v1161, %v1168
        %v1171 = vunpack.c.l.s4 1966171168
        %v1172 = vunpack.c.0.s8 %v1171
        %v1173 = vlaneseq
        %v1174 = vshrl.u32 %v1173, 7
        %v1175 = vsub.s32 %v1172, %v1174
        %v1176 = vrot.slane %v1162, %v1175
        %v1181 = vunpack.c.l.s4 1966171168
        %v1182 = vunpack.c.0.s8 %v1181
        %v1183 = vlaneseq
        %v1184 = vshrl.u32 %v1183, 7
        %v1185 = vsub.s32 %v1182, %v1184
        %v1186 = vrot.slane %v619, %v1185
        %v1187 = vcombine.high %v1186, %v1186
        %v1189 = vunpack.c.l.s4 1966171168
        %v1190 = vunpack.c.0.s8 %v1189
        %v1191 = vlaneseq
        %v1192 = vshrl.u32 %v1191, 7
        %v1193 = vsub.s32 %v1190, %v1192
        %v1194 = vrot.slane %v1186, %v1193
        %v1196 = vunpack.c.l.s4 1966171168
        %v1197 = vunpack.c.0.s8 %v1196
        %v1198 = vlaneseq
        %v1199 = vshrl.u32 %v1198, 7
        %v1200 = vsub.s32 %v1197, %v1199
        %v1201 = vrot.slane %v1187, %v1200
        %v1204 = vunpack.c.l.s4 1966171168
        %v1205 = vunpack.c.0.s8 %v1204
        %v1206 = vlaneseq
        %v1207 = vshrl.u32 %v1206, 7
        %v1208 = vsub.s32 %v1205, %v1207
        %v1209 = vrot.slane %v708, %v1208
        %v1210 = vcombine.high %v1209, %v1209
        %v1212 = vunpack.c.l.s4 1966171168
        %v1213 = vunpack.c.0.s8 %v1212
        %v1214 = vlaneseq
        %v1215 = vshrl.u32 %v1214, 7
        %v1216 = vsub.s32 %v1213, %v1215
        %v1217 = vrot.slane %v1209, %v1216
        %v1219 = vunpack.c.l.s4 1966171168
        %v1220 = vunpack.c.0.s8 %v1219
        %v1221 = vlaneseq
        %v1222 = vshrl.u32 %v1221, 7
        %v1223 = vsub.s32 %v1220, %v1222
        %v1224 = vrot.slane %v1210, %v1223
        %v1227 = vunpack.c.l.s4 1966171168
        %v1228 = vunpack.c.0.s8 %v1227
        %v1229 = vlaneseq
        %v1230 = vshrl.u32 %v1229, 7
        %v1231 = vsub.s32 %v1228, %v1230
        %v1232 = vrot.slane %v797, %v1231
        %v1233 = vcombine.high %v1232, %v1232
        %v1235 = vunpack.c.l.s4 1966171168
        %v1236 = vunpack.c.0.s8 %v1235
        %v1237 = vlaneseq
        %v1238 = vshrl.u32 %v1237, 7
        %v1239 = vsub.s32 %v1236, %v1238
        %v1240 = vrot.slane %v1232, %v1239
        %v1242 = vunpack.c.l.s4 1966171168
        %v1243 = vunpack.c.0.s8 %v1242
        %v1244 = vlaneseq
        %v1245 = vshrl.u32 %v1244, 7
        %v1246 = vsub.s32 %v1243, %v1245
        %v1247 = vrot.slane %v1233, %v1246
        %v1250 = vunpack.c.l.s4 1966171168
        %v1251 = vunpack.c.0.s8 %v1250
        %v1252 = vlaneseq
        %v1253 = vshrl.u32 %v1252, 7
        %v1254 = vsub.s32 %v1251, %v1253
        %v1255 = vrot.slane %v886, %v1254
        %v1256 = vcombine.high %v1255, %v1255
        %v1258 = vunpack.c.l.s4 1966171168
        %v1259 = vunpack.c.0.s8 %v1258
        %v1260 = vlaneseq
        %v1261 = vshrl.u32 %v1260, 7
        %v1262 = vsub.s32 %v1259, %v1261
        %v1263 = vrot.slane %v1255, %v1262
        %v1265 = vunpack.c.l.s4 1966171168
        %v1266 = vunpack.c.0.s8 %v1265
        %v1267 = vlaneseq
        %v1268 = vshrl.u32 %v1267, 7
        %v1269 = vsub.s32 %v1266, %v1268
        %v1270 = vrot.slane %v1256, %v1269
        %v1273 = vunpack.c.l.s4 1966171168
        %v1274 = vunpack.c.0.s8 %v1273
        %v1275 = vlaneseq
        %v1276 = vshrl.u32 %v1275, 7
        %v1277 = vsub.s32 %v1274, %v1276
        %v1278 = vrot.slane %v975, %v1277
        %v1279 = vcombine.high %v1278, %v1278
        %v1281 = vunpack.c.l.s4 1966171168
        %v1282 = vunpack.c.0.s8 %v1281
        %v1283 = vlaneseq
        %v1284 = vshrl.u32 %v1283, 7
        %v1285 = vsub.s32 %v1282, %v1284
        %v1286 = vrot.slane %v1278, %v1285
        %v1288 = vunpack.c.l.s4 1966171168
        %v1289 = vunpack.c.0.s8 %v1288
        %v1290 = vlaneseq
        %v1291 = vshrl.u32 %v1290, 7
        %v1292 = vsub.s32 %v1289, %v1291
        %v1293 = vrot.slane %v1279, %v1292
        %v1296 = vunpack.c.l.s4 1966171168
        %v1297 = vunpack.c.0.s8 %v1296
        %v1298 = vlaneseq
        %v1299 = vshrl.u32 %v1298, 7
        %v1300 = vsub.s32 %v1297, %v1299
        %v1301 = vrot.slane %v1064, %v1300
        %v1302 = vcombine.high %v1301, %v1301
        %v1304 = vunpack.c.l.s4 1966171168
        %v1305 = vunpack.c.0.s8 %v1304
        %v1306 = vlaneseq
        %v1307 = vshrl.u32 %v1306, 7
        %v1308 = vsub.s32 %v1305, %v1307
        %v1309 = vrot.slane %v1301, %v1308
        %v1311 = vunpack.c.l.s4 1966171168
        %v1312 = vunpack.c.0.s8 %v1311
        %v1313 = vlaneseq
        %v1314 = vshrl.u32 %v1313, 7
        %v1315 = vsub.s32 %v1312, %v1314
        %v1316 = vrot.slane %v1302, %v1315
        %v1319 = vunpack.c.l.s4 1966171168
        %v1320 = vunpack.c.0.s8 %v1319
        %v1321 = vlaneseq
        %v1322 = vshrl.u32 %v1321, 7
        %v1323 = vsub.s32 %v1320, %v1322
        %v1324 = vrot.slane %v1153, %v1323
        %v1325 = vcombine.high %v1324, %v1324
        %v1327 = vunpack.c.l.s4 1966171168
        %v1328 = vunpack.c.0.s8 %v1327
        %v1329 = vlaneseq
        %v1330 = vshrl.u32 %v1329, 7
        %v1331 = vsub.s32 %v1328, %v1330
        %v1332 = vrot.slane %v1324, %v1331
        %v1334 = vunpack.c.l.s4 1966171168
        %v1335 = vunpack.c.0.s8 %v1334
        %v1336 = vlaneseq
        %v1337 = vshrl.u32 %v1336, 7
        %v1338 = vsub.s32 %v1335, %v1337
        %v1339 = vrot.slane %v1325, %v1338
        %v1340 = vlaneseq
        %v1341 = vshrl.u32 %v1340, 7
        %v1342 = vsub.s32 0, %v1341
        %v1343 = vrot.slane %v1194, %v1342
        %v1344 = vlaneseq
        %v1345 = vshrl.u32 %v1344, 7
        %v1346 = vsub.s32 0, %v1345
        %v1347 = vrot.slane %v1201, %v1346
        %v1350 = vlaneseq
        %v1351 = vshrl.u32 %v1350, 7
        %v1352 = vsub.s32 0, %v1351
        %v1353 = vrot.slane %v1217, %v1352
        %v1354 = vlaneseq
        %v1355 = vshrl.u32 %v1354, 7
        %v1356 = vsub.s32 0, %v1355
        %v1357 = vrot.slane %v1224, %v1356
        %v1360 = vlaneseq
        %v1361 = vshrl.u32 %v1360, 7
        %v1362 = vsub.s32 0, %v1361
        %v1363 = vrot.slane %v1240, %v1362
        %v1364 = vlaneseq
        %v1365 = vshrl.u32 %v1364, 7
        %v1366 = vsub.s32 0, %v1365
        %v1367 = vrot.slane %v1247, %v1366
        %v1370 = vlaneseq
        %v1371 = vshrl.u32 %v1370, 7
        %v1372 = vsub.s32 0, %v1371
        %v1373 = vrot.slane %v1263, %v1372
        %v1374 = vlaneseq
        %v1375 = vshrl.u32 %v1374, 7
        %v1376 = vsub.s32 0, %v1375
        %v1377 = vrot.slane %v1270, %v1376
        %v1380 = vlaneseq
        %v1381 = vshrl.u32 %v1380, 7
        %v1382 = vsub.s32 0, %v1381
        %v1383 = vrot.slane %v1286, %v1382
        %v1384 = vlaneseq
        %v1385 = vshrl.u32 %v1384, 7
        %v1386 = vsub.s32 0, %v1385
        %v1387 = vrot.slane %v1293, %v1386
        %v1390 = vlaneseq
        %v1391 = vshrl.u32 %v1390, 7
        %v1392 = vsub.s32 0, %v1391
        %v1393 = vrot.slane %v1309, %v1392
        %v1394 = vlaneseq
        %v1395 = vshrl.u32 %v1394, 7
        %v1396 = vsub.s32 0, %v1395
        %v1397 = vrot.slane %v1316, %v1396
        %v1400 = vlaneseq
        %v1401 = vshrl.u32 %v1400, 7
        %v1402 = vsub.s32 0, %v1401
        %v1403 = vrot.slane %v1332, %v1402
        %v1404 = vlaneseq
        %v1405 = vshrl.u32 %v1404, 7
        %v1406 = vsub.s32 0, %v1405
        %v1407 = vrot.slane %v1339, %v1406
        %vm1410 = vcmask 1040384
        %v1411 = vsel %vm1410, %v1169, %v1343
        %v1412 = vsel %vm1410, %v1176, %v1347
        %vm1413 = vcmask 1041408
        %v1414 = vsel %vm1413, %v1411, %v1353
        %v1415 = vsel %vm1413, %v1412, %v1357
        %vm1416 = vcmask 1042432
        %v1417 = vsel %vm1416, %v1414, %v1363
        %v1418 = vsel %vm1416, %v1415, %v1367
        %vm1419 = vcmask 1043456
        %v1420 = vsel %vm1419, %v1417, %v1373
        %v1421 = vsel %vm1419, %v1418, %v1377
        %vm1422 = vcmask 1044480
        %v1423 = vsel %vm1422, %v1420, %v1383
        %v1424 = vsel %vm1422, %v1421, %v1387
        %v1425 = vsel %vm322, %v1423, %v1393
        %v1426 = vsel %vm322, %v1424, %v1397
        %vm1427 = vcmask 1046528
        %v1428 = vsel %vm1427, %v1425, %v1403
        %v1429 = vsel %vm1427, %v1426, %v1407
        %1432 = vrot.lane.b32.xlu0 %v1428, 32
        %v1433 = vpop.permute.xlu0 %1432
        %1434 = vrot.lane.b32.xlu0 %v1429, 32
        %v1435 = vpop.permute.xlu0 %1434
        %1438 = vst.msk [vmem:[%s263] sm:$0xff] %vm440, %v1433
        %1439 = vst.msk [vmem:[%s263 + $0x20] sm:$0xff] %vm440, %v1435
        %v1440 = vld [vmem:[#allocation2 + $0x8] sm:$0x1]
        %v1441 = vld [vmem:[#allocation2 + $0x28] sm:$0x1]
        %v1442 = vpack.c.bf16 %v1153, %v1153
        %v1443 = vld [vmem:[%s2] sm:$0xf]
        %v1444 = vld [vmem:[%s2 + $0x4] sm:$0xf]
        %v1445 = vld [vmem:[%s2 + $0x8] sm:$0xf]
        %v1446 = vld [vmem:[%s2 + $0xc] sm:$0xf]
        %1448 = vrot.lane.b32.xlu0 %v1442, 32
        %v1449 = vpop.permute.xlu0 %1448
        %v1454 = vunpack.c.l.b16 %v1443
        %v1455 = vunpack.c.l.b16 %v1444
        %v1456 = vunpack.c.l.b16 %v1445
        %v1457 = vunpack.c.l.b16 %v1446
        %v1458 = vpack.c.b16 %v1455, %v1454
        %v1459 = vpack.c.b16 %v1457, %v1456
        %v1463 = vsel %vm440, %v1449, 0
        %1465 = vmatprep.subr.bf16.mxu0 0
        %1466 = vmatpush1.bf16.msra.mxu0 0
        %1467 = vmatprep.subr.bf16.mxu0 0
        %1468 = vmatpush1.bf16.msra.mxu0 0
        %1469 = vmatprep.subr.bf16.mxu0 0
        %1470 = vmatpush1.bf16.msra.mxu0 0
        %1471 = vmatprep.subr.bf16.mxu0 0
        %1472 = vmatpush1.bf16.msra.mxu0 0
        %1473 = vmatprep.subr.bf16.mxu0 0
        %1474 = vmatpush1.bf16.msra.mxu0 0
        %1475 = vmatprep.subr.bf16.mxu0 0
        %1476 = vmatpush1.bf16.msra.mxu0 0
        %1477 = vmatprep.subr.bf16.mxu0 0
        %1478 = vmatpush1.bf16.msra.mxu0 %v1459
        %1479 = vmatprep.subr.bf16.mxu0 0
        %1480 = vmatpush1.bf16.msra.mxu0 %v1458
        %1481 = vmatprep.subr.bf16.mxu0 0
        %1482 = vmatpush2.bf16.msra.mxu0 0
        %1483 = vmatprep.subr.bf16.mxu0 0
        %1484 = vmatpush2.bf16.msra.mxu0 0
        %1485 = vmatprep.subr.bf16.mxu0 0
        %1486 = vmatpush2.bf16.msra.mxu0 0
        %1487 = vmatprep.subr.bf16.mxu0 0
        %1488 = vmatpush2.bf16.msra.mxu0 0
        %1489 = vmatprep.subr.bf16.mxu0 0
        %1490 = vmatpush2.bf16.msra.mxu0 0
        %1491 = vmatprep.subr.bf16.mxu0 0
        %1492 = vmatpush2.bf16.msra.mxu0 0
        %1493 = vmatprep.subr.bf16.mxu0 0
        %1494 = vmatpush2.bf16.msra.mxu0 0
        %1495 = vmatprep.subr.bf16.mxu0 0
        %1496 = vmatpush2.bf16.msra.mxu0 0
        %1497 = vmatprep.mubr.bf16.mxu0 0
        %1498 = vmatmul.mubr.bf16.gmra.mxu0 %v1463
        %v1499 = vpop.f32.mrf.mxu0
        %v1500 = vadd.f32 0.0, %v1499
        %v1501 = vpop.f32.mrf.mxu0
        %v1502 = vpop.f32.mrf.mxu0
        %v1503 = vpop.f32.mrf.mxu0
        %1504 = vdwg.mxu0
        %v1506 = vrot.slane %v1500, 1
        %v1509 = vadd.f32 %v1440, %v1500
        %v1510 = vadd.f32 %v1441, %v1506
        %v1511 = vmul.f32 %v1509, 0.5
        %v1512 = vmul.f32 %v1510, 0.5
        %v1515 = vrot.slane %v1510, 7
        %v1516 = vsel %vm497, %v1515, %v1509
        %v1520 = vrot.slane %v1512, 7
        %v1521 = vsel %vm497, %v1520, %v1511
        %v1523 = vsel %vm493, %v1516, %v1521
        %v1524 = vtanh.pop %v1523
        %v1525 = vadd.f32 %v1524, 1.0
        %v1526 = vmul.f32 %v1525, 0.5
        %v1527 = vsel %vm493, %v1524, %v1526
        %v1528 = vmul.f32 %v1527, %v1147
        %1530 = vrot.lane.b32.xlu0 %v1527, 64
        %v1531 = vpop.permute.xlu0 %1530
        %v1533 = vmul.f32 %v1527, %v1531
        %1535 = vrot.lane.b32.xlu0 %v1533, 32
        %v1536 = vpop.permute.xlu0 %1535
        %v1538 = vadd.f32 %v1528, %v1536
        %v1539 = vtanh.pop %v1538
        %1541 = vrot.lane.b32.xlu0 %v1539, 64
        %v1542 = vpop.permute.xlu0 %1541
        %v1544 = vmul.f32 %v1527, %v1542
        %v1545 = vld [vmem:[#allocation2 + $0x9] sm:$0x1]
        %v1546 = vld [vmem:[#allocation2 + $0x29] sm:$0x1]
        %v1547 = vpack.c.bf16 %v1544, %v1544
        %1549 = vrot.lane.b32.xlu0 %v1547, 32
        %v1550 = vpop.permute.xlu0 %1549
        %v1552 = vsel %vm440, %v1550, 0
        %1554 = vmatprep.subr.bf16.mxu0 0
        %1555 = vmatpush1.bf16.msra.mxu0 0
        %1556 = vmatprep.subr.bf16.mxu0 0
        %1557 = vmatpush1.bf16.msra.mxu0 0
        %1558 = vmatprep.subr.bf16.mxu0 0
        %1559 = vmatpush1.bf16.msra.mxu0 0
        %1560 = vmatprep.subr.bf16.mxu0 0
        %1561 = vmatpush1.bf16.msra.mxu0 0
        %1562 = vmatprep.subr.bf16.mxu0 0
        %1563 = vmatpush1.bf16.msra.mxu0 0
        %1564 = vmatprep.subr.bf16.mxu0 0
        %1565 = vmatpush1.bf16.msra.mxu0 0
        %1566 = vmatprep.subr.bf16.mxu0 0
        %1567 = vmatpush1.bf16.msra.mxu0 %v1459
        %1568 = vmatprep.subr.bf16.mxu0 0
        %1569 = vmatpush1.bf16.msra.mxu0 %v1458
        %1570 = vmatprep.subr.bf16.mxu0 0
        %1571 = vmatpush2.bf16.msra.mxu0 0
        %1572 = vmatprep.subr.bf16.mxu0 0
        %1573 = vmatpush2.bf16.msra.mxu0 0
        %1574 = vmatprep.subr.bf16.mxu0 0
        %1575 = vmatpush2.bf16.msra.mxu0 0
        %1576 = vmatprep.subr.bf16.mxu0 0
        %1577 = vmatpush2.bf16.msra.mxu0 0
        %1578 = vmatprep.subr.bf16.mxu0 0
        %1579 = vmatpush2.bf16.msra.mxu0 0
        %1580 = vmatprep.subr.bf16.mxu0 0
        %1581 = vmatpush2.bf16.msra.mxu0 0
        %1582 = vmatprep.subr.bf16.mxu0 0
        %1583 = vmatpush2.bf16.msra.mxu0 0
        %1584 = vmatprep.subr.bf16.mxu0 0
        %1585 = vmatpush2.bf16.msra.mxu0 0
        %1586 = vmatprep.mubr.bf16.mxu0 0
        %1587 = vmatmul.mubr.bf16.gmra.mxu0 %v1552
        %v1588 = vpop.f32.mrf.mxu0
        %v1589 = vadd.f32 0.0, %v1588
        %v1590 = vpop.f32.mrf.mxu0
        %v1591 = vpop.f32.mrf.mxu0
        %v1592 = vpop.f32.mrf.mxu0
        %1593 = vdwg.mxu0
        %v1595 = vrot.slane %v1589, 1
        %v1598 = vadd.f32 %v1545, %v1589
        %v1599 = vadd.f32 %v1546, %v1595
        %v1600 = vmul.f32 %v1598, 0.5
        %v1601 = vmul.f32 %v1599, 0.5
        %v1604 = vrot.slane %v1599, 7
        %v1605 = vsel %vm497, %v1604, %v1598
        %v1609 = vrot.slane %v1601, 7
        %v1610 = vsel %vm497, %v1609, %v1600
        %v1612 = vsel %vm493, %v1605, %v1610
        %v1613 = vtanh.pop %v1612
        %v1614 = vadd.f32 %v1613, 1.0
        %v1615 = vmul.f32 %v1614, 0.5
        %v1616 = vsel %vm493, %v1613, %v1615
        %v1617 = vmul.f32 %v1616, %v1538
        %1619 = vrot.lane.b32.xlu0 %v1616, 64
        %v1620 = vpop.permute.xlu0 %1619
        %v1622 = vmul.f32 %v1616, %v1620
        %1624 = vrot.lane.b32.xlu0 %v1622, 32
        %v1625 = vpop.permute.xlu0 %1624
        %v1627 = vadd.f32 %v1617, %v1625
        %v1628 = vtanh.pop %v1627
        %1630 = vrot.lane.b32.xlu0 %v1628, 64
        %v1631 = vpop.permute.xlu0 %1630
        %v1633 = vmul.f32 %v1616, %v1631
        %v1634 = vld [vmem:[#allocation2 + $0xa] sm:$0x1]
        %v1635 = vld [vmem:[#allocation2 + $0x2a] sm:$0x1]
        %v1636 = vpack.c.bf16 %v1633, %v1633
        %1638 = vrot.lane.b32.xlu0 %v1636, 32
        %v1639 = vpop.permute.xlu0 %1638
        %v1641 = vsel %vm440, %v1639, 0
        %1643 = vmatprep.subr.bf16.mxu0 0
        %1644 = vmatpush1.bf16.msra.mxu0 0
        %1645 = vmatprep.subr.bf16.mxu0 0
        %1646 = vmatpush1.bf16.msra.mxu0 0
        %1647 = vmatprep.subr.bf16.mxu0 0
        %1648 = vmatpush1.bf16.msra.mxu0 0
        %1649 = vmatprep.subr.bf16.mxu0 0
        %1650 = vmatpush1.bf16.msra.mxu0 0
        %1651 = vmatprep.subr.bf16.mxu0 0
        %1652 = vmatpush1.bf16.msra.mxu0 0
        %1653 = vmatprep.subr.bf16.mxu0 0
        %1654 = vmatpush1.bf16.msra.mxu0 0
        %1655 = vmatprep.subr.bf16.mxu0 0
        %1656 = vmatpush1.bf16.msra.mxu0 %v1459
        %1657 = vmatprep.subr.bf16.mxu0 0
        %1658 = vmatpush1.bf16.msra.mxu0 %v1458
        %1659 = vmatprep.subr.bf16.mxu0 0
        %1660 = vmatpush2.bf16.msra.mxu0 0
        %1661 = vmatprep.subr.bf16.mxu0 0
        %1662 = vmatpush2.bf16.msra.mxu0 0
        %1663 = vmatprep.subr.bf16.mxu0 0
        %1664 = vmatpush2.bf16.msra.mxu0 0
        %1665 = vmatprep.subr.bf16.mxu0 0
        %1666 = vmatpush2.bf16.msra.mxu0 0
        %1667 = vmatprep.subr.bf16.mxu0 0
        %1668 = vmatpush2.bf16.msra.mxu0 0
        %1669 = vmatprep.subr.bf16.mxu0 0
        %1670 = vmatpush2.bf16.msra.mxu0 0
        %1671 = vmatprep.subr.bf16.mxu0 0
        %1672 = vmatpush2.bf16.msra.mxu0 0
        %1673 = vmatprep.subr.bf16.mxu0 0
        %1674 = vmatpush2.bf16.msra.mxu0 0
        %1675 = vmatprep.mubr.bf16.mxu0 0
        %1676 = vmatmul.mubr.bf16.gmra.mxu0 %v1641
        %v1677 = vpop.f32.mrf.mxu0
        %v1678 = vadd.f32 0.0, %v1677
        %v1679 = vpop.f32.mrf.mxu0
        %v1680 = vpop.f32.mrf.mxu0
        %v1681 = vpop.f32.mrf.mxu0
        %1682 = vdwg.mxu0
        %v1684 = vrot.slane %v1678, 1
        %v1687 = vadd.f32 %v1634, %v1678
        %v1688 = vadd.f32 %v1635, %v1684
        %v1689 = vmul.f32 %v1687, 0.5
        %v1690 = vmul.f32 %v1688, 0.5
        %v1693 = vrot.slane %v1688, 7
        %v1694 = vsel %vm497, %v1693, %v1687
        %v1698 = vrot.slane %v1690, 7
        %v1699 = vsel %vm497, %v1698, %v1689
        %v1701 = vsel %vm493, %v1694, %v1699
        %v1702 = vtanh.pop %v1701
        %v1703 = vadd.f32 %v1702, 1.0
        %v1704 = vmul.f32 %v1703, 0.5
        %v1705 = vsel %vm493, %v1702, %v1704
        %v1706 = vmul.f32 %v1705, %v1627
        %1708 = vrot.lane.b32.xlu0 %v1705, 64
        %v1709 = vpop.permute.xlu0 %1708
        %v1711 = vmul.f32 %v1705, %v1709
        %1713 = vrot.lane.b32.xlu0 %v1711, 32
        %v1714 = vpop.permute.xlu0 %1713
        %v1716 = vadd.f32 %v1706, %v1714
        %v1717 = vtanh.pop %v1716
        %1719 = vrot.lane.b32.xlu0 %v1717, 64
        %v1720 = vpop.permute.xlu0 %1719
        %v1722 = vmul.f32 %v1705, %v1720
        %v1723 = vld [vmem:[#allocation2 + $0xb] sm:$0x1]
        %v1724 = vld [vmem:[#allocation2 + $0x2b] sm:$0x1]
        %v1725 = vpack.c.bf16 %v1722, %v1722
        %1727 = vrot.lane.b32.xlu0 %v1725, 32
        %v1728 = vpop.permute.xlu0 %1727
        %v1730 = vsel %vm440, %v1728, 0
        %1732 = vmatprep.subr.bf16.mxu0 0
        %1733 = vmatpush1.bf16.msra.mxu0 0
        %1734 = vmatprep.subr.bf16.mxu0 0
        %1735 = vmatpush1.bf16.msra.mxu0 0
        %1736 = vmatprep.subr.bf16.mxu0 0
        %1737 = vmatpush1.bf16.msra.mxu0 0
        %1738 = vmatprep.subr.bf16.mxu0 0
        %1739 = vmatpush1.bf16.msra.mxu0 0
        %1740 = vmatprep.subr.bf16.mxu0 0
        %1741 = vmatpush1.bf16.msra.mxu0 0
        %1742 = vmatprep.subr.bf16.mxu0 0
        %1743 = vmatpush1.bf16.msra.mxu0 0
        %1744 = vmatprep.subr.bf16.mxu0 0
        %1745 = vmatpush1.bf16.msra.mxu0 %v1459
        %1746 = vmatprep.subr.bf16.mxu0 0
        %1747 = vmatpush1.bf16.msra.mxu0 %v1458
        %1748 = vmatprep.subr.bf16.mxu0 0
        %1749 = vmatpush2.bf16.msra.mxu0 0
        %1750 = vmatprep.subr.bf16.mxu0 0
        %1751 = vmatpush2.bf16.msra.mxu0 0
        %1752 = vmatprep.subr.bf16.mxu0 0
        %1753 = vmatpush2.bf16.msra.mxu0 0
        %1754 = vmatprep.subr.bf16.mxu0 0
        %1755 = vmatpush2.bf16.msra.mxu0 0
        %1756 = vmatprep.subr.bf16.mxu0 0
        %1757 = vmatpush2.bf16.msra.mxu0 0
        %1758 = vmatprep.subr.bf16.mxu0 0
        %1759 = vmatpush2.bf16.msra.mxu0 0
        %1760 = vmatprep.subr.bf16.mxu0 0
        %1761 = vmatpush2.bf16.msra.mxu0 0
        %1762 = vmatprep.subr.bf16.mxu0 0
        %1763 = vmatpush2.bf16.msra.mxu0 0
        %1764 = vmatprep.mubr.bf16.mxu0 0
        %1765 = vmatmul.mubr.bf16.gmra.mxu0 %v1730
        %v1766 = vpop.f32.mrf.mxu0
        %v1767 = vadd.f32 0.0, %v1766
        %v1768 = vpop.f32.mrf.mxu0
        %v1769 = vpop.f32.mrf.mxu0
        %v1770 = vpop.f32.mrf.mxu0
        %1771 = vdwg.mxu0
        %v1773 = vrot.slane %v1767, 1
        %v1776 = vadd.f32 %v1723, %v1767
        %v1777 = vadd.f32 %v1724, %v1773
        %v1778 = vmul.f32 %v1776, 0.5
        %v1779 = vmul.f32 %v1777, 0.5
        %v1782 = vrot.slane %v1777, 7
        %v1783 = vsel %vm497, %v1782, %v1776
        %v1787 = vrot.slane %v1779, 7
        %v1788 = vsel %vm497, %v1787, %v1778
        %v1790 = vsel %vm493, %v1783, %v1788
        %v1791 = vtanh.pop %v1790
        %v1792 = vadd.f32 %v1791, 1.0
        %v1793 = vmul.f32 %v1792, 0.5
        %v1794 = vsel %vm493, %v1791, %v1793
        %v1795 = vmul.f32 %v1794, %v1716
        %1797 = vrot.lane.b32.xlu0 %v1794, 64
        %v1798 = vpop.permute.xlu0 %1797
        %v1800 = vmul.f32 %v1794, %v1798
        %1802 = vrot.lane.b32.xlu0 %v1800, 32
        %v1803 = vpop.permute.xlu0 %1802
        %v1805 = vadd.f32 %v1795, %v1803
        %v1806 = vtanh.pop %v1805
        %1808 = vrot.lane.b32.xlu0 %v1806, 64
        %v1809 = vpop.permute.xlu0 %1808
        %v1811 = vmul.f32 %v1794, %v1809
        %v1812 = vld [vmem:[#allocation2 + $0xc] sm:$0x1]
        %v1813 = vld [vmem:[#allocation2 + $0x2c] sm:$0x1]
        %v1814 = vpack.c.bf16 %v1811, %v1811
        %1816 = vrot.lane.b32.xlu0 %v1814, 32
        %v1817 = vpop.permute.xlu0 %1816
        %v1819 = vsel %vm440, %v1817, 0
        %1821 = vmatprep.subr.bf16.mxu0 0
        %1822 = vmatpush1.bf16.msra.mxu0 0
        %1823 = vmatprep.subr.bf16.mxu0 0
        %1824 = vmatpush1.bf16.msra.mxu0 0
        %1825 = vmatprep.subr.bf16.mxu0 0
        %1826 = vmatpush1.bf16.msra.mxu0 0
        %1827 = vmatprep.subr.bf16.mxu0 0
        %1828 = vmatpush1.bf16.msra.mxu0 0
        %1829 = vmatprep.subr.bf16.mxu0 0
        %1830 = vmatpush1.bf16.msra.mxu0 0
        %1831 = vmatprep.subr.bf16.mxu0 0
        %1832 = vmatpush1.bf16.msra.mxu0 0
        %1833 = vmatprep.subr.bf16.mxu0 0
        %1834 = vmatpush1.bf16.msra.mxu0 %v1459
        %1835 = vmatprep.subr.bf16.mxu0 0
        %1836 = vmatpush1.bf16.msra.mxu0 %v1458
        %1837 = vmatprep.subr.bf16.mxu0 0
        %1838 = vmatpush2.bf16.msra.mxu0 0
        %1839 = vmatprep.subr.bf16.mxu0 0
        %1840 = vmatpush2.bf16.msra.mxu0 0
        %1841 = vmatprep.subr.bf16.mxu0 0
        %1842 = vmatpush2.bf16.msra.mxu0 0
        %1843 = vmatprep.subr.bf16.mxu0 0
        %1844 = vmatpush2.bf16.msra.mxu0 0
        %1845 = vmatprep.subr.bf16.mxu0 0
        %1846 = vmatpush2.bf16.msra.mxu0 0
        %1847 = vmatprep.subr.bf16.mxu0 0
        %1848 = vmatpush2.bf16.msra.mxu0 0
        %1849 = vmatprep.subr.bf16.mxu0 0
        %1850 = vmatpush2.bf16.msra.mxu0 0
        %1851 = vmatprep.subr.bf16.mxu0 0
        %1852 = vmatpush2.bf16.msra.mxu0 0
        %1853 = vmatprep.mubr.bf16.mxu0 0
        %1854 = vmatmul.mubr.bf16.gmra.mxu0 %v1819
        %v1855 = vpop.f32.mrf.mxu0
        %v1856 = vadd.f32 0.0, %v1855
        %v1857 = vpop.f32.mrf.mxu0
        %v1858 = vpop.f32.mrf.mxu0
        %v1859 = vpop.f32.mrf.mxu0
        %1860 = vdwg.mxu0
        %v1862 = vrot.slane %v1856, 1
        %v1865 = vadd.f32 %v1812, %v1856
        %v1866 = vadd.f32 %v1813, %v1862
        %v1867 = vmul.f32 %v1865, 0.5
        %v1868 = vmul.f32 %v1866, 0.5
        %v1871 = vrot.slane %v1866, 7
        %v1872 = vsel %vm497, %v1871, %v1865
        %v1876 = vrot.slane %v1868, 7
        %v1877 = vsel %vm497, %v1876, %v1867
        %v1879 = vsel %vm493, %v1872, %v1877
        %v1880 = vtanh.pop %v1879
        %v1881 = vadd.f32 %v1880, 1.0
        %v1882 = vmul.f32 %v1881, 0.5
        %v1883 = vsel %vm493, %v1880, %v1882
        %v1884 = vmul.f32 %v1883, %v1805
        %1886 = vrot.lane.b32.xlu0 %v1883, 64
        %v1887 = vpop.permute.xlu0 %1886
        %v1889 = vmul.f32 %v1883, %v1887
        %1891 = vrot.lane.b32.xlu0 %v1889, 32
        %v1892 = vpop.permute.xlu0 %1891
        %v1894 = vadd.f32 %v1884, %v1892
        %v1895 = vtanh.pop %v1894
        %1897 = vrot.lane.b32.xlu0 %v1895, 64
        %v1898 = vpop.permute.xlu0 %1897
        %v1900 = vmul.f32 %v1883, %v1898
        %v1901 = vld [vmem:[#allocation2 + $0xd] sm:$0x1]
        %v1902 = vld [vmem:[#allocation2 + $0x2d] sm:$0x1]
        %v1903 = vpack.c.bf16 %v1900, %v1900
        %1905 = vrot.lane.b32.xlu0 %v1903, 32
        %v1906 = vpop.permute.xlu0 %1905
        %v1908 = vsel %vm440, %v1906, 0
        %1910 = vmatprep.subr.bf16.mxu0 0
        %1911 = vmatpush1.bf16.msra.mxu0 0
        %1912 = vmatprep.subr.bf16.mxu0 0
        %1913 = vmatpush1.bf16.msra.mxu0 0
        %1914 = vmatprep.subr.bf16.mxu0 0
        %1915 = vmatpush1.bf16.msra.mxu0 0
        %1916 = vmatprep.subr.bf16.mxu0 0
        %1917 = vmatpush1.bf16.msra.mxu0 0
        %1918 = vmatprep.subr.bf16.mxu0 0
        %1919 = vmatpush1.bf16.msra.mxu0 0
        %1920 = vmatprep.subr.bf16.mxu0 0
        %1921 = vmatpush1.bf16.msra.mxu0 0
        %1922 = vmatprep.subr.bf16.mxu0 0
        %1923 = vmatpush1.bf16.msra.mxu0 %v1459
        %1924 = vmatprep.subr.bf16.mxu0 0
        %1925 = vmatpush1.bf16.msra.mxu0 %v1458
        %1926 = vmatprep.subr.bf16.mxu0 0
        %1927 = vmatpush2.bf16.msra.mxu0 0
        %1928 = vmatprep.subr.bf16.mxu0 0
        %1929 = vmatpush2.bf16.msra.mxu0 0
        %1930 = vmatprep.subr.bf16.mxu0 0
        %1931 = vmatpush2.bf16.msra.mxu0 0
        %1932 = vmatprep.subr.bf16.mxu0 0
        %1933 = vmatpush2.bf16.msra.mxu0 0
        %1934 = vmatprep.subr.bf16.mxu0 0
        %1935 = vmatpush2.bf16.msra.mxu0 0
        %1936 = vmatprep.subr.bf16.mxu0 0
        %1937 = vmatpush2.bf16.msra.mxu0 0
        %1938 = vmatprep.subr.bf16.mxu0 0
        %1939 = vmatpush2.bf16.msra.mxu0 0
        %1940 = vmatprep.subr.bf16.mxu0 0
        %1941 = vmatpush2.bf16.msra.mxu0 0
        %1942 = vmatprep.mubr.bf16.mxu0 0
        %1943 = vmatmul.mubr.bf16.gmra.mxu0 %v1908
        %v1944 = vpop.f32.mrf.mxu0
        %v1945 = vadd.f32 0.0, %v1944
        %v1946 = vpop.f32.mrf.mxu0
        %v1947 = vpop.f32.mrf.mxu0
        %v1948 = vpop.f32.mrf.mxu0
        %1949 = vdwg.mxu0
        %v1951 = vrot.slane %v1945, 1
        %v1954 = vadd.f32 %v1901, %v1945
        %v1955 = vadd.f32 %v1902, %v1951
        %v1956 = vmul.f32 %v1954, 0.5
        %v1957 = vmul.f32 %v1955, 0.5
        %v1960 = vrot.slane %v1955, 7
        %v1961 = vsel %vm497, %v1960, %v1954
        %v1965 = vrot.slane %v1957, 7
        %v1966 = vsel %vm497, %v1965, %v1956
        %v1968 = vsel %vm493, %v1961, %v1966
        %v1969 = vtanh.pop %v1968
        %v1970 = vadd.f32 %v1969, 1.0
        %v1971 = vmul.f32 %v1970, 0.5
        %v1972 = vsel %vm493, %v1969, %v1971
        %v1973 = vmul.f32 %v1972, %v1894
        %1975 = vrot.lane.b32.xlu0 %v1972, 64
        %v1976 = vpop.permute.xlu0 %1975
        %v1978 = vmul.f32 %v1972, %v1976
        %1980 = vrot.lane.b32.xlu0 %v1978, 32
        %v1981 = vpop.permute.xlu0 %1980
        %v1983 = vadd.f32 %v1973, %v1981
        %v1984 = vtanh.pop %v1983
        %1986 = vrot.lane.b32.xlu0 %v1984, 64
        %v1987 = vpop.permute.xlu0 %1986
        %v1989 = vmul.f32 %v1972, %v1987
        %v1990 = vld [vmem:[#allocation2 + $0xe] sm:$0x1]
        %v1991 = vld [vmem:[#allocation2 + $0x2e] sm:$0x1]
        %v1992 = vpack.c.bf16 %v1989, %v1989
        %1994 = vrot.lane.b32.xlu0 %v1992, 32
        %v1995 = vpop.permute.xlu0 %1994
        %v1997 = vsel %vm440, %v1995, 0
        %1999 = vmatprep.subr.bf16.mxu0 0
        %2000 = vmatpush1.bf16.msra.mxu0 0
        %2001 = vmatprep.subr.bf16.mxu0 0
        %2002 = vmatpush1.bf16.msra.mxu0 0
        %2003 = vmatprep.subr.bf16.mxu0 0
        %2004 = vmatpush1.bf16.msra.mxu0 0
        %2005 = vmatprep.subr.bf16.mxu0 0
        %2006 = vmatpush1.bf16.msra.mxu0 0
        %2007 = vmatprep.subr.bf16.mxu0 0
        %2008 = vmatpush1.bf16.msra.mxu0 0
        %2009 = vmatprep.subr.bf16.mxu0 0
        %2010 = vmatpush1.bf16.msra.mxu0 0
        %2011 = vmatprep.subr.bf16.mxu0 0
        %2012 = vmatpush1.bf16.msra.mxu0 %v1459
        %2013 = vmatprep.subr.bf16.mxu0 0
        %2014 = vmatpush1.bf16.msra.mxu0 %v1458
        %2015 = vmatprep.subr.bf16.mxu0 0
        %2016 = vmatpush2.bf16.msra.mxu0 0
        %2017 = vmatprep.subr.bf16.mxu0 0
        %2018 = vmatpush2.bf16.msra.mxu0 0
        %2019 = vmatprep.subr.bf16.mxu0 0
        %2020 = vmatpush2.bf16.msra.mxu0 0
        %2021 = vmatprep.subr.bf16.mxu0 0
        %2022 = vmatpush2.bf16.msra.mxu0 0
        %2023 = vmatprep.subr.bf16.mxu0 0
        %2024 = vmatpush2.bf16.msra.mxu0 0
        %2025 = vmatprep.subr.bf16.mxu0 0
        %2026 = vmatpush2.bf16.msra.mxu0 0
        %2027 = vmatprep.subr.bf16.mxu0 0
        %2028 = vmatpush2.bf16.msra.mxu0 0
        %2029 = vmatprep.subr.bf16.mxu0 0
        %2030 = vmatpush2.bf16.msra.mxu0 0
        %2031 = vmatprep.mubr.bf16.mxu0 0
        %2032 = vmatmul.mubr.bf16.gmra.mxu0 %v1997
        %v2033 = vpop.f32.mrf.mxu0
        %v2034 = vadd.f32 0.0, %v2033
        %v2035 = vpop.f32.mrf.mxu0
        %v2036 = vpop.f32.mrf.mxu0
        %v2037 = vpop.f32.mrf.mxu0
        %2038 = vdwg.mxu0
        %v2040 = vrot.slane %v2034, 1
        %v2043 = vadd.f32 %v1990, %v2034
        %v2044 = vadd.f32 %v1991, %v2040
        %v2045 = vmul.f32 %v2043, 0.5
        %v2046 = vmul.f32 %v2044, 0.5
        %v2049 = vrot.slane %v2044, 7
        %v2050 = vsel %vm497, %v2049, %v2043
        %v2054 = vrot.slane %v2046, 7
        %v2055 = vsel %vm497, %v2054, %v2045
        %v2057 = vsel %vm493, %v2050, %v2055
        %v2058 = vtanh.pop %v2057
        %v2059 = vadd.f32 %v2058, 1.0
        %v2060 = vmul.f32 %v2059, 0.5
        %v2061 = vsel %vm493, %v2058, %v2060
        %v2062 = vmul.f32 %v2061, %v1983
        %2064 = vrot.lane.b32.xlu0 %v2061, 64
        %v2065 = vpop.permute.xlu0 %2064
        %v2067 = vmul.f32 %v2061, %v2065
        %2069 = vrot.lane.b32.xlu0 %v2067, 32
        %v2070 = vpop.permute.xlu0 %2069
        %v2072 = vadd.f32 %v2062, %v2070
        %v2073 = vtanh.pop %v2072
        %2075 = vrot.lane.b32.xlu0 %v2073, 64
        %v2076 = vpop.permute.xlu0 %2075
        %v2078 = vmul.f32 %v2061, %v2076
        %v2079 = vld [vmem:[#allocation2 + $0xf] sm:$0x1]
        %v2080 = vld [vmem:[#allocation2 + $0x2f] sm:$0x1]
        %v2081 = vpack.c.bf16 %v2078, %v2078
        %2083 = vrot.lane.b32.xlu0 %v2081, 32
        %v2084 = vpop.permute.xlu0 %2083
        %v2086 = vsel %vm440, %v2084, 0
        %2088 = vmatprep.subr.bf16.mxu0 0
        %2089 = vmatpush1.bf16.msra.mxu0 0
        %2090 = vmatprep.subr.bf16.mxu0 0
        %2091 = vmatpush1.bf16.msra.mxu0 0
        %2092 = vmatprep.subr.bf16.mxu0 0
        %2093 = vmatpush1.bf16.msra.mxu0 0
        %2094 = vmatprep.subr.bf16.mxu0 0
        %2095 = vmatpush1.bf16.msra.mxu0 0
        %2096 = vmatprep.subr.bf16.mxu0 0
        %2097 = vmatpush1.bf16.msra.mxu0 0
        %2098 = vmatprep.subr.bf16.mxu0 0
        %2099 = vmatpush1.bf16.msra.mxu0 0
        %2100 = vmatprep.subr.bf16.mxu0 0
        %2101 = vmatpush1.bf16.msra.mxu0 %v1459
        %2102 = vmatprep.subr.bf16.mxu0 0
        %2103 = vmatpush1.bf16.msra.mxu0 %v1458
        %2104 = vmatprep.subr.bf16.mxu0 0
        %2105 = vmatpush2.bf16.msra.mxu0 0
        %2106 = vmatprep.subr.bf16.mxu0 0
        %2107 = vmatpush2.bf16.msra.mxu0 0
        %2108 = vmatprep.subr.bf16.mxu0 0
        %2109 = vmatpush2.bf16.msra.mxu0 0
        %2110 = vmatprep.subr.bf16.mxu0 0
        %2111 = vmatpush2.bf16.msra.mxu0 0
        %2112 = vmatprep.subr.bf16.mxu0 0
        %2113 = vmatpush2.bf16.msra.mxu0 0
        %2114 = vmatprep.subr.bf16.mxu0 0
        %2115 = vmatpush2.bf16.msra.mxu0 0
        %2116 = vmatprep.subr.bf16.mxu0 0
        %2117 = vmatpush2.bf16.msra.mxu0 0
        %2118 = vmatprep.subr.bf16.mxu0 0
        %2119 = vmatpush2.bf16.msra.mxu0 0
        %2120 = vmatprep.mubr.bf16.mxu0 0
        %2121 = vmatmul.mubr.bf16.gmra.mxu0 %v2086
        %v2122 = vpop.f32.mrf.mxu0
        %v2123 = vadd.f32 0.0, %v2122
        %v2124 = vpop.f32.mrf.mxu0
        %v2125 = vpop.f32.mrf.mxu0
        %v2126 = vpop.f32.mrf.mxu0
        %2127 = vdwg.mxu0
        %v2129 = vrot.slane %v2123, 1
        %v2132 = vadd.f32 %v2079, %v2123
        %v2133 = vadd.f32 %v2080, %v2129
        %v2134 = vmul.f32 %v2132, 0.5
        %v2135 = vmul.f32 %v2133, 0.5
        %v2138 = vrot.slane %v2133, 7
        %v2139 = vsel %vm497, %v2138, %v2132
        %v2143 = vrot.slane %v2135, 7
        %v2144 = vsel %vm497, %v2143, %v2134
        %v2146 = vsel %vm493, %v2139, %v2144
        %v2147 = vtanh.pop %v2146
        %v2148 = vadd.f32 %v2147, 1.0
        %v2149 = vmul.f32 %v2148, 0.5
        %v2150 = vsel %vm493, %v2147, %v2149
        %v2151 = vmul.f32 %v2150, %v2072
        %2153 = vrot.lane.b32.xlu0 %v2150, 64
        %v2154 = vpop.permute.xlu0 %2153
        %v2156 = vmul.f32 %v2150, %v2154
        %2158 = vrot.lane.b32.xlu0 %v2156, 32
        %v2159 = vpop.permute.xlu0 %2158
        %v2161 = vadd.f32 %v2151, %v2159
        %v2162 = vtanh.pop %v2161
        %2164 = vrot.lane.b32.xlu0 %v2162, 64
        %v2165 = vpop.permute.xlu0 %2164
        %v2167 = vmul.f32 %v2150, %v2165
        %v2170 = vunpack.c.l.s4 1966171168
        %v2171 = vunpack.c.0.s8 %v2170
        %v2172 = vlaneseq
        %v2173 = vshrl.u32 %v2172, 7
        %v2174 = vsub.s32 %v2171, %v2173
        %v2175 = vrot.slane %v1544, %v2174
        %v2176 = vcombine.high %v2175, %v2175
        %v2178 = vunpack.c.l.s4 1966171168
        %v2179 = vunpack.c.0.s8 %v2178
        %v2180 = vlaneseq
        %v2181 = vshrl.u32 %v2180, 7
        %v2182 = vsub.s32 %v2179, %v2181
        %v2183 = vrot.slane %v2175, %v2182
        %v2185 = vunpack.c.l.s4 1966171168
        %v2186 = vunpack.c.0.s8 %v2185
        %v2187 = vlaneseq
        %v2188 = vshrl.u32 %v2187, 7
        %v2189 = vsub.s32 %v2186, %v2188
        %v2190 = vrot.slane %v2176, %v2189
        %v2195 = vunpack.c.l.s4 1966171168
        %v2196 = vunpack.c.0.s8 %v2195
        %v2197 = vlaneseq
        %v2198 = vshrl.u32 %v2197, 7
        %v2199 = vsub.s32 %v2196, %v2198
        %v2200 = vrot.slane %v1633, %v2199
        %v2201 = vcombine.high %v2200, %v2200
        %v2203 = vunpack.c.l.s4 1966171168
        %v2204 = vunpack.c.0.s8 %v2203
        %v2205 = vlaneseq
        %v2206 = vshrl.u32 %v2205, 7
        %v2207 = vsub.s32 %v2204, %v2206
        %v2208 = vrot.slane %v2200, %v2207
        %v2210 = vunpack.c.l.s4 1966171168
        %v2211 = vunpack.c.0.s8 %v2210
        %v2212 = vlaneseq
        %v2213 = vshrl.u32 %v2212, 7
        %v2214 = vsub.s32 %v2211, %v2213
        %v2215 = vrot.slane %v2201, %v2214
        %v2218 = vunpack.c.l.s4 1966171168
        %v2219 = vunpack.c.0.s8 %v2218
        %v2220 = vlaneseq
        %v2221 = vshrl.u32 %v2220, 7
        %v2222 = vsub.s32 %v2219, %v2221
        %v2223 = vrot.slane %v1722, %v2222
        %v2224 = vcombine.high %v2223, %v2223
        %v2226 = vunpack.c.l.s4 1966171168
        %v2227 = vunpack.c.0.s8 %v2226
        %v2228 = vlaneseq
        %v2229 = vshrl.u32 %v2228, 7
        %v2230 = vsub.s32 %v2227, %v2229
        %v2231 = vrot.slane %v2223, %v2230
        %v2233 = vunpack.c.l.s4 1966171168
        %v2234 = vunpack.c.0.s8 %v2233
        %v2235 = vlaneseq
        %v2236 = vshrl.u32 %v2235, 7
        %v2237 = vsub.s32 %v2234, %v2236
        %v2238 = vrot.slane %v2224, %v2237
        %v2241 = vunpack.c.l.s4 1966171168
        %v2242 = vunpack.c.0.s8 %v2241
        %v2243 = vlaneseq
        %v2244 = vshrl.u32 %v2243, 7
        %v2245 = vsub.s32 %v2242, %v2244
        %v2246 = vrot.slane %v1811, %v2245
        %v2247 = vcombine.high %v2246, %v2246
        %v2249 = vunpack.c.l.s4 1966171168
        %v2250 = vunpack.c.0.s8 %v2249
        %v2251 = vlaneseq
        %v2252 = vshrl.u32 %v2251, 7
        %v2253 = vsub.s32 %v2250, %v2252
        %v2254 = vrot.slane %v2246, %v2253
        %v2256 = vunpack.c.l.s4 1966171168
        %v2257 = vunpack.c.0.s8 %v2256
        %v2258 = vlaneseq
        %v2259 = vshrl.u32 %v2258, 7
        %v2260 = vsub.s32 %v2257, %v2259
        %v2261 = vrot.slane %v2247, %v2260
        %v2264 = vunpack.c.l.s4 1966171168
        %v2265 = vunpack.c.0.s8 %v2264
        %v2266 = vlaneseq
        %v2267 = vshrl.u32 %v2266, 7
        %v2268 = vsub.s32 %v2265, %v2267
        %v2269 = vrot.slane %v1900, %v2268
        %v2270 = vcombine.high %v2269, %v2269
        %v2272 = vunpack.c.l.s4 1966171168
        %v2273 = vunpack.c.0.s8 %v2272
        %v2274 = vlaneseq
        %v2275 = vshrl.u32 %v2274, 7
        %v2276 = vsub.s32 %v2273, %v2275
        %v2277 = vrot.slane %v2269, %v2276
        %v2279 = vunpack.c.l.s4 1966171168
        %v2280 = vunpack.c.0.s8 %v2279
        %v2281 = vlaneseq
        %v2282 = vshrl.u32 %v2281, 7
        %v2283 = vsub.s32 %v2280, %v2282
        %v2284 = vrot.slane %v2270, %v2283
        %v2287 = vunpack.c.l.s4 1966171168
        %v2288 = vunpack.c.0.s8 %v2287
        %v2289 = vlaneseq
        %v2290 = vshrl.u32 %v2289, 7
        %v2291 = vsub.s32 %v2288, %v2290
        %v2292 = vrot.slane %v1989, %v2291
        %v2293 = vcombine.high %v2292, %v2292
        %v2295 = vunpack.c.l.s4 1966171168
        %v2296 = vunpack.c.0.s8 %v2295
        %v2297 = vlaneseq
        %v2298 = vshrl.u32 %v2297, 7
        %v2299 = vsub.s32 %v2296, %v2298
        %v2300 = vrot.slane %v2292, %v2299
        %v2302 = vunpack.c.l.s4 1966171168
        %v2303 = vunpack.c.0.s8 %v2302
        %v2304 = vlaneseq
        %v2305 = vshrl.u32 %v2304, 7
        %v2306 = vsub.s32 %v2303, %v2305
        %v2307 = vrot.slane %v2293, %v2306
        %v2310 = vunpack.c.l.s4 1966171168
        %v2311 = vunpack.c.0.s8 %v2310
        %v2312 = vlaneseq
        %v2313 = vshrl.u32 %v2312, 7
        %v2314 = vsub.s32 %v2311, %v2313
        %v2315 = vrot.slane %v2078, %v2314
        %v2316 = vcombine.high %v2315, %v2315
        %v2318 = vunpack.c.l.s4 1966171168
        %v2319 = vunpack.c.0.s8 %v2318
        %v2320 = vlaneseq
        %v2321 = vshrl.u32 %v2320, 7
        %v2322 = vsub.s32 %v2319, %v2321
        %v2323 = vrot.slane %v2315, %v2322
        %v2325 = vunpack.c.l.s4 1966171168
        %v2326 = vunpack.c.0.s8 %v2325
        %v2327 = vlaneseq
        %v2328 = vshrl.u32 %v2327, 7
        %v2329 = vsub.s32 %v2326, %v2328
        %v2330 = vrot.slane %v2316, %v2329
        %v2333 = vunpack.c.l.s4 1966171168
        %v2334 = vunpack.c.0.s8 %v2333
        %v2335 = vlaneseq
        %v2336 = vshrl.u32 %v2335, 7
        %v2337 = vsub.s32 %v2334, %v2336
        %v2338 = vrot.slane %v2167, %v2337
        %v2339 = vcombine.high %v2338, %v2338
        %v2341 = vunpack.c.l.s4 1966171168
        %v2342 = vunpack.c.0.s8 %v2341
        %v2343 = vlaneseq
        %v2344 = vshrl.u32 %v2343, 7
        %v2345 = vsub.s32 %v2342, %v2344
        %v2346 = vrot.slane %v2338, %v2345
        %v2348 = vunpack.c.l.s4 1966171168
        %v2349 = vunpack.c.0.s8 %v2348
        %v2350 = vlaneseq
        %v2351 = vshrl.u32 %v2350, 7
        %v2352 = vsub.s32 %v2349, %v2351
        %v2353 = vrot.slane %v2339, %v2352
        %v2354 = vlaneseq
        %v2355 = vshrl.u32 %v2354, 7
        %v2356 = vsub.s32 0, %v2355
        %v2357 = vrot.slane %v2208, %v2356
        %v2358 = vlaneseq
        %v2359 = vshrl.u32 %v2358, 7
        %v2360 = vsub.s32 0, %v2359
        %v2361 = vrot.slane %v2215, %v2360
        %v2364 = vlaneseq
        %v2365 = vshrl.u32 %v2364, 7
        %v2366 = vsub.s32 0, %v2365
        %v2367 = vrot.slane %v2231, %v2366
        %v2368 = vlaneseq
        %v2369 = vshrl.u32 %v2368, 7
        %v2370 = vsub.s32 0, %v2369
        %v2371 = vrot.slane %v2238, %v2370
        %v2374 = vlaneseq
        %v2375 = vshrl.u32 %v2374, 7
        %v2376 = vsub.s32 0, %v2375
        %v2377 = vrot.slane %v2254, %v2376
        %v2378 = vlaneseq
        %v2379 = vshrl.u32 %v2378, 7
        %v2380 = vsub.s32 0, %v2379
        %v2381 = vrot.slane %v2261, %v2380
        %v2384 = vlaneseq
        %v2385 = vshrl.u32 %v2384, 7
        %v2386 = vsub.s32 0, %v2385
        %v2387 = vrot.slane %v2277, %v2386
        %v2388 = vlaneseq
        %v2389 = vshrl.u32 %v2388, 7
        %v2390 = vsub.s32 0, %v2389
        %v2391 = vrot.slane %v2284, %v2390
        %v2394 = vlaneseq
        %v2395 = vshrl.u32 %v2394, 7
        %v2396 = vsub.s32 0, %v2395
        %v2397 = vrot.slane %v2300, %v2396
        %v2398 = vlaneseq
        %v2399 = vshrl.u32 %v2398, 7
        %v2400 = vsub.s32 0, %v2399
        %v2401 = vrot.slane %v2307, %v2400
        %v2404 = vlaneseq
        %v2405 = vshrl.u32 %v2404, 7
        %v2406 = vsub.s32 0, %v2405
        %v2407 = vrot.slane %v2323, %v2406
        %v2408 = vlaneseq
        %v2409 = vshrl.u32 %v2408, 7
        %v2410 = vsub.s32 0, %v2409
        %v2411 = vrot.slane %v2330, %v2410
        %v2414 = vlaneseq
        %v2415 = vshrl.u32 %v2414, 7
        %v2416 = vsub.s32 0, %v2415
        %v2417 = vrot.slane %v2346, %v2416
        %v2418 = vlaneseq
        %v2419 = vshrl.u32 %v2418, 7
        %v2420 = vsub.s32 0, %v2419
        %v2421 = vrot.slane %v2353, %v2420
        %v2424 = vsel %vm1410, %v2183, %v2357
        %v2425 = vsel %vm1410, %v2190, %v2361
        %v2426 = vsel %vm1413, %v2424, %v2367
        %v2427 = vsel %vm1413, %v2425, %v2371
        %v2428 = vsel %vm1416, %v2426, %v2377
        %v2429 = vsel %vm1416, %v2427, %v2381
        %v2430 = vsel %vm1419, %v2428, %v2387
        %v2431 = vsel %vm1419, %v2429, %v2391
        %v2432 = vsel %vm1422, %v2430, %v2397
        %v2433 = vsel %vm1422, %v2431, %v2401
        %v2434 = vsel %vm322, %v2432, %v2407
        %v2435 = vsel %vm322, %v2433, %v2411
        %v2436 = vsel %vm1427, %v2434, %v2417
        %v2437 = vsel %vm1427, %v2435, %v2421
        %2440 = vrot.lane.b32.xlu0 %v2436, 32
        %v2441 = vpop.permute.xlu0 %2440
        %2442 = vrot.lane.b32.xlu0 %v2437, 32
        %v2443 = vpop.permute.xlu0 %2442
        %2446 = vst.msk [vmem:[%s263 + $0x8] sm:$0xff] %vm440, %v2441
        %2447 = vst.msk [vmem:[%s263 + $0x28] sm:$0xff] %vm440, %v2443
        %v2448 = vld [vmem:[#allocation2 + $0x10] sm:$0x1]
        %v2449 = vld [vmem:[#allocation2 + $0x30] sm:$0x1]
        %v2450 = vpack.c.bf16 %v2167, %v2167
        %v2451 = vld [vmem:[%s2] sm:$0xf]
        %v2452 = vld [vmem:[%s2 + $0x4] sm:$0xf]
        %v2453 = vld [vmem:[%s2 + $0x8] sm:$0xf]
        %v2454 = vld [vmem:[%s2 + $0xc] sm:$0xf]
        %2456 = vrot.lane.b32.xlu0 %v2450, 32
        %v2457 = vpop.permute.xlu0 %2456
        %v2462 = vunpack.c.l.b16 %v2451
        %v2463 = vunpack.c.l.b16 %v2452
        %v2464 = vunpack.c.l.b16 %v2453
        %v2465 = vunpack.c.l.b16 %v2454
        %v2466 = vpack.c.b16 %v2463, %v2462
        %v2467 = vpack.c.b16 %v2465, %v2464
        %v2471 = vsel %vm440, %v2457, 0
        %2473 = vmatprep.subr.bf16.mxu0 0
        %2474 = vmatpush1.bf16.msra.mxu0 0
        %2475 = vmatprep.subr.bf16.mxu0 0
        %2476 = vmatpush1.bf16.msra.mxu0 0
        %2477 = vmatprep.subr.bf16.mxu0 0
        %2478 = vmatpush1.bf16.msra.mxu0 0
        %2479 = vmatprep.subr.bf16.mxu0 0
        %2480 = vmatpush1.bf16.msra.mxu0 0
        %2481 = vmatprep.subr.bf16.mxu0 0
        %2482 = vmatpush1.bf16.msra.mxu0 0
        %2483 = vmatprep.subr.bf16.mxu0 0
        %2484 = vmatpush1.bf16.msra.mxu0 0
        %2485 = vmatprep.subr.bf16.mxu0 0
        %2486 = vmatpush1.bf16.msra.mxu0 %v2467
        %2487 = vmatprep.subr.bf16.mxu0 0
        %2488 = vmatpush1.bf16.msra.mxu0 %v2466
        %2489 = vmatprep.subr.bf16.mxu0 0
        %2490 = vmatpush2.bf16.msra.mxu0 0
        %2491 = vmatprep.subr.bf16.mxu0 0
        %2492 = vmatpush2.bf16.msra.mxu0 0
        %2493 = vmatprep.subr.bf16.mxu0 0
        %2494 = vmatpush2.bf16.msra.mxu0 0
        %2495 = vmatprep.subr.bf16.mxu0 0
        %2496 = vmatpush2.bf16.msra.mxu0 0
        %2497 = vmatprep.subr.bf16.mxu0 0
        %2498 = vmatpush2.bf16.msra.mxu0 0
        %2499 = vmatprep.subr.bf16.mxu0 0
        %2500 = vmatpush2.bf16.msra.mxu0 0
        %2501 = vmatprep.subr.bf16.mxu0 0
        %2502 = vmatpush2.bf16.msra.mxu0 0
        %2503 = vmatprep.subr.bf16.mxu0 0
        %2504 = vmatpush2.bf16.msra.mxu0 0
        %2505 = vmatprep.mubr.bf16.mxu0 0
        %2506 = vmatmul.mubr.bf16.gmra.mxu0 %v2471
        %v2507 = vpop.f32.mrf.mxu0
        %v2508 = vadd.f32 0.0, %v2507
        %v2509 = vpop.f32.mrf.mxu0
        %v2510 = vpop.f32.mrf.mxu0
        %v2511 = vpop.f32.mrf.mxu0
        %2512 = vdwg.mxu0
        %v2514 = vrot.slane %v2508, 1
        %v2517 = vadd.f32 %v2448, %v2508
        %v2518 = vadd.f32 %v2449, %v2514
        %v2519 = vmul.f32 %v2517, 0.5
        %v2520 = vmul.f32 %v2518, 0.5
        %v2523 = vrot.slane %v2518, 7
        %v2524 = vsel %vm497, %v2523, %v2517
        %v2528 = vrot.slane %v2520, 7
        %v2529 = vsel %vm497, %v2528, %v2519
        %v2531 = vsel %vm493, %v2524, %v2529
        %v2532 = vtanh.pop %v2531
        %v2533 = vadd.f32 %v2532, 1.0
        %v2534 = vmul.f32 %v2533, 0.5
        %v2535 = vsel %vm493, %v2532, %v2534
        %v2536 = vmul.f32 %v2535, %v2161
        %2538 = vrot.lane.b32.xlu0 %v2535, 64
        %v2539 = vpop.permute.xlu0 %2538
        %v2541 = vmul.f32 %v2535, %v2539
        %2543 = vrot.lane.b32.xlu0 %v2541, 32
        %v2544 = vpop.permute.xlu0 %2543
        %v2546 = vadd.f32 %v2536, %v2544
        %v2547 = vtanh.pop %v2546
        %2549 = vrot.lane.b32.xlu0 %v2547, 64
        %v2550 = vpop.permute.xlu0 %2549
        %v2552 = vmul.f32 %v2535, %v2550
        %v2553 = vld [vmem:[#allocation2 + $0x11] sm:$0x1]
        %v2554 = vld [vmem:[#allocation2 + $0x31] sm:$0x1]
        %v2555 = vpack.c.bf16 %v2552, %v2552
        %2557 = vrot.lane.b32.xlu0 %v2555, 32
        %v2558 = vpop.permute.xlu0 %2557
        %v2560 = vsel %vm440, %v2558, 0
        %2562 = vmatprep.subr.bf16.mxu0 0
        %2563 = vmatpush1.bf16.msra.mxu0 0
        %2564 = vmatprep.subr.bf16.mxu0 0
        %2565 = vmatpush1.bf16.msra.mxu0 0
        %2566 = vmatprep.subr.bf16.mxu0 0
        %2567 = vmatpush1.bf16.msra.mxu0 0
        %2568 = vmatprep.subr.bf16.mxu0 0
        %2569 = vmatpush1.bf16.msra.mxu0 0
        %2570 = vmatprep.subr.bf16.mxu0 0
        %2571 = vmatpush1.bf16.msra.mxu0 0
        %2572 = vmatprep.subr.bf16.mxu0 0
        %2573 = vmatpush1.bf16.msra.mxu0 0
        %2574 = vmatprep.subr.bf16.mxu0 0
        %2575 = vmatpush1.bf16.msra.mxu0 %v2467
        %2576 = vmatprep.subr.bf16.mxu0 0
        %2577 = vmatpush1.bf16.msra.mxu0 %v2466
        %2578 = vmatprep.subr.bf16.mxu0 0
        %2579 = vmatpush2.bf16.msra.mxu0 0
        %2580 = vmatprep.subr.bf16.mxu0 0
        %2581 = vmatpush2.bf16.msra.mxu0 0
        %2582 = vmatprep.subr.bf16.mxu0 0
        %2583 = vmatpush2.bf16.msra.mxu0 0
        %2584 = vmatprep.subr.bf16.mxu0 0
        %2585 = vmatpush2.bf16.msra.mxu0 0
        %2586 = vmatprep.subr.bf16.mxu0 0
        %2587 = vmatpush2.bf16.msra.mxu0 0
        %2588 = vmatprep.subr.bf16.mxu0 0
        %2589 = vmatpush2.bf16.msra.mxu0 0
        %2590 = vmatprep.subr.bf16.mxu0 0
        %2591 = vmatpush2.bf16.msra.mxu0 0
        %2592 = vmatprep.subr.bf16.mxu0 0
        %2593 = vmatpush2.bf16.msra.mxu0 0
        %2594 = vmatprep.mubr.bf16.mxu0 0
        %2595 = vmatmul.mubr.bf16.gmra.mxu0 %v2560
        %v2596 = vpop.f32.mrf.mxu0
        %v2597 = vadd.f32 0.0, %v2596
        %v2598 = vpop.f32.mrf.mxu0
        %v2599 = vpop.f32.mrf.mxu0
        %v2600 = vpop.f32.mrf.mxu0
        %2601 = vdwg.mxu0
        %v2603 = vrot.slane %v2597, 1
        %v2606 = vadd.f32 %v2553, %v2597
        %v2607 = vadd.f32 %v2554, %v2603
        %v2608 = vmul.f32 %v2606, 0.5
        %v2609 = vmul.f32 %v2607, 0.5
        %v2612 = vrot.slane %v2607, 7
        %v2613 = vsel %vm497, %v2612, %v2606
        %v2617 = vrot.slane %v2609, 7
        %v2618 = vsel %vm497, %v2617, %v2608
        %v2620 = vsel %vm493, %v2613, %v2618
        %v2621 = vtanh.pop %v2620
        %v2622 = vadd.f32 %v2621, 1.0
        %v2623 = vmul.f32 %v2622, 0.5
        %v2624 = vsel %vm493, %v2621, %v2623
        %v2625 = vmul.f32 %v2624, %v2546
        %2627 = vrot.lane.b32.xlu0 %v2624, 64
        %v2628 = vpop.permute.xlu0 %2627
        %v2630 = vmul.f32 %v2624, %v2628
        %2632 = vrot.lane.b32.xlu0 %v2630, 32
        %v2633 = vpop.permute.xlu0 %2632
        %v2635 = vadd.f32 %v2625, %v2633
        %v2636 = vtanh.pop %v2635
        %2638 = vrot.lane.b32.xlu0 %v2636, 64
        %v2639 = vpop.permute.xlu0 %2638
        %v2641 = vmul.f32 %v2624, %v2639
        %v2642 = vld [vmem:[#allocation2 + $0x12] sm:$0x1]
        %v2643 = vld [vmem:[#allocation2 + $0x32] sm:$0x1]
        %v2644 = vpack.c.bf16 %v2641, %v2641
        %2646 = vrot.lane.b32.xlu0 %v2644, 32
        %v2647 = vpop.permute.xlu0 %2646
        %v2649 = vsel %vm440, %v2647, 0
        %2651 = vmatprep.subr.bf16.mxu0 0
        %2652 = vmatpush1.bf16.msra.mxu0 0
        %2653 = vmatprep.subr.bf16.mxu0 0
        %2654 = vmatpush1.bf16.msra.mxu0 0
        %2655 = vmatprep.subr.bf16.mxu0 0
        %2656 = vmatpush1.bf16.msra.mxu0 0
        %2657 = vmatprep.subr.bf16.mxu0 0
        %2658 = vmatpush1.bf16.msra.mxu0 0
        %2659 = vmatprep.subr.bf16.mxu0 0
        %2660 = vmatpush1.bf16.msra.mxu0 0
        %2661 = vmatprep.subr.bf16.mxu0 0
        %2662 = vmatpush1.bf16.msra.mxu0 0
        %2663 = vmatprep.subr.bf16.mxu0 0
        %2664 = vmatpush1.bf16.msra.mxu0 %v2467
        %2665 = vmatprep.subr.bf16.mxu0 0
        %2666 = vmatpush1.bf16.msra.mxu0 %v2466
        %2667 = vmatprep.subr.bf16.mxu0 0
        %2668 = vmatpush2.bf16.msra.mxu0 0
        %2669 = vmatprep.subr.bf16.mxu0 0
        %2670 = vmatpush2.bf16.msra.mxu0 0
        %2671 = vmatprep.subr.bf16.mxu0 0
        %2672 = vmatpush2.bf16.msra.mxu0 0
        %2673 = vmatprep.subr.bf16.mxu0 0
        %2674 = vmatpush2.bf16.msra.mxu0 0
        %2675 = vmatprep.subr.bf16.mxu0 0
        %2676 = vmatpush2.bf16.msra.mxu0 0
        %2677 = vmatprep.subr.bf16.mxu0 0
        %2678 = vmatpush2.bf16.msra.mxu0 0
        %2679 = vmatprep.subr.bf16.mxu0 0
        %2680 = vmatpush2.bf16.msra.mxu0 0
        %2681 = vmatprep.subr.bf16.mxu0 0
        %2682 = vmatpush2.bf16.msra.mxu0 0
        %2683 = vmatprep.mubr.bf16.mxu0 0
        %2684 = vmatmul.mubr.bf16.gmra.mxu0 %v2649
        %v2685 = vpop.f32.mrf.mxu0
        %v2686 = vadd.f32 0.0, %v2685
        %v2687 = vpop.f32.mrf.mxu0
        %v2688 = vpop.f32.mrf.mxu0
        %v2689 = vpop.f32.mrf.mxu0
        %2690 = vdwg.mxu0
        %v2692 = vrot.slane %v2686, 1
        %v2695 = vadd.f32 %v2642, %v2686
        %v2696 = vadd.f32 %v2643, %v2692
        %v2697 = vmul.f32 %v2695, 0.5
        %v2698 = vmul.f32 %v2696, 0.5
        %v2701 = vrot.slane %v2696, 7
        %v2702 = vsel %vm497, %v2701, %v2695
        %v2706 = vrot.slane %v2698, 7
        %v2707 = vsel %vm497, %v2706, %v2697
        %v2709 = vsel %vm493, %v2702, %v2707
        %v2710 = vtanh.pop %v2709
        %v2711 = vadd.f32 %v2710, 1.0
        %v2712 = vmul.f32 %v2711, 0.5
        %v2713 = vsel %vm493, %v2710, %v2712
        %v2714 = vmul.f32 %v2713, %v2635
        %2716 = vrot.lane.b32.xlu0 %v2713, 64
        %v2717 = vpop.permute.xlu0 %2716
        %v2719 = vmul.f32 %v2713, %v2717
        %2721 = vrot.lane.b32.xlu0 %v2719, 32
        %v2722 = vpop.permute.xlu0 %2721
        %v2724 = vadd.f32 %v2714, %v2722
        %v2725 = vtanh.pop %v2724
        %2727 = vrot.lane.b32.xlu0 %v2725, 64
        %v2728 = vpop.permute.xlu0 %2727
        %v2730 = vmul.f32 %v2713, %v2728
        %v2731 = vld [vmem:[#allocation2 + $0x13] sm:$0x1]
        %v2732 = vld [vmem:[#allocation2 + $0x33] sm:$0x1]
        %v2733 = vpack.c.bf16 %v2730, %v2730
        %2735 = vrot.lane.b32.xlu0 %v2733, 32
        %v2736 = vpop.permute.xlu0 %2735
        %v2738 = vsel %vm440, %v2736, 0
        %2740 = vmatprep.subr.bf16.mxu0 0
        %2741 = vmatpush1.bf16.msra.mxu0 0
        %2742 = vmatprep.subr.bf16.mxu0 0
        %2743 = vmatpush1.bf16.msra.mxu0 0
        %2744 = vmatprep.subr.bf16.mxu0 0
        %2745 = vmatpush1.bf16.msra.mxu0 0
        %2746 = vmatprep.subr.bf16.mxu0 0
        %2747 = vmatpush1.bf16.msra.mxu0 0
        %2748 = vmatprep.subr.bf16.mxu0 0
        %2749 = vmatpush1.bf16.msra.mxu0 0
        %2750 = vmatprep.subr.bf16.mxu0 0
        %2751 = vmatpush1.bf16.msra.mxu0 0
        %2752 = vmatprep.subr.bf16.mxu0 0
        %2753 = vmatpush1.bf16.msra.mxu0 %v2467
        %2754 = vmatprep.subr.bf16.mxu0 0
        %2755 = vmatpush1.bf16.msra.mxu0 %v2466
        %2756 = vmatprep.subr.bf16.mxu0 0
        %2757 = vmatpush2.bf16.msra.mxu0 0
        %2758 = vmatprep.subr.bf16.mxu0 0
        %2759 = vmatpush2.bf16.msra.mxu0 0
        %2760 = vmatprep.subr.bf16.mxu0 0
        %2761 = vmatpush2.bf16.msra.mxu0 0
        %2762 = vmatprep.subr.bf16.mxu0 0
        %2763 = vmatpush2.bf16.msra.mxu0 0
        %2764 = vmatprep.subr.bf16.mxu0 0
        %2765 = vmatpush2.bf16.msra.mxu0 0
        %2766 = vmatprep.subr.bf16.mxu0 0
        %2767 = vmatpush2.bf16.msra.mxu0 0
        %2768 = vmatprep.subr.bf16.mxu0 0
        %2769 = vmatpush2.bf16.msra.mxu0 0
        %2770 = vmatprep.subr.bf16.mxu0 0
        %2771 = vmatpush2.bf16.msra.mxu0 0
        %2772 = vmatprep.mubr.bf16.mxu0 0
        %2773 = vmatmul.mubr.bf16.gmra.mxu0 %v2738
        %v2774 = vpop.f32.mrf.mxu0
        %v2775 = vadd.f32 0.0, %v2774
        %v2776 = vpop.f32.mrf.mxu0
        %v2777 = vpop.f32.mrf.mxu0
        %v2778 = vpop.f32.mrf.mxu0
        %2779 = vdwg.mxu0
        %v2781 = vrot.slane %v2775, 1
        %v2784 = vadd.f32 %v2731, %v2775
        %v2785 = vadd.f32 %v2732, %v2781
        %v2786 = vmul.f32 %v2784, 0.5
        %v2787 = vmul.f32 %v2785, 0.5
        %v2790 = vrot.slane %v2785, 7
        %v2791 = vsel %vm497, %v2790, %v2784
        %v2795 = vrot.slane %v2787, 7
        %v2796 = vsel %vm497, %v2795, %v2786
        %v2798 = vsel %vm493, %v2791, %v2796
        %v2799 = vtanh.pop %v2798
        %v2800 = vadd.f32 %v2799, 1.0
        %v2801 = vmul.f32 %v2800, 0.5
        %v2802 = vsel %vm493, %v2799, %v2801
        %v2803 = vmul.f32 %v2802, %v2724
        %2805 = vrot.lane.b32.xlu0 %v2802, 64
        %v2806 = vpop.permute.xlu0 %2805
        %v2808 = vmul.f32 %v2802, %v2806
        %2810 = vrot.lane.b32.xlu0 %v2808, 32
        %v2811 = vpop.permute.xlu0 %2810
        %v2813 = vadd.f32 %v2803, %v2811
        %v2814 = vtanh.pop %v2813
        %2816 = vrot.lane.b32.xlu0 %v2814, 64
        %v2817 = vpop.permute.xlu0 %2816
        %v2819 = vmul.f32 %v2802, %v2817
        %v2820 = vld [vmem:[#allocation2 + $0x14] sm:$0x1]
        %v2821 = vld [vmem:[#allocation2 + $0x34] sm:$0x1]
        %v2822 = vpack.c.bf16 %v2819, %v2819
        %2824 = vrot.lane.b32.xlu0 %v2822, 32
        %v2825 = vpop.permute.xlu0 %2824
        %v2827 = vsel %vm440, %v2825, 0
        %2829 = vmatprep.subr.bf16.mxu0 0
        %2830 = vmatpush1.bf16.msra.mxu0 0
        %2831 = vmatprep.subr.bf16.mxu0 0
        %2832 = vmatpush1.bf16.msra.mxu0 0
        %2833 = vmatprep.subr.bf16.mxu0 0
        %2834 = vmatpush1.bf16.msra.mxu0 0
        %2835 = vmatprep.subr.bf16.mxu0 0
        %2836 = vmatpush1.bf16.msra.mxu0 0
        %2837 = vmatprep.subr.bf16.mxu0 0
        %2838 = vmatpush1.bf16.msra.mxu0 0
        %2839 = vmatprep.subr.bf16.mxu0 0
        %2840 = vmatpush1.bf16.msra.mxu0 0
        %2841 = vmatprep.subr.bf16.mxu0 0
        %2842 = vmatpush1.bf16.msra.mxu0 %v2467
        %2843 = vmatprep.subr.bf16.mxu0 0
        %2844 = vmatpush1.bf16.msra.mxu0 %v2466
        %2845 = vmatprep.subr.bf16.mxu0 0
        %2846 = vmatpush2.bf16.msra.mxu0 0
        %2847 = vmatprep.subr.bf16.mxu0 0
        %2848 = vmatpush2.bf16.msra.mxu0 0
        %2849 = vmatprep.subr.bf16.mxu0 0
        %2850 = vmatpush2.bf16.msra.mxu0 0
        %2851 = vmatprep.subr.bf16.mxu0 0
        %2852 = vmatpush2.bf16.msra.mxu0 0
        %2853 = vmatprep.subr.bf16.mxu0 0
        %2854 = vmatpush2.bf16.msra.mxu0 0
        %2855 = vmatprep.subr.bf16.mxu0 0
        %2856 = vmatpush2.bf16.msra.mxu0 0
        %2857 = vmatprep.subr.bf16.mxu0 0
        %2858 = vmatpush2.bf16.msra.mxu0 0
        %2859 = vmatprep.subr.bf16.mxu0 0
        %2860 = vmatpush2.bf16.msra.mxu0 0
        %2861 = vmatprep.mubr.bf16.mxu0 0
        %2862 = vmatmul.mubr.bf16.gmra.mxu0 %v2827
        %v2863 = vpop.f32.mrf.mxu0
        %v2864 = vadd.f32 0.0, %v2863
        %v2865 = vpop.f32.mrf.mxu0
        %v2866 = vpop.f32.mrf.mxu0
        %v2867 = vpop.f32.mrf.mxu0
        %2868 = vdwg.mxu0
        %v2870 = vrot.slane %v2864, 1
        %v2873 = vadd.f32 %v2820, %v2864
        %v2874 = vadd.f32 %v2821, %v2870
        %v2875 = vmul.f32 %v2873, 0.5
        %v2876 = vmul.f32 %v2874, 0.5
        %v2879 = vrot.slane %v2874, 7
        %v2880 = vsel %vm497, %v2879, %v2873
        %v2884 = vrot.slane %v2876, 7
        %v2885 = vsel %vm497, %v2884, %v2875
        %v2887 = vsel %vm493, %v2880, %v2885
        %v2888 = vtanh.pop %v2887
        %v2889 = vadd.f32 %v2888, 1.0
        %v2890 = vmul.f32 %v2889, 0.5
        %v2891 = vsel %vm493, %v2888, %v2890
        %v2892 = vmul.f32 %v2891, %v2813
        %2894 = vrot.lane.b32.xlu0 %v2891, 64
        %v2895 = vpop.permute.xlu0 %2894
        %v2897 = vmul.f32 %v2891, %v2895
        %2899 = vrot.lane.b32.xlu0 %v2897, 32
        %v2900 = vpop.permute.xlu0 %2899
        %v2902 = vadd.f32 %v2892, %v2900
        %v2903 = vtanh.pop %v2902
        %2905 = vrot.lane.b32.xlu0 %v2903, 64
        %v2906 = vpop.permute.xlu0 %2905
        %v2908 = vmul.f32 %v2891, %v2906
        %v2909 = vld [vmem:[#allocation2 + $0x15] sm:$0x1]
        %v2910 = vld [vmem:[#allocation2 + $0x35] sm:$0x1]
        %v2911 = vpack.c.bf16 %v2908, %v2908
        %2913 = vrot.lane.b32.xlu0 %v2911, 32
        %v2914 = vpop.permute.xlu0 %2913
        %v2916 = vsel %vm440, %v2914, 0
        %2918 = vmatprep.subr.bf16.mxu0 0
        %2919 = vmatpush1.bf16.msra.mxu0 0
        %2920 = vmatprep.subr.bf16.mxu0 0
        %2921 = vmatpush1.bf16.msra.mxu0 0
        %2922 = vmatprep.subr.bf16.mxu0 0
        %2923 = vmatpush1.bf16.msra.mxu0 0
        %2924 = vmatprep.subr.bf16.mxu0 0
        %2925 = vmatpush1.bf16.msra.mxu0 0
        %2926 = vmatprep.subr.bf16.mxu0 0
        %2927 = vmatpush1.bf16.msra.mxu0 0
        %2928 = vmatprep.subr.bf16.mxu0 0
        %2929 = vmatpush1.bf16.msra.mxu0 0
        %2930 = vmatprep.subr.bf16.mxu0 0
        %2931 = vmatpush1.bf16.msra.mxu0 %v2467
        %2932 = vmatprep.subr.bf16.mxu0 0
        %2933 = vmatpush1.bf16.msra.mxu0 %v2466
        %2934 = vmatprep.subr.bf16.mxu0 0
        %2935 = vmatpush2.bf16.msra.mxu0 0
        %2936 = vmatprep.subr.bf16.mxu0 0
        %2937 = vmatpush2.bf16.msra.mxu0 0
        %2938 = vmatprep.subr.bf16.mxu0 0
        %2939 = vmatpush2.bf16.msra.mxu0 0
        %2940 = vmatprep.subr.bf16.mxu0 0
        %2941 = vmatpush2.bf16.msra.mxu0 0
        %2942 = vmatprep.subr.bf16.mxu0 0
        %2943 = vmatpush2.bf16.msra.mxu0 0
        %2944 = vmatprep.subr.bf16.mxu0 0
        %2945 = vmatpush2.bf16.msra.mxu0 0
        %2946 = vmatprep.subr.bf16.mxu0 0
        %2947 = vmatpush2.bf16.msra.mxu0 0
        %2948 = vmatprep.subr.bf16.mxu0 0
        %2949 = vmatpush2.bf16.msra.mxu0 0
        %2950 = vmatprep.mubr.bf16.mxu0 0
        %2951 = vmatmul.mubr.bf16.gmra.mxu0 %v2916
        %v2952 = vpop.f32.mrf.mxu0
        %v2953 = vadd.f32 0.0, %v2952
        %v2954 = vpop.f32.mrf.mxu0
        %v2955 = vpop.f32.mrf.mxu0
        %v2956 = vpop.f32.mrf.mxu0
        %2957 = vdwg.mxu0
        %v2959 = vrot.slane %v2953, 1
        %v2962 = vadd.f32 %v2909, %v2953
        %v2963 = vadd.f32 %v2910, %v2959
        %v2964 = vmul.f32 %v2962, 0.5
        %v2965 = vmul.f32 %v2963, 0.5
        %v2968 = vrot.slane %v2963, 7
        %v2969 = vsel %vm497, %v2968, %v2962
        %v2973 = vrot.slane %v2965, 7
        %v2974 = vsel %vm497, %v2973, %v2964
        %v2976 = vsel %vm493, %v2969, %v2974
        %v2977 = vtanh.pop %v2976
        %v2978 = vadd.f32 %v2977, 1.0
        %v2979 = vmul.f32 %v2978, 0.5
        %v2980 = vsel %vm493, %v2977, %v2979
        %v2981 = vmul.f32 %v2980, %v2902
        %2983 = vrot.lane.b32.xlu0 %v2980, 64
        %v2984 = vpop.permute.xlu0 %2983
        %v2986 = vmul.f32 %v2980, %v2984
        %2988 = vrot.lane.b32.xlu0 %v2986, 32
        %v2989 = vpop.permute.xlu0 %2988
        %v2991 = vadd.f32 %v2981, %v2989
        %v2992 = vtanh.pop %v2991
        %2994 = vrot.lane.b32.xlu0 %v2992, 64
        %v2995 = vpop.permute.xlu0 %2994
        %v2997 = vmul.f32 %v2980, %v2995
        %v2998 = vld [vmem:[#allocation2 + $0x16] sm:$0x1]
        %v2999 = vld [vmem:[#allocation2 + $0x36] sm:$0x1]
        %v3000 = vpack.c.bf16 %v2997, %v2997
        %3002 = vrot.lane.b32.xlu0 %v3000, 32
        %v3003 = vpop.permute.xlu0 %3002
        %v3005 = vsel %vm440, %v3003, 0
        %3007 = vmatprep.subr.bf16.mxu0 0
        %3008 = vmatpush1.bf16.msra.mxu0 0
        %3009 = vmatprep.subr.bf16.mxu0 0
        %3010 = vmatpush1.bf16.msra.mxu0 0
        %3011 = vmatprep.subr.bf16.mxu0 0
        %3012 = vmatpush1.bf16.msra.mxu0 0
        %3013 = vmatprep.subr.bf16.mxu0 0
        %3014 = vmatpush1.bf16.msra.mxu0 0
        %3015 = vmatprep.subr.bf16.mxu0 0
        %3016 = vmatpush1.bf16.msra.mxu0 0
        %3017 = vmatprep.subr.bf16.mxu0 0
        %3018 = vmatpush1.bf16.msra.mxu0 0
        %3019 = vmatprep.subr.bf16.mxu0 0
        %3020 = vmatpush1.bf16.msra.mxu0 %v2467
        %3021 = vmatprep.subr.bf16.mxu0 0
        %3022 = vmatpush1.bf16.msra.mxu0 %v2466
        %3023 = vmatprep.subr.bf16.mxu0 0
        %3024 = vmatpush2.bf16.msra.mxu0 0
        %3025 = vmatprep.subr.bf16.mxu0 0
        %3026 = vmatpush2.bf16.msra.mxu0 0
        %3027 = vmatprep.subr.bf16.mxu0 0
        %3028 = vmatpush2.bf16.msra.mxu0 0
        %3029 = vmatprep.subr.bf16.mxu0 0
        %3030 = vmatpush2.bf16.msra.mxu0 0
        %3031 = vmatprep.subr.bf16.mxu0 0
        %3032 = vmatpush2.bf16.msra.mxu0 0
        %3033 = vmatprep.subr.bf16.mxu0 0
        %3034 = vmatpush2.bf16.msra.mxu0 0
        %3035 = vmatprep.subr.bf16.mxu0 0
        %3036 = vmatpush2.bf16.msra.mxu0 0
        %3037 = vmatprep.subr.bf16.mxu0 0
        %3038 = vmatpush2.bf16.msra.mxu0 0
        %3039 = vmatprep.mubr.bf16.mxu0 0
        %3040 = vmatmul.mubr.bf16.gmra.mxu0 %v3005
        %v3041 = vpop.f32.mrf.mxu0
        %v3042 = vadd.f32 0.0, %v3041
        %v3043 = vpop.f32.mrf.mxu0
        %v3044 = vpop.f32.mrf.mxu0
        %v3045 = vpop.f32.mrf.mxu0
        %3046 = vdwg.mxu0
        %v3048 = vrot.slane %v3042, 1
        %v3051 = vadd.f32 %v2998, %v3042
        %v3052 = vadd.f32 %v2999, %v3048
        %v3053 = vmul.f32 %v3051, 0.5
        %v3054 = vmul.f32 %v3052, 0.5
        %v3057 = vrot.slane %v3052, 7
        %v3058 = vsel %vm497, %v3057, %v3051
        %v3062 = vrot.slane %v3054, 7
        %v3063 = vsel %vm497, %v3062, %v3053
        %v3065 = vsel %vm493, %v3058, %v3063
        %v3066 = vtanh.pop %v3065
        %v3067 = vadd.f32 %v3066, 1.0
        %v3068 = vmul.f32 %v3067, 0.5
        %v3069 = vsel %vm493, %v3066, %v3068
        %v3070 = vmul.f32 %v3069, %v2991
        %3072 = vrot.lane.b32.xlu0 %v3069, 64
        %v3073 = vpop.permute.xlu0 %3072
        %v3075 = vmul.f32 %v3069, %v3073
        %3077 = vrot.lane.b32.xlu0 %v3075, 32
        %v3078 = vpop.permute.xlu0 %3077
        %v3080 = vadd.f32 %v3070, %v3078
        %v3081 = vtanh.pop %v3080
        %3083 = vrot.lane.b32.xlu0 %v3081, 64
        %v3084 = vpop.permute.xlu0 %3083
        %v3086 = vmul.f32 %v3069, %v3084
        %v3087 = vld [vmem:[#allocation2 + $0x17] sm:$0x1]
        %v3088 = vld [vmem:[#allocation2 + $0x37] sm:$0x1]
        %v3089 = vpack.c.bf16 %v3086, %v3086
        %3091 = vrot.lane.b32.xlu0 %v3089, 32
        %v3092 = vpop.permute.xlu0 %3091
        %v3094 = vsel %vm440, %v3092, 0
        %3096 = vmatprep.subr.bf16.mxu0 0
        %3097 = vmatpush1.bf16.msra.mxu0 0
        %3098 = vmatprep.subr.bf16.mxu0 0
        %3099 = vmatpush1.bf16.msra.mxu0 0
        %3100 = vmatprep.subr.bf16.mxu0 0
        %3101 = vmatpush1.bf16.msra.mxu0 0
        %3102 = vmatprep.subr.bf16.mxu0 0
        %3103 = vmatpush1.bf16.msra.mxu0 0
        %3104 = vmatprep.subr.bf16.mxu0 0
        %3105 = vmatpush1.bf16.msra.mxu0 0
        %3106 = vmatprep.subr.bf16.mxu0 0
        %3107 = vmatpush1.bf16.msra.mxu0 0
        %3108 = vmatprep.subr.bf16.mxu0 0
        %3109 = vmatpush1.bf16.msra.mxu0 %v2467
        %3110 = vmatprep.subr.bf16.mxu0 0
        %3111 = vmatpush1.bf16.msra.mxu0 %v2466
        %3112 = vmatprep.subr.bf16.mxu0 0
        %3113 = vmatpush2.bf16.msra.mxu0 0
        %3114 = vmatprep.subr.bf16.mxu0 0
        %3115 = vmatpush2.bf16.msra.mxu0 0
        %3116 = vmatprep.subr.bf16.mxu0 0
        %3117 = vmatpush2.bf16.msra.mxu0 0
        %3118 = vmatprep.subr.bf16.mxu0 0
        %3119 = vmatpush2.bf16.msra.mxu0 0
        %3120 = vmatprep.subr.bf16.mxu0 0
        %3121 = vmatpush2.bf16.msra.mxu0 0
        %3122 = vmatprep.subr.bf16.mxu0 0
        %3123 = vmatpush2.bf16.msra.mxu0 0
        %3124 = vmatprep.subr.bf16.mxu0 0
        %3125 = vmatpush2.bf16.msra.mxu0 0
        %3126 = vmatprep.subr.bf16.mxu0 0
        %3127 = vmatpush2.bf16.msra.mxu0 0
        %3128 = vmatprep.mubr.bf16.mxu0 0
        %3129 = vmatmul.mubr.bf16.gmra.mxu0 %v3094
        %v3130 = vpop.f32.mrf.mxu0
        %v3131 = vadd.f32 0.0, %v3130
        %v3132 = vpop.f32.mrf.mxu0
        %v3133 = vpop.f32.mrf.mxu0
        %v3134 = vpop.f32.mrf.mxu0
        %3135 = vdwg.mxu0
        %v3137 = vrot.slane %v3131, 1
        %v3140 = vadd.f32 %v3087, %v3131
        %v3141 = vadd.f32 %v3088, %v3137
        %v3142 = vmul.f32 %v3140, 0.5
        %v3143 = vmul.f32 %v3141, 0.5
        %v3146 = vrot.slane %v3141, 7
        %v3147 = vsel %vm497, %v3146, %v3140
        %v3151 = vrot.slane %v3143, 7
        %v3152 = vsel %vm497, %v3151, %v3142
        %v3154 = vsel %vm493, %v3147, %v3152
        %v3155 = vtanh.pop %v3154
        %v3156 = vadd.f32 %v3155, 1.0
        %v3157 = vmul.f32 %v3156, 0.5
        %v3158 = vsel %vm493, %v3155, %v3157
        %v3159 = vmul.f32 %v3158, %v3080
        %3161 = vrot.lane.b32.xlu0 %v3158, 64
        %v3162 = vpop.permute.xlu0 %3161
        %v3164 = vmul.f32 %v3158, %v3162
        %3166 = vrot.lane.b32.xlu0 %v3164, 32
        %v3167 = vpop.permute.xlu0 %3166
        %v3169 = vadd.f32 %v3159, %v3167
        %v3170 = vtanh.pop %v3169
        %3172 = vrot.lane.b32.xlu0 %v3170, 64
        %v3173 = vpop.permute.xlu0 %3172
        %v3175 = vmul.f32 %v3158, %v3173
        %v3178 = vunpack.c.l.s4 1966171168
        %v3179 = vunpack.c.0.s8 %v3178
        %v3180 = vlaneseq
        %v3181 = vshrl.u32 %v3180, 7
        %v3182 = vsub.s32 %v3179, %v3181
        %v3183 = vrot.slane %v2552, %v3182
        %v3184 = vcombine.high %v3183, %v3183
        %v3186 = vunpack.c.l.s4 1966171168
        %v3187 = vunpack.c.0.s8 %v3186
        %v3188 = vlaneseq
        %v3189 = vshrl.u32 %v3188, 7
        %v3190 = vsub.s32 %v3187, %v3189
        %v3191 = vrot.slane %v3183, %v3190
        %v3193 = vunpack.c.l.s4 1966171168
        %v3194 = vunpack.c.0.s8 %v3193
        %v3195 = vlaneseq
        %v3196 = vshrl.u32 %v3195, 7
        %v3197 = vsub.s32 %v3194, %v3196
        %v3198 = vrot.slane %v3184, %v3197
        %v3203 = vunpack.c.l.s4 1966171168
        %v3204 = vunpack.c.0.s8 %v3203
        %v3205 = vlaneseq
        %v3206 = vshrl.u32 %v3205, 7
        %v3207 = vsub.s32 %v3204, %v3206
        %v3208 = vrot.slane %v2641, %v3207
        %v3209 = vcombine.high %v3208, %v3208
        %v3211 = vunpack.c.l.s4 1966171168
        %v3212 = vunpack.c.0.s8 %v3211
        %v3213 = vlaneseq
        %v3214 = vshrl.u32 %v3213, 7
        %v3215 = vsub.s32 %v3212, %v3214
        %v3216 = vrot.slane %v3208, %v3215
        %v3218 = vunpack.c.l.s4 1966171168
        %v3219 = vunpack.c.0.s8 %v3218
        %v3220 = vlaneseq
        %v3221 = vshrl.u32 %v3220, 7
        %v3222 = vsub.s32 %v3219, %v3221
        %v3223 = vrot.slane %v3209, %v3222
        %v3226 = vunpack.c.l.s4 1966171168
        %v3227 = vunpack.c.0.s8 %v3226
        %v3228 = vlaneseq
        %v3229 = vshrl.u32 %v3228, 7
        %v3230 = vsub.s32 %v3227, %v3229
        %v3231 = vrot.slane %v2730, %v3230
        %v3232 = vcombine.high %v3231, %v3231
        %v3234 = vunpack.c.l.s4 1966171168
        %v3235 = vunpack.c.0.s8 %v3234
        %v3236 = vlaneseq
        %v3237 = vshrl.u32 %v3236, 7
        %v3238 = vsub.s32 %v3235, %v3237
        %v3239 = vrot.slane %v3231, %v3238
        %v3241 = vunpack.c.l.s4 1966171168
        %v3242 = vunpack.c.0.s8 %v3241
        %v3243 = vlaneseq
        %v3244 = vshrl.u32 %v3243, 7
        %v3245 = vsub.s32 %v3242, %v3244
        %v3246 = vrot.slane %v3232, %v3245
        %v3249 = vunpack.c.l.s4 1966171168
        %v3250 = vunpack.c.0.s8 %v3249
        %v3251 = vlaneseq
        %v3252 = vshrl.u32 %v3251, 7
        %v3253 = vsub.s32 %v3250, %v3252
        %v3254 = vrot.slane %v2819, %v3253
        %v3255 = vcombine.high %v3254, %v3254
        %v3257 = vunpack.c.l.s4 1966171168
        %v3258 = vunpack.c.0.s8 %v3257
        %v3259 = vlaneseq
        %v3260 = vshrl.u32 %v3259, 7
        %v3261 = vsub.s32 %v3258, %v3260
        %v3262 = vrot.slane %v3254, %v3261
        %v3264 = vunpack.c.l.s4 1966171168
        %v3265 = vunpack.c.0.s8 %v3264
        %v3266 = vlaneseq
        %v3267 = vshrl.u32 %v3266, 7
        %v3268 = vsub.s32 %v3265, %v3267
        %v3269 = vrot.slane %v3255, %v3268
        %v3272 = vunpack.c.l.s4 1966171168
        %v3273 = vunpack.c.0.s8 %v3272
        %v3274 = vlaneseq
        %v3275 = vshrl.u32 %v3274, 7
        %v3276 = vsub.s32 %v3273, %v3275
        %v3277 = vrot.slane %v2908, %v3276
        %v3278 = vcombine.high %v3277, %v3277
        %v3280 = vunpack.c.l.s4 1966171168
        %v3281 = vunpack.c.0.s8 %v3280
        %v3282 = vlaneseq
        %v3283 = vshrl.u32 %v3282, 7
        %v3284 = vsub.s32 %v3281, %v3283
        %v3285 = vrot.slane %v3277, %v3284
        %v3287 = vunpack.c.l.s4 1966171168
        %v3288 = vunpack.c.0.s8 %v3287
        %v3289 = vlaneseq
        %v3290 = vshrl.u32 %v3289, 7
        %v3291 = vsub.s32 %v3288, %v3290
        %v3292 = vrot.slane %v3278, %v3291
        %v3295 = vunpack.c.l.s4 1966171168
        %v3296 = vunpack.c.0.s8 %v3295
        %v3297 = vlaneseq
        %v3298 = vshrl.u32 %v3297, 7
        %v3299 = vsub.s32 %v3296, %v3298
        %v3300 = vrot.slane %v2997, %v3299
        %v3301 = vcombine.high %v3300, %v3300
        %v3303 = vunpack.c.l.s4 1966171168
        %v3304 = vunpack.c.0.s8 %v3303
        %v3305 = vlaneseq
        %v3306 = vshrl.u32 %v3305, 7
        %v3307 = vsub.s32 %v3304, %v3306
        %v3308 = vrot.slane %v3300, %v3307
        %v3310 = vunpack.c.l.s4 1966171168
        %v3311 = vunpack.c.0.s8 %v3310
        %v3312 = vlaneseq
        %v3313 = vshrl.u32 %v3312, 7
        %v3314 = vsub.s32 %v3311, %v3313
        %v3315 = vrot.slane %v3301, %v3314
        %v3318 = vunpack.c.l.s4 1966171168
        %v3319 = vunpack.c.0.s8 %v3318
        %v3320 = vlaneseq
        %v3321 = vshrl.u32 %v3320, 7
        %v3322 = vsub.s32 %v3319, %v3321
        %v3323 = vrot.slane %v3086, %v3322
        %v3324 = vcombine.high %v3323, %v3323
        %v3326 = vunpack.c.l.s4 1966171168
        %v3327 = vunpack.c.0.s8 %v3326
        %v3328 = vlaneseq
        %v3329 = vshrl.u32 %v3328, 7
        %v3330 = vsub.s32 %v3327, %v3329
        %v3331 = vrot.slane %v3323, %v3330
        %v3333 = vunpack.c.l.s4 1966171168
        %v3334 = vunpack.c.0.s8 %v3333
        %v3335 = vlaneseq
        %v3336 = vshrl.u32 %v3335, 7
        %v3337 = vsub.s32 %v3334, %v3336
        %v3338 = vrot.slane %v3324, %v3337
        %v3341 = vunpack.c.l.s4 1966171168
        %v3342 = vunpack.c.0.s8 %v3341
        %v3343 = vlaneseq
        %v3344 = vshrl.u32 %v3343, 7
        %v3345 = vsub.s32 %v3342, %v3344
        %v3346 = vrot.slane %v3175, %v3345
        %v3347 = vcombine.high %v3346, %v3346
        %v3349 = vunpack.c.l.s4 1966171168
        %v3350 = vunpack.c.0.s8 %v3349
        %v3351 = vlaneseq
        %v3352 = vshrl.u32 %v3351, 7
        %v3353 = vsub.s32 %v3350, %v3352
        %v3354 = vrot.slane %v3346, %v3353
        %v3356 = vunpack.c.l.s4 1966171168
        %v3357 = vunpack.c.0.s8 %v3356
        %v3358 = vlaneseq
        %v3359 = vshrl.u32 %v3358, 7
        %v3360 = vsub.s32 %v3357, %v3359
        %v3361 = vrot.slane %v3347, %v3360
        %v3362 = vlaneseq
        %v3363 = vshrl.u32 %v3362, 7
        %v3364 = vsub.s32 0, %v3363
        %v3365 = vrot.slane %v3216, %v3364
        %v3366 = vlaneseq
        %v3367 = vshrl.u32 %v3366, 7
        %v3368 = vsub.s32 0, %v3367
        %v3369 = vrot.slane %v3223, %v3368
        %v3372 = vlaneseq
        %v3373 = vshrl.u32 %v3372, 7
        %v3374 = vsub.s32 0, %v3373
        %v3375 = vrot.slane %v3239, %v3374
        %v3376 = vlaneseq
        %v3377 = vshrl.u32 %v3376, 7
        %v3378 = vsub.s32 0, %v3377
        %v3379 = vrot.slane %v3246, %v3378
        %v3382 = vlaneseq
        %v3383 = vshrl.u32 %v3382, 7
        %v3384 = vsub.s32 0, %v3383
        %v3385 = vrot.slane %v3262, %v3384
        %v3386 = vlaneseq
        %v3387 = vshrl.u32 %v3386, 7
        %v3388 = vsub.s32 0, %v3387
        %v3389 = vrot.slane %v3269, %v3388
        %v3392 = vlaneseq
        %v3393 = vshrl.u32 %v3392, 7
        %v3394 = vsub.s32 0, %v3393
        %v3395 = vrot.slane %v3285, %v3394
        %v3396 = vlaneseq
        %v3397 = vshrl.u32 %v3396, 7
        %v3398 = vsub.s32 0, %v3397
        %v3399 = vrot.slane %v3292, %v3398
        %v3402 = vlaneseq
        %v3403 = vshrl.u32 %v3402, 7
        %v3404 = vsub.s32 0, %v3403
        %v3405 = vrot.slane %v3308, %v3404
        %v3406 = vlaneseq
        %v3407 = vshrl.u32 %v3406, 7
        %v3408 = vsub.s32 0, %v3407
        %v3409 = vrot.slane %v3315, %v3408
        %v3412 = vlaneseq
        %v3413 = vshrl.u32 %v3412, 7
        %v3414 = vsub.s32 0, %v3413
        %v3415 = vrot.slane %v3331, %v3414
        %v3416 = vlaneseq
        %v3417 = vshrl.u32 %v3416, 7
        %v3418 = vsub.s32 0, %v3417
        %v3419 = vrot.slane %v3338, %v3418
        %v3422 = vlaneseq
        %v3423 = vshrl.u32 %v3422, 7
        %v3424 = vsub.s32 0, %v3423
        %v3425 = vrot.slane %v3354, %v3424
        %v3426 = vlaneseq
        %v3427 = vshrl.u32 %v3426, 7
        %v3428 = vsub.s32 0, %v3427
        %v3429 = vrot.slane %v3361, %v3428
        %v3432 = vsel %vm1410, %v3191, %v3365
        %v3433 = vsel %vm1410, %v3198, %v3369
        %v3434 = vsel %vm1413, %v3432, %v3375
        %v3435 = vsel %vm1413, %v3433, %v3379
        %v3436 = vsel %vm1416, %v3434, %v3385
        %v3437 = vsel %vm1416, %v3435, %v3389
        %v3438 = vsel %vm1419, %v3436, %v3395
        %v3439 = vsel %vm1419, %v3437, %v3399
        %v3440 = vsel %vm1422, %v3438, %v3405
        %v3441 = vsel %vm1422, %v3439, %v3409
        %v3442 = vsel %vm322, %v3440, %v3415
        %v3443 = vsel %vm322, %v3441, %v3419
        %v3444 = vsel %vm1427, %v3442, %v3425
        %v3445 = vsel %vm1427, %v3443, %v3429
        %3448 = vrot.lane.b32.xlu0 %v3444, 32
        %v3449 = vpop.permute.xlu0 %3448
        %3450 = vrot.lane.b32.xlu0 %v3445, 32
        %v3451 = vpop.permute.xlu0 %3450
        %3454 = vst.msk [vmem:[%s263 + $0x10] sm:$0xff] %vm440, %v3449
        %3455 = vst.msk [vmem:[%s263 + $0x30] sm:$0xff] %vm440, %v3451
        %v3456 = vld [vmem:[#allocation2 + $0x18] sm:$0x1]
        %v3457 = vld [vmem:[#allocation2 + $0x38] sm:$0x1]
        %v3458 = vpack.c.bf16 %v3175, %v3175
        %v3459 = vld [vmem:[%s2] sm:$0xf]
        %v3460 = vld [vmem:[%s2 + $0x4] sm:$0xf]
        %v3461 = vld [vmem:[%s2 + $0x8] sm:$0xf]
        %v3462 = vld [vmem:[%s2 + $0xc] sm:$0xf]
        %3464 = vrot.lane.b32.xlu0 %v3458, 32
        %v3465 = vpop.permute.xlu0 %3464
        %v3470 = vunpack.c.l.b16 %v3459
        %v3471 = vunpack.c.l.b16 %v3460
        %v3472 = vunpack.c.l.b16 %v3461
        %v3473 = vunpack.c.l.b16 %v3462
        %v3474 = vpack.c.b16 %v3471, %v3470
        %v3475 = vpack.c.b16 %v3473, %v3472
        %v3479 = vsel %vm440, %v3465, 0
        %3481 = vmatprep.subr.bf16.mxu0 0
        %3482 = vmatpush1.bf16.msra.mxu0 0
        %3483 = vmatprep.subr.bf16.mxu0 0
        %3484 = vmatpush1.bf16.msra.mxu0 0
        %3485 = vmatprep.subr.bf16.mxu0 0
        %3486 = vmatpush1.bf16.msra.mxu0 0
        %3487 = vmatprep.subr.bf16.mxu0 0
        %3488 = vmatpush1.bf16.msra.mxu0 0
        %3489 = vmatprep.subr.bf16.mxu0 0
        %3490 = vmatpush1.bf16.msra.mxu0 0
        %3491 = vmatprep.subr.bf16.mxu0 0
        %3492 = vmatpush1.bf16.msra.mxu0 0
        %3493 = vmatprep.subr.bf16.mxu0 0
        %3494 = vmatpush1.bf16.msra.mxu0 %v3475
        %3495 = vmatprep.subr.bf16.mxu0 0
        %3496 = vmatpush1.bf16.msra.mxu0 %v3474
        %3497 = vmatprep.subr.bf16.mxu0 0
        %3498 = vmatpush2.bf16.msra.mxu0 0
        %3499 = vmatprep.subr.bf16.mxu0 0
        %3500 = vmatpush2.bf16.msra.mxu0 0
        %3501 = vmatprep.subr.bf16.mxu0 0
        %3502 = vmatpush2.bf16.msra.mxu0 0
        %3503 = vmatprep.subr.bf16.mxu0 0
        %3504 = vmatpush2.bf16.msra.mxu0 0
        %3505 = vmatprep.subr.bf16.mxu0 0
        %3506 = vmatpush2.bf16.msra.mxu0 0
        %3507 = vmatprep.subr.bf16.mxu0 0
        %3508 = vmatpush2.bf16.msra.mxu0 0
        %3509 = vmatprep.subr.bf16.mxu0 0
        %3510 = vmatpush2.bf16.msra.mxu0 0
        %3511 = vmatprep.subr.bf16.mxu0 0
        %3512 = vmatpush2.bf16.msra.mxu0 0
        %3513 = vmatprep.mubr.bf16.mxu0 0
        %3514 = vmatmul.mubr.bf16.gmra.mxu0 %v3479
        %v3515 = vpop.f32.mrf.mxu0
        %v3516 = vadd.f32 0.0, %v3515
        %v3517 = vpop.f32.mrf.mxu0
        %v3518 = vpop.f32.mrf.mxu0
        %v3519 = vpop.f32.mrf.mxu0
        %3520 = vdwg.mxu0
        %v3522 = vrot.slane %v3516, 1
        %v3525 = vadd.f32 %v3456, %v3516
        %v3526 = vadd.f32 %v3457, %v3522
        %v3527 = vmul.f32 %v3525, 0.5
        %v3528 = vmul.f32 %v3526, 0.5
        %v3531 = vrot.slane %v3526, 7
        %v3532 = vsel %vm497, %v3531, %v3525
        %v3536 = vrot.slane %v3528, 7
        %v3537 = vsel %vm497, %v3536, %v3527
        %v3539 = vsel %vm493, %v3532, %v3537
        %v3540 = vtanh.pop %v3539
        %v3541 = vadd.f32 %v3540, 1.0
        %v3542 = vmul.f32 %v3541, 0.5
        %v3543 = vsel %vm493, %v3540, %v3542
        %v3544 = vmul.f32 %v3543, %v3169
        %3546 = vrot.lane.b32.xlu0 %v3543, 64
        %v3547 = vpop.permute.xlu0 %3546
        %v3549 = vmul.f32 %v3543, %v3547
        %3551 = vrot.lane.b32.xlu0 %v3549, 32
        %v3552 = vpop.permute.xlu0 %3551
        %v3554 = vadd.f32 %v3544, %v3552
        %v3555 = vtanh.pop %v3554
        %3557 = vrot.lane.b32.xlu0 %v3555, 64
        %v3558 = vpop.permute.xlu0 %3557
        %v3560 = vmul.f32 %v3543, %v3558
        %v3561 = vld [vmem:[#allocation2 + $0x19] sm:$0x1]
        %v3562 = vld [vmem:[#allocation2 + $0x39] sm:$0x1]
        %v3563 = vpack.c.bf16 %v3560, %v3560
        %3565 = vrot.lane.b32.xlu0 %v3563, 32
        %v3566 = vpop.permute.xlu0 %3565
        %v3568 = vsel %vm440, %v3566, 0
        %3570 = vmatprep.subr.bf16.mxu0 0
        %3571 = vmatpush1.bf16.msra.mxu0 0
        %3572 = vmatprep.subr.bf16.mxu0 0
        %3573 = vmatpush1.bf16.msra.mxu0 0
        %3574 = vmatprep.subr.bf16.mxu0 0
        %3575 = vmatpush1.bf16.msra.mxu0 0
        %3576 = vmatprep.subr.bf16.mxu0 0
        %3577 = vmatpush1.bf16.msra.mxu0 0
        %3578 = vmatprep.subr.bf16.mxu0 0
        %3579 = vmatpush1.bf16.msra.mxu0 0
        %3580 = vmatprep.subr.bf16.mxu0 0
        %3581 = vmatpush1.bf16.msra.mxu0 0
        %3582 = vmatprep.subr.bf16.mxu0 0
        %3583 = vmatpush1.bf16.msra.mxu0 %v3475
        %3584 = vmatprep.subr.bf16.mxu0 0
        %3585 = vmatpush1.bf16.msra.mxu0 %v3474
        %3586 = vmatprep.subr.bf16.mxu0 0
        %3587 = vmatpush2.bf16.msra.mxu0 0
        %3588 = vmatprep.subr.bf16.mxu0 0
        %3589 = vmatpush2.bf16.msra.mxu0 0
        %3590 = vmatprep.subr.bf16.mxu0 0
        %3591 = vmatpush2.bf16.msra.mxu0 0
        %3592 = vmatprep.subr.bf16.mxu0 0
        %3593 = vmatpush2.bf16.msra.mxu0 0
        %3594 = vmatprep.subr.bf16.mxu0 0
        %3595 = vmatpush2.bf16.msra.mxu0 0
        %3596 = vmatprep.subr.bf16.mxu0 0
        %3597 = vmatpush2.bf16.msra.mxu0 0
        %3598 = vmatprep.subr.bf16.mxu0 0
        %3599 = vmatpush2.bf16.msra.mxu0 0
        %3600 = vmatprep.subr.bf16.mxu0 0
        %3601 = vmatpush2.bf16.msra.mxu0 0
        %3602 = vmatprep.mubr.bf16.mxu0 0
        %3603 = vmatmul.mubr.bf16.gmra.mxu0 %v3568
        %v3604 = vpop.f32.mrf.mxu0
        %v3605 = vadd.f32 0.0, %v3604
        %v3606 = vpop.f32.mrf.mxu0
        %v3607 = vpop.f32.mrf.mxu0
        %v3608 = vpop.f32.mrf.mxu0
        %3609 = vdwg.mxu0
        %v3611 = vrot.slane %v3605, 1
        %v3614 = vadd.f32 %v3561, %v3605
        %v3615 = vadd.f32 %v3562, %v3611
        %v3616 = vmul.f32 %v3614, 0.5
        %v3617 = vmul.f32 %v3615, 0.5
        %v3620 = vrot.slane %v3615, 7
        %v3621 = vsel %vm497, %v3620, %v3614
        %v3625 = vrot.slane %v3617, 7
        %v3626 = vsel %vm497, %v3625, %v3616
        %v3628 = vsel %vm493, %v3621, %v3626
        %v3629 = vtanh.pop %v3628
        %v3630 = vadd.f32 %v3629, 1.0
        %v3631 = vmul.f32 %v3630, 0.5
        %v3632 = vsel %vm493, %v3629, %v3631
        %v3633 = vmul.f32 %v3632, %v3554
        %3635 = vrot.lane.b32.xlu0 %v3632, 64
        %v3636 = vpop.permute.xlu0 %3635
        %v3638 = vmul.f32 %v3632, %v3636
        %3640 = vrot.lane.b32.xlu0 %v3638, 32
        %v3641 = vpop.permute.xlu0 %3640
        %v3643 = vadd.f32 %v3633, %v3641
        %v3644 = vtanh.pop %v3643
        %3646 = vrot.lane.b32.xlu0 %v3644, 64
        %v3647 = vpop.permute.xlu0 %3646
        %v3649 = vmul.f32 %v3632, %v3647
        %v3650 = vld [vmem:[#allocation2 + $0x1a] sm:$0x1]
        %v3651 = vld [vmem:[#allocation2 + $0x3a] sm:$0x1]
        %v3652 = vpack.c.bf16 %v3649, %v3649
        %3654 = vrot.lane.b32.xlu0 %v3652, 32
        %v3655 = vpop.permute.xlu0 %3654
        %v3657 = vsel %vm440, %v3655, 0
        %3659 = vmatprep.subr.bf16.mxu0 0
        %3660 = vmatpush1.bf16.msra.mxu0 0
        %3661 = vmatprep.subr.bf16.mxu0 0
        %3662 = vmatpush1.bf16.msra.mxu0 0
        %3663 = vmatprep.subr.bf16.mxu0 0
        %3664 = vmatpush1.bf16.msra.mxu0 0
        %3665 = vmatprep.subr.bf16.mxu0 0
        %3666 = vmatpush1.bf16.msra.mxu0 0
        %3667 = vmatprep.subr.bf16.mxu0 0
        %3668 = vmatpush1.bf16.msra.mxu0 0
        %3669 = vmatprep.subr.bf16.mxu0 0
        %3670 = vmatpush1.bf16.msra.mxu0 0
        %3671 = vmatprep.subr.bf16.mxu0 0
        %3672 = vmatpush1.bf16.msra.mxu0 %v3475
        %3673 = vmatprep.subr.bf16.mxu0 0
        %3674 = vmatpush1.bf16.msra.mxu0 %v3474
        %3675 = vmatprep.subr.bf16.mxu0 0
        %3676 = vmatpush2.bf16.msra.mxu0 0
        %3677 = vmatprep.subr.bf16.mxu0 0
        %3678 = vmatpush2.bf16.msra.mxu0 0
        %3679 = vmatprep.subr.bf16.mxu0 0
        %3680 = vmatpush2.bf16.msra.mxu0 0
        %3681 = vmatprep.subr.bf16.mxu0 0
        %3682 = vmatpush2.bf16.msra.mxu0 0
        %3683 = vmatprep.subr.bf16.mxu0 0
        %3684 = vmatpush2.bf16.msra.mxu0 0
        %3685 = vmatprep.subr.bf16.mxu0 0
        %3686 = vmatpush2.bf16.msra.mxu0 0
        %3687 = vmatprep.subr.bf16.mxu0 0
        %3688 = vmatpush2.bf16.msra.mxu0 0
        %3689 = vmatprep.subr.bf16.mxu0 0
        %3690 = vmatpush2.bf16.msra.mxu0 0
        %3691 = vmatprep.mubr.bf16.mxu0 0
        %3692 = vmatmul.mubr.bf16.gmra.mxu0 %v3657
        %v3693 = vpop.f32.mrf.mxu0
        %v3694 = vadd.f32 0.0, %v3693
        %v3695 = vpop.f32.mrf.mxu0
        %v3696 = vpop.f32.mrf.mxu0
        %v3697 = vpop.f32.mrf.mxu0
        %3698 = vdwg.mxu0
        %v3700 = vrot.slane %v3694, 1
        %v3703 = vadd.f32 %v3650, %v3694
        %v3704 = vadd.f32 %v3651, %v3700
        %v3705 = vmul.f32 %v3703, 0.5
        %v3706 = vmul.f32 %v3704, 0.5
        %v3709 = vrot.slane %v3704, 7
        %v3710 = vsel %vm497, %v3709, %v3703
        %v3714 = vrot.slane %v3706, 7
        %v3715 = vsel %vm497, %v3714, %v3705
        %v3717 = vsel %vm493, %v3710, %v3715
        %v3718 = vtanh.pop %v3717
        %v3719 = vadd.f32 %v3718, 1.0
        %v3720 = vmul.f32 %v3719, 0.5
        %v3721 = vsel %vm493, %v3718, %v3720
        %v3722 = vmul.f32 %v3721, %v3643
        %3724 = vrot.lane.b32.xlu0 %v3721, 64
        %v3725 = vpop.permute.xlu0 %3724
        %v3727 = vmul.f32 %v3721, %v3725
        %3729 = vrot.lane.b32.xlu0 %v3727, 32
        %v3730 = vpop.permute.xlu0 %3729
        %v3732 = vadd.f32 %v3722, %v3730
        %v3733 = vtanh.pop %v3732
        %3735 = vrot.lane.b32.xlu0 %v3733, 64
        %v3736 = vpop.permute.xlu0 %3735
        %v3738 = vmul.f32 %v3721, %v3736
        %v3739 = vld [vmem:[#allocation2 + $0x1b] sm:$0x1]
        %v3740 = vld [vmem:[#allocation2 + $0x3b] sm:$0x1]
        %v3741 = vpack.c.bf16 %v3738, %v3738
        %3743 = vrot.lane.b32.xlu0 %v3741, 32
        %v3744 = vpop.permute.xlu0 %3743
        %v3746 = vsel %vm440, %v3744, 0
        %3748 = vmatprep.subr.bf16.mxu0 0
        %3749 = vmatpush1.bf16.msra.mxu0 0
        %3750 = vmatprep.subr.bf16.mxu0 0
        %3751 = vmatpush1.bf16.msra.mxu0 0
        %3752 = vmatprep.subr.bf16.mxu0 0
        %3753 = vmatpush1.bf16.msra.mxu0 0
        %3754 = vmatprep.subr.bf16.mxu0 0
        %3755 = vmatpush1.bf16.msra.mxu0 0
        %3756 = vmatprep.subr.bf16.mxu0 0
        %3757 = vmatpush1.bf16.msra.mxu0 0
        %3758 = vmatprep.subr.bf16.mxu0 0
        %3759 = vmatpush1.bf16.msra.mxu0 0
        %3760 = vmatprep.subr.bf16.mxu0 0
        %3761 = vmatpush1.bf16.msra.mxu0 %v3475
        %3762 = vmatprep.subr.bf16.mxu0 0
        %3763 = vmatpush1.bf16.msra.mxu0 %v3474
        %3764 = vmatprep.subr.bf16.mxu0 0
        %3765 = vmatpush2.bf16.msra.mxu0 0
        %3766 = vmatprep.subr.bf16.mxu0 0
        %3767 = vmatpush2.bf16.msra.mxu0 0
        %3768 = vmatprep.subr.bf16.mxu0 0
        %3769 = vmatpush2.bf16.msra.mxu0 0
        %3770 = vmatprep.subr.bf16.mxu0 0
        %3771 = vmatpush2.bf16.msra.mxu0 0
        %3772 = vmatprep.subr.bf16.mxu0 0
        %3773 = vmatpush2.bf16.msra.mxu0 0
        %3774 = vmatprep.subr.bf16.mxu0 0
        %3775 = vmatpush2.bf16.msra.mxu0 0
        %3776 = vmatprep.subr.bf16.mxu0 0
        %3777 = vmatpush2.bf16.msra.mxu0 0
        %3778 = vmatprep.subr.bf16.mxu0 0
        %3779 = vmatpush2.bf16.msra.mxu0 0
        %3780 = vmatprep.mubr.bf16.mxu0 0
        %3781 = vmatmul.mubr.bf16.gmra.mxu0 %v3746
        %v3782 = vpop.f32.mrf.mxu0
        %v3783 = vadd.f32 0.0, %v3782
        %v3784 = vpop.f32.mrf.mxu0
        %v3785 = vpop.f32.mrf.mxu0
        %v3786 = vpop.f32.mrf.mxu0
        %3787 = vdwg.mxu0
        %v3789 = vrot.slane %v3783, 1
        %v3792 = vadd.f32 %v3739, %v3783
        %v3793 = vadd.f32 %v3740, %v3789
        %v3794 = vmul.f32 %v3792, 0.5
        %v3795 = vmul.f32 %v3793, 0.5
        %v3798 = vrot.slane %v3793, 7
        %v3799 = vsel %vm497, %v3798, %v3792
        %v3803 = vrot.slane %v3795, 7
        %v3804 = vsel %vm497, %v3803, %v3794
        %v3806 = vsel %vm493, %v3799, %v3804
        %v3807 = vtanh.pop %v3806
        %v3808 = vadd.f32 %v3807, 1.0
        %v3809 = vmul.f32 %v3808, 0.5
        %v3810 = vsel %vm493, %v3807, %v3809
        %v3811 = vmul.f32 %v3810, %v3732
        %3813 = vrot.lane.b32.xlu0 %v3810, 64
        %v3814 = vpop.permute.xlu0 %3813
        %v3816 = vmul.f32 %v3810, %v3814
        %3818 = vrot.lane.b32.xlu0 %v3816, 32
        %v3819 = vpop.permute.xlu0 %3818
        %v3821 = vadd.f32 %v3811, %v3819
        %v3822 = vtanh.pop %v3821
        %3824 = vrot.lane.b32.xlu0 %v3822, 64
        %v3825 = vpop.permute.xlu0 %3824
        %v3827 = vmul.f32 %v3810, %v3825
        %v3828 = vld [vmem:[#allocation2 + $0x1c] sm:$0x1]
        %v3829 = vld [vmem:[#allocation2 + $0x3c] sm:$0x1]
        %v3830 = vpack.c.bf16 %v3827, %v3827
        %3832 = vrot.lane.b32.xlu0 %v3830, 32
        %v3833 = vpop.permute.xlu0 %3832
        %v3835 = vsel %vm440, %v3833, 0
        %3837 = vmatprep.subr.bf16.mxu0 0
        %3838 = vmatpush1.bf16.msra.mxu0 0
        %3839 = vmatprep.subr.bf16.mxu0 0
        %3840 = vmatpush1.bf16.msra.mxu0 0
        %3841 = vmatprep.subr.bf16.mxu0 0
        %3842 = vmatpush1.bf16.msra.mxu0 0
        %3843 = vmatprep.subr.bf16.mxu0 0
        %3844 = vmatpush1.bf16.msra.mxu0 0
        %3845 = vmatprep.subr.bf16.mxu0 0
        %3846 = vmatpush1.bf16.msra.mxu0 0
        %3847 = vmatprep.subr.bf16.mxu0 0
        %3848 = vmatpush1.bf16.msra.mxu0 0
        %3849 = vmatprep.subr.bf16.mxu0 0
        %3850 = vmatpush1.bf16.msra.mxu0 %v3475
        %3851 = vmatprep.subr.bf16.mxu0 0
        %3852 = vmatpush1.bf16.msra.mxu0 %v3474
        %3853 = vmatprep.subr.bf16.mxu0 0
        %3854 = vmatpush2.bf16.msra.mxu0 0
        %3855 = vmatprep.subr.bf16.mxu0 0
        %3856 = vmatpush2.bf16.msra.mxu0 0
        %3857 = vmatprep.subr.bf16.mxu0 0
        %3858 = vmatpush2.bf16.msra.mxu0 0
        %3859 = vmatprep.subr.bf16.mxu0 0
        %3860 = vmatpush2.bf16.msra.mxu0 0
        %3861 = vmatprep.subr.bf16.mxu0 0
        %3862 = vmatpush2.bf16.msra.mxu0 0
        %3863 = vmatprep.subr.bf16.mxu0 0
        %3864 = vmatpush2.bf16.msra.mxu0 0
        %3865 = vmatprep.subr.bf16.mxu0 0
        %3866 = vmatpush2.bf16.msra.mxu0 0
        %3867 = vmatprep.subr.bf16.mxu0 0
        %3868 = vmatpush2.bf16.msra.mxu0 0
        %3869 = vmatprep.mubr.bf16.mxu0 0
        %3870 = vmatmul.mubr.bf16.gmra.mxu0 %v3835
        %v3871 = vpop.f32.mrf.mxu0
        %v3872 = vadd.f32 0.0, %v3871
        %v3873 = vpop.f32.mrf.mxu0
        %v3874 = vpop.f32.mrf.mxu0
        %v3875 = vpop.f32.mrf.mxu0
        %3876 = vdwg.mxu0
        %v3878 = vrot.slane %v3872, 1
        %v3881 = vadd.f32 %v3828, %v3872
        %v3882 = vadd.f32 %v3829, %v3878
        %v3883 = vmul.f32 %v3881, 0.5
        %v3884 = vmul.f32 %v3882, 0.5
        %v3887 = vrot.slane %v3882, 7
        %v3888 = vsel %vm497, %v3887, %v3881
        %v3892 = vrot.slane %v3884, 7
        %v3893 = vsel %vm497, %v3892, %v3883
        %v3895 = vsel %vm493, %v3888, %v3893
        %v3896 = vtanh.pop %v3895
        %v3897 = vadd.f32 %v3896, 1.0
        %v3898 = vmul.f32 %v3897, 0.5
        %v3899 = vsel %vm493, %v3896, %v3898
        %v3900 = vmul.f32 %v3899, %v3821
        %3902 = vrot.lane.b32.xlu0 %v3899, 64
        %v3903 = vpop.permute.xlu0 %3902
        %v3905 = vmul.f32 %v3899, %v3903
        %3907 = vrot.lane.b32.xlu0 %v3905, 32
        %v3908 = vpop.permute.xlu0 %3907
        %v3910 = vadd.f32 %v3900, %v3908
        %v3911 = vtanh.pop %v3910
        %3913 = vrot.lane.b32.xlu0 %v3911, 64
        %v3914 = vpop.permute.xlu0 %3913
        %v3916 = vmul.f32 %v3899, %v3914
        %v3917 = vld [vmem:[#allocation2 + $0x1d] sm:$0x1]
        %v3918 = vld [vmem:[#allocation2 + $0x3d] sm:$0x1]
        %v3919 = vpack.c.bf16 %v3916, %v3916
        %3921 = vrot.lane.b32.xlu0 %v3919, 32
        %v3922 = vpop.permute.xlu0 %3921
        %v3924 = vsel %vm440, %v3922, 0
        %3926 = vmatprep.subr.bf16.mxu0 0
        %3927 = vmatpush1.bf16.msra.mxu0 0
        %3928 = vmatprep.subr.bf16.mxu0 0
        %3929 = vmatpush1.bf16.msra.mxu0 0
        %3930 = vmatprep.subr.bf16.mxu0 0
        %3931 = vmatpush1.bf16.msra.mxu0 0
        %3932 = vmatprep.subr.bf16.mxu0 0
        %3933 = vmatpush1.bf16.msra.mxu0 0
        %3934 = vmatprep.subr.bf16.mxu0 0
        %3935 = vmatpush1.bf16.msra.mxu0 0
        %3936 = vmatprep.subr.bf16.mxu0 0
        %3937 = vmatpush1.bf16.msra.mxu0 0
        %3938 = vmatprep.subr.bf16.mxu0 0
        %3939 = vmatpush1.bf16.msra.mxu0 %v3475
        %3940 = vmatprep.subr.bf16.mxu0 0
        %3941 = vmatpush1.bf16.msra.mxu0 %v3474
        %3942 = vmatprep.subr.bf16.mxu0 0
        %3943 = vmatpush2.bf16.msra.mxu0 0
        %3944 = vmatprep.subr.bf16.mxu0 0
        %3945 = vmatpush2.bf16.msra.mxu0 0
        %3946 = vmatprep.subr.bf16.mxu0 0
        %3947 = vmatpush2.bf16.msra.mxu0 0
        %3948 = vmatprep.subr.bf16.mxu0 0
        %3949 = vmatpush2.bf16.msra.mxu0 0
        %3950 = vmatprep.subr.bf16.mxu0 0
        %3951 = vmatpush2.bf16.msra.mxu0 0
        %3952 = vmatprep.subr.bf16.mxu0 0
        %3953 = vmatpush2.bf16.msra.mxu0 0
        %3954 = vmatprep.subr.bf16.mxu0 0
        %3955 = vmatpush2.bf16.msra.mxu0 0
        %3956 = vmatprep.subr.bf16.mxu0 0
        %3957 = vmatpush2.bf16.msra.mxu0 0
        %3958 = vmatprep.mubr.bf16.mxu0 0
        %3959 = vmatmul.mubr.bf16.gmra.mxu0 %v3924
        %v3960 = vpop.f32.mrf.mxu0
        %v3961 = vadd.f32 0.0, %v3960
        %v3962 = vpop.f32.mrf.mxu0
        %v3963 = vpop.f32.mrf.mxu0
        %v3964 = vpop.f32.mrf.mxu0
        %3965 = vdwg.mxu0
        %v3967 = vrot.slane %v3961, 1
        %v3970 = vadd.f32 %v3917, %v3961
        %v3971 = vadd.f32 %v3918, %v3967
        %v3972 = vmul.f32 %v3970, 0.5
        %v3973 = vmul.f32 %v3971, 0.5
        %v3976 = vrot.slane %v3971, 7
        %v3977 = vsel %vm497, %v3976, %v3970
        %v3981 = vrot.slane %v3973, 7
        %v3982 = vsel %vm497, %v3981, %v3972
        %v3984 = vsel %vm493, %v3977, %v3982
        %v3985 = vtanh.pop %v3984
        %v3986 = vadd.f32 %v3985, 1.0
        %v3987 = vmul.f32 %v3986, 0.5
        %v3988 = vsel %vm493, %v3985, %v3987
        %v3989 = vmul.f32 %v3988, %v3910
        %3991 = vrot.lane.b32.xlu0 %v3988, 64
        %v3992 = vpop.permute.xlu0 %3991
        %v3994 = vmul.f32 %v3988, %v3992
        %3996 = vrot.lane.b32.xlu0 %v3994, 32
        %v3997 = vpop.permute.xlu0 %3996
        %v3999 = vadd.f32 %v3989, %v3997
        %v4000 = vtanh.pop %v3999
        %4002 = vrot.lane.b32.xlu0 %v4000, 64
        %v4003 = vpop.permute.xlu0 %4002
        %v4005 = vmul.f32 %v3988, %v4003
        %v4006 = vld [vmem:[#allocation2 + $0x1e] sm:$0x1]
        %v4007 = vld [vmem:[#allocation2 + $0x3e] sm:$0x1]
        %v4008 = vpack.c.bf16 %v4005, %v4005
        %4010 = vrot.lane.b32.xlu0 %v4008, 32
        %v4011 = vpop.permute.xlu0 %4010
        %v4013 = vsel %vm440, %v4011, 0
        %4015 = vmatprep.subr.bf16.mxu0 0
        %4016 = vmatpush1.bf16.msra.mxu0 0
        %4017 = vmatprep.subr.bf16.mxu0 0
        %4018 = vmatpush1.bf16.msra.mxu0 0
        %4019 = vmatprep.subr.bf16.mxu0 0
        %4020 = vmatpush1.bf16.msra.mxu0 0
        %4021 = vmatprep.subr.bf16.mxu0 0
        %4022 = vmatpush1.bf16.msra.mxu0 0
        %4023 = vmatprep.subr.bf16.mxu0 0
        %4024 = vmatpush1.bf16.msra.mxu0 0
        %4025 = vmatprep.subr.bf16.mxu0 0
        %4026 = vmatpush1.bf16.msra.mxu0 0
        %4027 = vmatprep.subr.bf16.mxu0 0
        %4028 = vmatpush1.bf16.msra.mxu0 %v3475
        %4029 = vmatprep.subr.bf16.mxu0 0
        %4030 = vmatpush1.bf16.msra.mxu0 %v3474
        %4031 = vmatprep.subr.bf16.mxu0 0
        %4032 = vmatpush2.bf16.msra.mxu0 0
        %4033 = vmatprep.subr.bf16.mxu0 0
        %4034 = vmatpush2.bf16.msra.mxu0 0
        %4035 = vmatprep.subr.bf16.mxu0 0
        %4036 = vmatpush2.bf16.msra.mxu0 0
        %4037 = vmatprep.subr.bf16.mxu0 0
        %4038 = vmatpush2.bf16.msra.mxu0 0
        %4039 = vmatprep.subr.bf16.mxu0 0
        %4040 = vmatpush2.bf16.msra.mxu0 0
        %4041 = vmatprep.subr.bf16.mxu0 0
        %4042 = vmatpush2.bf16.msra.mxu0 0
        %4043 = vmatprep.subr.bf16.mxu0 0
        %4044 = vmatpush2.bf16.msra.mxu0 0
        %4045 = vmatprep.subr.bf16.mxu0 0
        %4046 = vmatpush2.bf16.msra.mxu0 0
        %4047 = vmatprep.mubr.bf16.mxu0 0
        %4048 = vmatmul.mubr.bf16.gmra.mxu0 %v4013
        %v4049 = vpop.f32.mrf.mxu0
        %v4050 = vadd.f32 0.0, %v4049
        %v4051 = vpop.f32.mrf.mxu0
        %v4052 = vpop.f32.mrf.mxu0
        %v4053 = vpop.f32.mrf.mxu0
        %4054 = vdwg.mxu0
        %v4056 = vrot.slane %v4050, 1
        %v4059 = vadd.f32 %v4006, %v4050
        %v4060 = vadd.f32 %v4007, %v4056
        %v4061 = vmul.f32 %v4059, 0.5
        %v4062 = vmul.f32 %v4060, 0.5
        %v4065 = vrot.slane %v4060, 7
        %v4066 = vsel %vm497, %v4065, %v4059
        %v4070 = vrot.slane %v4062, 7
        %v4071 = vsel %vm497, %v4070, %v4061
        %v4073 = vsel %vm493, %v4066, %v4071
        %v4074 = vtanh.pop %v4073
        %v4075 = vadd.f32 %v4074, 1.0
        %v4076 = vmul.f32 %v4075, 0.5
        %v4077 = vsel %vm493, %v4074, %v4076
        %v4078 = vmul.f32 %v4077, %v3999
        %4080 = vrot.lane.b32.xlu0 %v4077, 64
        %v4081 = vpop.permute.xlu0 %4080
        %v4083 = vmul.f32 %v4077, %v4081
        %4085 = vrot.lane.b32.xlu0 %v4083, 32
        %v4086 = vpop.permute.xlu0 %4085
        %v4088 = vadd.f32 %v4078, %v4086
        %v4089 = vtanh.pop %v4088
        %4091 = vrot.lane.b32.xlu0 %v4089, 64
        %v4092 = vpop.permute.xlu0 %4091
        %v4094 = vmul.f32 %v4077, %v4092
        %v4095 = vld [vmem:[#allocation2 + $0x1f] sm:$0x1]
        %v4096 = vld [vmem:[#allocation2 + $0x3f] sm:$0x1]
        %v4097 = vpack.c.bf16 %v4094, %v4094
        %4099 = vrot.lane.b32.xlu0 %v4097, 32
        %v4100 = vpop.permute.xlu0 %4099
        %v4102 = vsel %vm440, %v4100, 0
        %4104 = vmatprep.subr.bf16.mxu0 0
        %4105 = vmatpush1.bf16.msra.mxu0 0
        %4106 = vmatprep.subr.bf16.mxu0 0
        %4107 = vmatpush1.bf16.msra.mxu0 0
        %4108 = vmatprep.subr.bf16.mxu0 0
        %4109 = vmatpush1.bf16.msra.mxu0 0
        %4110 = vmatprep.subr.bf16.mxu0 0
        %4111 = vmatpush1.bf16.msra.mxu0 0
        %4112 = vmatprep.subr.bf16.mxu0 0
        %4113 = vmatpush1.bf16.msra.mxu0 0
        %4114 = vmatprep.subr.bf16.mxu0 0
        %4115 = vmatpush1.bf16.msra.mxu0 0
        %4116 = vmatprep.subr.bf16.mxu0 0
        %4117 = vmatpush1.bf16.msra.mxu0 %v3475
        %4118 = vmatprep.subr.bf16.mxu0 0
        %4119 = vmatpush1.bf16.msra.mxu0 %v3474
        %4120 = vmatprep.subr.bf16.mxu0 0
        %4121 = vmatpush2.bf16.msra.mxu0 0
        %4122 = vmatprep.subr.bf16.mxu0 0
        %4123 = vmatpush2.bf16.msra.mxu0 0
        %4124 = vmatprep.subr.bf16.mxu0 0
        %4125 = vmatpush2.bf16.msra.mxu0 0
        %4126 = vmatprep.subr.bf16.mxu0 0
        %4127 = vmatpush2.bf16.msra.mxu0 0
        %4128 = vmatprep.subr.bf16.mxu0 0
        %4129 = vmatpush2.bf16.msra.mxu0 0
        %4130 = vmatprep.subr.bf16.mxu0 0
        %4131 = vmatpush2.bf16.msra.mxu0 0
        %4132 = vmatprep.subr.bf16.mxu0 0
        %4133 = vmatpush2.bf16.msra.mxu0 0
        %4134 = vmatprep.subr.bf16.mxu0 0
        %4135 = vmatpush2.bf16.msra.mxu0 0
        %4136 = vmatprep.mubr.bf16.mxu0 0
        %4137 = vmatmul.mubr.bf16.gmra.mxu0 %v4102
        %v4138 = vpop.f32.mrf.mxu0
        %v4139 = vadd.f32 0.0, %v4138
        %v4140 = vpop.f32.mrf.mxu0
        %v4141 = vpop.f32.mrf.mxu0
        %v4142 = vpop.f32.mrf.mxu0
        %4143 = vdwg.mxu0
        %v4145 = vrot.slane %v4139, 1
        %v4148 = vadd.f32 %v4095, %v4139
        %v4149 = vadd.f32 %v4096, %v4145
        %v4150 = vmul.f32 %v4148, 0.5
        %v4151 = vmul.f32 %v4149, 0.5
        %v4154 = vrot.slane %v4149, 7
        %v4155 = vsel %vm497, %v4154, %v4148
        %v4159 = vrot.slane %v4151, 7
        %v4160 = vsel %vm497, %v4159, %v4150
        %v4162 = vsel %vm493, %v4155, %v4160
        %v4163 = vtanh.pop %v4162
        %v4164 = vadd.f32 %v4163, 1.0
        %v4165 = vmul.f32 %v4164, 0.5
        %v4166 = vsel %vm493, %v4163, %v4165
        %v4167 = vmul.f32 %v4166, %v4088
        %4169 = vrot.lane.b32.xlu0 %v4166, 64
        %v4170 = vpop.permute.xlu0 %4169
        %v4172 = vmul.f32 %v4166, %v4170
        %4174 = vrot.lane.b32.xlu0 %v4172, 32
        %v4175 = vpop.permute.xlu0 %4174
        %v4177 = vadd.f32 %v4167, %v4175
        %v4178 = vtanh.pop %v4177
        %4180 = vrot.lane.b32.xlu0 %v4178, 64
        %v4181 = vpop.permute.xlu0 %4180
        %v4183 = vmul.f32 %v4166, %v4181
        %v4186 = vunpack.c.l.s4 1966171168
        %v4187 = vunpack.c.0.s8 %v4186
        %v4188 = vlaneseq
        %v4189 = vshrl.u32 %v4188, 7
        %v4190 = vsub.s32 %v4187, %v4189
        %v4191 = vrot.slane %v3560, %v4190
        %v4192 = vcombine.high %v4191, %v4191
        %v4194 = vunpack.c.l.s4 1966171168
        %v4195 = vunpack.c.0.s8 %v4194
        %v4196 = vlaneseq
        %v4197 = vshrl.u32 %v4196, 7
        %v4198 = vsub.s32 %v4195, %v4197
        %v4199 = vrot.slane %v4191, %v4198
        %v4201 = vunpack.c.l.s4 1966171168
        %v4202 = vunpack.c.0.s8 %v4201
        %v4203 = vlaneseq
        %v4204 = vshrl.u32 %v4203, 7
        %v4205 = vsub.s32 %v4202, %v4204
        %v4206 = vrot.slane %v4192, %v4205
        %v4211 = vunpack.c.l.s4 1966171168
        %v4212 = vunpack.c.0.s8 %v4211
        %v4213 = vlaneseq
        %v4214 = vshrl.u32 %v4213, 7
        %v4215 = vsub.s32 %v4212, %v4214
        %v4216 = vrot.slane %v3649, %v4215
        %v4217 = vcombine.high %v4216, %v4216
        %v4219 = vunpack.c.l.s4 1966171168
        %v4220 = vunpack.c.0.s8 %v4219
        %v4221 = vlaneseq
        %v4222 = vshrl.u32 %v4221, 7
        %v4223 = vsub.s32 %v4220, %v4222
        %v4224 = vrot.slane %v4216, %v4223
        %v4226 = vunpack.c.l.s4 1966171168
        %v4227 = vunpack.c.0.s8 %v4226
        %v4228 = vlaneseq
        %v4229 = vshrl.u32 %v4228, 7
        %v4230 = vsub.s32 %v4227, %v4229
        %v4231 = vrot.slane %v4217, %v4230
        %v4234 = vunpack.c.l.s4 1966171168
        %v4235 = vunpack.c.0.s8 %v4234
        %v4236 = vlaneseq
        %v4237 = vshrl.u32 %v4236, 7
        %v4238 = vsub.s32 %v4235, %v4237
        %v4239 = vrot.slane %v3738, %v4238
        %v4240 = vcombine.high %v4239, %v4239
        %v4242 = vunpack.c.l.s4 1966171168
        %v4243 = vunpack.c.0.s8 %v4242
        %v4244 = vlaneseq
        %v4245 = vshrl.u32 %v4244, 7
        %v4246 = vsub.s32 %v4243, %v4245
        %v4247 = vrot.slane %v4239, %v4246
        %v4249 = vunpack.c.l.s4 1966171168
        %v4250 = vunpack.c.0.s8 %v4249
        %v4251 = vlaneseq
        %v4252 = vshrl.u32 %v4251, 7
        %v4253 = vsub.s32 %v4250, %v4252
        %v4254 = vrot.slane %v4240, %v4253
        %v4257 = vunpack.c.l.s4 1966171168
        %v4258 = vunpack.c.0.s8 %v4257
        %v4259 = vlaneseq
        %v4260 = vshrl.u32 %v4259, 7
        %v4261 = vsub.s32 %v4258, %v4260
        %v4262 = vrot.slane %v3827, %v4261
        %v4263 = vcombine.high %v4262, %v4262
        %v4265 = vunpack.c.l.s4 1966171168
        %v4266 = vunpack.c.0.s8 %v4265
        %v4267 = vlaneseq
        %v4268 = vshrl.u32 %v4267, 7
        %v4269 = vsub.s32 %v4266, %v4268
        %v4270 = vrot.slane %v4262, %v4269
        %v4272 = vunpack.c.l.s4 1966171168
        %v4273 = vunpack.c.0.s8 %v4272
        %v4274 = vlaneseq
        %v4275 = vshrl.u32 %v4274, 7
        %v4276 = vsub.s32 %v4273, %v4275
        %v4277 = vrot.slane %v4263, %v4276
        %v4280 = vunpack.c.l.s4 1966171168
        %v4281 = vunpack.c.0.s8 %v4280
        %v4282 = vlaneseq
        %v4283 = vshrl.u32 %v4282, 7
        %v4284 = vsub.s32 %v4281, %v4283
        %v4285 = vrot.slane %v3916, %v4284
        %v4286 = vcombine.high %v4285, %v4285
        %v4288 = vunpack.c.l.s4 1966171168
        %v4289 = vunpack.c.0.s8 %v4288
        %v4290 = vlaneseq
        %v4291 = vshrl.u32 %v4290, 7
        %v4292 = vsub.s32 %v4289, %v4291
        %v4293 = vrot.slane %v4285, %v4292
        %v4295 = vunpack.c.l.s4 1966171168
        %v4296 = vunpack.c.0.s8 %v4295
        %v4297 = vlaneseq
        %v4298 = vshrl.u32 %v4297, 7
        %v4299 = vsub.s32 %v4296, %v4298
        %v4300 = vrot.slane %v4286, %v4299
        %v4303 = vunpack.c.l.s4 1966171168
        %v4304 = vunpack.c.0.s8 %v4303
        %v4305 = vlaneseq
        %v4306 = vshrl.u32 %v4305, 7
        %v4307 = vsub.s32 %v4304, %v4306
        %v4308 = vrot.slane %v4005, %v4307
        %v4309 = vcombine.high %v4308, %v4308
        %v4311 = vunpack.c.l.s4 1966171168
        %v4312 = vunpack.c.0.s8 %v4311
        %v4313 = vlaneseq
        %v4314 = vshrl.u32 %v4313, 7
        %v4315 = vsub.s32 %v4312, %v4314
        %v4316 = vrot.slane %v4308, %v4315
        %v4318 = vunpack.c.l.s4 1966171168
        %v4319 = vunpack.c.0.s8 %v4318
        %v4320 = vlaneseq
        %v4321 = vshrl.u32 %v4320, 7
        %v4322 = vsub.s32 %v4319, %v4321
        %v4323 = vrot.slane %v4309, %v4322
        %v4326 = vunpack.c.l.s4 1966171168
        %v4327 = vunpack.c.0.s8 %v4326
        %v4328 = vlaneseq
        %v4329 = vshrl.u32 %v4328, 7
        %v4330 = vsub.s32 %v4327, %v4329
        %v4331 = vrot.slane %v4094, %v4330
        %v4332 = vcombine.high %v4331, %v4331
        %v4334 = vunpack.c.l.s4 1966171168
        %v4335 = vunpack.c.0.s8 %v4334
        %v4336 = vlaneseq
        %v4337 = vshrl.u32 %v4336, 7
        %v4338 = vsub.s32 %v4335, %v4337
        %v4339 = vrot.slane %v4331, %v4338
        %v4341 = vunpack.c.l.s4 1966171168
        %v4342 = vunpack.c.0.s8 %v4341
        %v4343 = vlaneseq
        %v4344 = vshrl.u32 %v4343, 7
        %v4345 = vsub.s32 %v4342, %v4344
        %v4346 = vrot.slane %v4332, %v4345
        %v4349 = vunpack.c.l.s4 1966171168
        %v4350 = vunpack.c.0.s8 %v4349
        %v4351 = vlaneseq
        %v4352 = vshrl.u32 %v4351, 7
        %v4353 = vsub.s32 %v4350, %v4352
        %v4354 = vrot.slane %v4183, %v4353
        %v4355 = vcombine.high %v4354, %v4354
        %v4357 = vunpack.c.l.s4 1966171168
        %v4358 = vunpack.c.0.s8 %v4357
        %v4359 = vlaneseq
        %v4360 = vshrl.u32 %v4359, 7
        %v4361 = vsub.s32 %v4358, %v4360
        %v4362 = vrot.slane %v4354, %v4361
        %v4364 = vunpack.c.l.s4 1966171168
        %v4365 = vunpack.c.0.s8 %v4364
        %v4366 = vlaneseq
        %v4367 = vshrl.u32 %v4366, 7
        %v4368 = vsub.s32 %v4365, %v4367
        %v4369 = vrot.slane %v4355, %v4368
        %v4370 = vlaneseq
        %v4371 = vshrl.u32 %v4370, 7
        %v4372 = vsub.s32 0, %v4371
        %v4373 = vrot.slane %v4224, %v4372
        %v4374 = vlaneseq
        %v4375 = vshrl.u32 %v4374, 7
        %v4376 = vsub.s32 0, %v4375
        %v4377 = vrot.slane %v4231, %v4376
        %v4380 = vlaneseq
        %v4381 = vshrl.u32 %v4380, 7
        %v4382 = vsub.s32 0, %v4381
        %v4383 = vrot.slane %v4247, %v4382
        %v4384 = vlaneseq
        %v4385 = vshrl.u32 %v4384, 7
        %v4386 = vsub.s32 0, %v4385
        %v4387 = vrot.slane %v4254, %v4386
        %v4390 = vlaneseq
        %v4391 = vshrl.u32 %v4390, 7
        %v4392 = vsub.s32 0, %v4391
        %v4393 = vrot.slane %v4270, %v4392
        %v4394 = vlaneseq
        %v4395 = vshrl.u32 %v4394, 7
        %v4396 = vsub.s32 0, %v4395
        %v4397 = vrot.slane %v4277, %v4396
        %v4400 = vlaneseq
        %v4401 = vshrl.u32 %v4400, 7
        %v4402 = vsub.s32 0, %v4401
        %v4403 = vrot.slane %v4293, %v4402
        %v4404 = vlaneseq
        %v4405 = vshrl.u32 %v4404, 7
        %v4406 = vsub.s32 0, %v4405
        %v4407 = vrot.slane %v4300, %v4406
        %v4410 = vlaneseq
        %v4411 = vshrl.u32 %v4410, 7
        %v4412 = vsub.s32 0, %v4411
        %v4413 = vrot.slane %v4316, %v4412
        %v4414 = vlaneseq
        %v4415 = vshrl.u32 %v4414, 7
        %v4416 = vsub.s32 0, %v4415
        %v4417 = vrot.slane %v4323, %v4416
        %v4420 = vlaneseq
        %v4421 = vshrl.u32 %v4420, 7
        %v4422 = vsub.s32 0, %v4421
        %v4423 = vrot.slane %v4339, %v4422
        %v4424 = vlaneseq
        %v4425 = vshrl.u32 %v4424, 7
        %v4426 = vsub.s32 0, %v4425
        %v4427 = vrot.slane %v4346, %v4426
        %v4430 = vlaneseq
        %v4431 = vshrl.u32 %v4430, 7
        %v4432 = vsub.s32 0, %v4431
        %v4433 = vrot.slane %v4362, %v4432
        %v4434 = vlaneseq
        %v4435 = vshrl.u32 %v4434, 7
        %v4436 = vsub.s32 0, %v4435
        %v4437 = vrot.slane %v4369, %v4436
        %v4440 = vsel %vm1410, %v4199, %v4373
        %v4441 = vsel %vm1410, %v4206, %v4377
        %v4442 = vsel %vm1413, %v4440, %v4383
        %v4443 = vsel %vm1413, %v4441, %v4387
        %v4444 = vsel %vm1416, %v4442, %v4393
        %v4445 = vsel %vm1416, %v4443, %v4397
        %v4446 = vsel %vm1419, %v4444, %v4403
        %v4447 = vsel %vm1419, %v4445, %v4407
        %v4448 = vsel %vm1422, %v4446, %v4413
        %v4449 = vsel %vm1422, %v4447, %v4417
        %v4450 = vsel %vm322, %v4448, %v4423
        %v4451 = vsel %vm322, %v4449, %v4427
        %v4452 = vsel %vm1427, %v4450, %v4433
        %v4453 = vsel %vm1427, %v4451, %v4437
        %4456 = vrot.lane.b32.xlu0 %v4452, 32
        %v4457 = vpop.permute.xlu0 %4456
        %4458 = vrot.lane.b32.xlu0 %v4453, 32
        %v4459 = vpop.permute.xlu0 %4458
        %4462 = vst.msk [vmem:[%s263 + $0x18] sm:$0xff] %vm440, %v4457
        %4463 = vst.msk [vmem:[%s263 + $0x38] sm:$0xff] %vm440, %v4459
        %4464 = vrot.lane.b32.xlu0 %v4183, 32
        %v4465 = vpop.permute.xlu0 %4464
        %vm4467 = vcmask 254976
        %4468 = vst.msk [vmem:[#allocation3] sm:$0x3] %vm4467, %v4465
        %4470 = vrot.lane.b32.xlu0 %v4177, 96
        %v4471 = vpop.permute.xlu0 %4470
        %4473 = vst.msk [vmem:[#allocation4] sm:$0x3] %vm4467, %v4471
        %s4474 = sand.u32 %s112, 1
        %s4475 = sand.u32 %s112, 1
        %s4476 = smul.addr %s4475, 64
        %s4477 = scalar_lea.vmem [#allocation6], %s4476
        // Predicated region
        $region82: #{tpu_custom_call.1} parent=72 // pred_check
          %p4478 = pneg %p122
        $region83: #{tpu_custom_call.1} parent=72 // pred_check_branch
          %4480 = sbr.rel (%p4478) target = $region85
        $region84: #{tpu_custom_call.1} parent=72 // pred_region
          %s4481 = smul.u32 4, %s15
          %s4482 = smul.addr %s4481, 8
          %s4483 = scalar_lea.vmem %s4, %s4482
          // Predicated region
          $region86: #{tpu_custom_call.1} parent=84 // pred_check
            _
          $region87: #{tpu_custom_call.1} parent=84 // pred_check_branch
            %4485 = sbr.rel (0) target = $region89
          $region88: #{tpu_custom_call.1} parent=84 // pred_region
            // Predicated region
            $region90: #{tpu_custom_call.1} parent=88 // pred_check
              _
            $region91: #{tpu_custom_call.1} parent=88 // pred_check_branch
              %4487 = sbr.rel (0) target = $region93
            $region92: #{tpu_custom_call.1} parent=88 // pred_region
              // Predicated region
              $region105: #{tpu_custom_call.1} parent=92 // pred_check
                _
              $region106: #{tpu_custom_call.1} parent=92 // pred_check_branch
                %4517 = sbr.rel (0) target = $region108
              $region107: #{tpu_custom_call.1} parent=92 // pred_region
                loop: start=0, step=1, limit=1
                $region109: #{tpu_custom_call.1} parent=107 // loop_pre_header
                  _
                $region110: #{tpu_custom_call.1} parent=107 // loop_header
                  %s4519 = sphi 0, %s4523
                  %p4520 = scmp.ge.s32.totalorder %s4519, 1
                  %s4524 = sphi %s4477, %s4477
                  %s4525 = sphi %s4483, %s4483
                $region111: #{tpu_custom_call.1} parent=107 // loop_header_branch
                  %4522 = sbr.rel (%p4520) target = $region115
                $region112: #{tpu_custom_call.1} parent=107 // loop_body
                  %v4526 = vld [vmem:[%s4524] sm:$0xff]
                  %4527 = vst [vmem:[%s4525] sm:$0xff] %v4526
                  %v4528 = vld [vmem:[%s4524 + $0x8] sm:$0xff]
                  %4529 = vst [vmem:[%s4525 + $0x8] sm:$0xff] %v4528
                  %v4530 = vld [vmem:[%s4524 + $0x10] sm:$0xff]
                  %4531 = vst [vmem:[%s4525 + $0x10] sm:$0xff] %v4530
                  %v4532 = vld [vmem:[%s4524 + $0x18] sm:$0xff]
                  %4533 = vst [vmem:[%s4525 + $0x18] sm:$0xff] %v4532
                  %v4534 = vld [vmem:[%s4524 + $0x20] sm:$0xff]
                  %4535 = vst [vmem:[%s4525 + $0x40] sm:$0xff] %v4534
                  %v4536 = vld [vmem:[%s4524 + $0x28] sm:$0xff]
                  %4537 = vst [vmem:[%s4525 + $0x48] sm:$0xff] %v4536
                  %v4538 = vld [vmem:[%s4524 + $0x30] sm:$0xff]
                  %4539 = vst [vmem:[%s4525 + $0x50] sm:$0xff] %v4538
                  %v4540 = vld [vmem:[%s4524 + $0x38] sm:$0xff]
                  %4541 = vst [vmem:[%s4525 + $0x58] sm:$0xff] %v4540
                $region113: #{tpu_custom_call.1} parent=107 // loop_footer
                  %s4523 = sadd.s32 1, %s4519
                $region114: #{tpu_custom_call.1} parent=107 // loop_footer_branch
                  %4518 = sbr.rel target = $region110
                $region115: #{tpu_custom_call.1} parent=107 // loop_exit
                  _
              $region108: #{tpu_custom_call.1} parent=92 // pred_fallthru
                _
              // Predicated region
              $region116: #{tpu_custom_call.1} parent=92 // pred_check
                _
              $region117: #{tpu_custom_call.1} parent=92 // pred_check_branch
                %4543 = sbr.rel target = $region119
              $region118: #{tpu_custom_call.1} parent=92 // pred_region
                _
              $region119: #{tpu_custom_call.1} parent=92 // pred_fallthru
                _
            $region93: #{tpu_custom_call.1} parent=88 // pred_fallthru
              _
            // Predicated region
            $region94: #{tpu_custom_call.1} parent=88 // pred_check
              _
            $region95: #{tpu_custom_call.1} parent=88 // pred_check_branch
              %4489 = sbr.rel target = $region97
            $region96: #{tpu_custom_call.1} parent=88 // pred_region
              %s4491 = ssub.s32 256, 1
              loop: start=0, step=1, limit=1
              $region98: #{tpu_custom_call.1} parent=96 // loop_pre_header
                _
              $region99: #{tpu_custom_call.1} parent=96 // loop_header
                %s4493 = sphi 0, %s4497
                %p4494 = scmp.ge.s32.totalorder %s4493, 1
                %s4498 = sphi %s4477, %s4477
                %s4499 = sphi %s4483, %s4483
              $region100: #{tpu_custom_call.1} parent=96 // loop_header_branch
                %4496 = sbr.rel (%p4494) target = $region104
              $region101: #{tpu_custom_call.1} parent=96 // loop_body
                %v4500 = vld [vmem:[%s4498] sm:%s4491]
                %4501 = vst [vmem:[%s4499] sm:%s4491] %v4500
                %v4502 = vld [vmem:[%s4498 + $0x8] sm:%s4491]
                %4503 = vst [vmem:[%s4499 + $0x8] sm:%s4491] %v4502
                %v4504 = vld [vmem:[%s4498 + $0x10] sm:%s4491]
                %4505 = vst [vmem:[%s4499 + $0x10] sm:%s4491] %v4504
                %v4506 = vld [vmem:[%s4498 + $0x18] sm:%s4491]
                %4507 = vst [vmem:[%s4499 + $0x18] sm:%s4491] %v4506
                %v4508 = vld [vmem:[%s4498 + $0x20] sm:%s4491]
                %4509 = vst [vmem:[%s4499 + $0x40] sm:%s4491] %v4508
                %v4510 = vld [vmem:[%s4498 + $0x28] sm:%s4491]
                %4511 = vst [vmem:[%s4499 + $0x48] sm:%s4491] %v4510
                %v4512 = vld [vmem:[%s4498 + $0x30] sm:%s4491]
                %4513 = vst [vmem:[%s4499 + $0x50] sm:%s4491] %v4512
                %v4514 = vld [vmem:[%s4498 + $0x38] sm:%s4491]
                %4515 = vst [vmem:[%s4499 + $0x58] sm:%s4491] %v4514
              $region102: #{tpu_custom_call.1} parent=96 // loop_footer
                %s4497 = sadd.s32 1, %s4493
              $region103: #{tpu_custom_call.1} parent=96 // loop_footer_branch
                %4492 = sbr.rel target = $region99
              $region104: #{tpu_custom_call.1} parent=96 // loop_exit
                _
            $region97: #{tpu_custom_call.1} parent=88 // pred_fallthru
              _
          $region89: #{tpu_custom_call.1} parent=84 // pred_fallthru
            _
          %4544 = vnop
        $region85: #{tpu_custom_call.1} parent=72 // pred_fallthru
          _
      $region73: #{tpu_custom_call.1} parent=5 // pred_fallthru
        _
      %p4545 = scmp.le.s32.totalorder 2, %s10
      // Predicated region
      $region120: #{tpu_custom_call.1} parent=5 // pred_check
        %p4546 = pneg %p4545
      $region121: #{tpu_custom_call.1} parent=5 // pred_check_branch
        %4548 = sbr.rel (%p4546) target = $region123
      $region122: #{tpu_custom_call.1} parent=5 // pred_region
        %s4549 = ssub.s32 %s10, 2
        // Predicated region
        $region124: #{tpu_custom_call.1} parent=122 // pred_check
          %p4550 = pneg %p128
        $region125: #{tpu_custom_call.1} parent=122 // pred_check_branch
          %4552 = sbr.rel (%p4550) target = $region127
        $region126: #{tpu_custom_call.1} parent=122 // pred_region
          %s4553 = sand.u32 %s113, 1
          %s4554 = sand.u32 %s113, 1
          %s4555 = smul.addr %s4554, 64
          %s4556 = scalar_lea.vmem [#allocation6], %s4555
        $region127: #{tpu_custom_call.1} parent=122 // pred_fallthru
          _
      $region123: #{tpu_custom_call.1} parent=5 // pred_fallthru
        _
    $region6: #{tpu_custom_call.1} parent=1 // loop_footer
      %s14 = sadd.s32 1, %s10
    $region7: #{tpu_custom_call.1} parent=1 // loop_footer_branch
      %9 = sbr.rel target = $region3
    $region8: #{tpu_custom_call.1} parent=1 // loop_exit
      _

</llo_original>
